<compile_context>
chip_gen: v7x
topology: tpu7x:2x2x1
jax: 0.10.0
libtpu: 0.0.40
codegen_flags: <defaults>
</compile_context>

<pallas_src>
import functools

import jax
import jax.numpy as jnp
from jax.experimental import pallas as pl
from jax.experimental.pallas import tpu as pltpu

EPS = 1e-6


# ---------------------------------------------------------------------------
# Fused decoder kernel (all layers + final LayerNorm)
# ---------------------------------------------------------------------------
def _decoder_kernel(x_ref, enc_ref, srcm_ref, tgtm_ref,
                    sa_wqkv_ref, sa_bqkv_ref, sa_wo_ref, sa_bo_ref,
                    ca_wq_ref, ca_bq_ref, ca_wkv_ref, ca_bkv_ref,
                    ca_wo_ref, ca_bo_ref,
                    ff_w1_ref, ff_b1_ref, ff_w2_ref, ff_b2_ref,
                    ln_ref, fln_ref, o_ref, *, num_heads):
    l = pl.program_id(1)
    num_layers = pl.num_programs(1)
    T, D = x_ref.shape
    S = enc_ref.shape[0]
    d_k = D // num_heads
    scale = float(d_k) ** -0.5

    # Layer 0: seed the VMEM-resident accumulator (the revisited output block).
    @pl.when(l == 0)
    def _():
        o_ref[...] = x_ref[...]

    x = o_ref[...].astype(jnp.float32)

    # Additive attention biases, built in-kernel once per step (no (B,T,T)/(B,T,S)
    # f32 mask DMA, and hoisted out of all per-head work).
    neg = jnp.float32(-1e9)
    src_bias = jnp.where(srcm_ref[...] == 0, neg, 0.0)                      # (1, S)
    rows = jax.lax.broadcasted_iota(jnp.int32, (T, T), 0)
    cols = jax.lax.broadcasted_iota(jnp.int32, (T, T), 1)
    causal = jnp.where(cols <= rows, 0.0, neg)                              # (T, T)
    tgt_bias = causal + jnp.where(tgtm_ref[...] == 0, neg, 0.0)             # (T, T)

    def layer_norm(v, alpha, bias):
        # torch: alpha * (x - mean) / (std + eps) + bias, unbiased std (ddof=1)
        mean = jnp.mean(v, axis=-1, keepdims=True)
        var = jnp.sum((v - mean) ** 2, axis=-1, keepdims=True) / (v.shape[-1] - 1)
        # exact divide kept for portability; pl.reciprocal(std+EPS, approx=True) is a
        # drop-in EUP micro-opt on hardware.
        return alpha * (v - mean) / (jnp.sqrt(var) + EPS) + bias

    def split_heads(m):
        n = m.shape[0]
        return m.reshape(n, num_heads, d_k).transpose(1, 0, 2)              # (H, n, d_k)

    def attention(q, k, v, bias, wo_ref, bo_ref):
        # Batched over heads; bf16 MXU operands, f32 accumulation.
        qh = split_heads(q).astype(jnp.bfloat16)
        kh = split_heads(k).astype(jnp.bfloat16)
        vh = split_heads(v).astype(jnp.bfloat16)
        scores = jnp.einsum('htd,hsd->hts', qh, kh,
                            preferred_element_type=jnp.float32) * scale
        scores = scores + bias[None, :, :]
        scores = scores - jnp.max(scores, axis=-1, keepdims=True)
        p = jnp.exp(scores)
        p = p / jnp.sum(p, axis=-1, keepdims=True)
        ctx = jnp.einsum('hts,hsd->htd', p.astype(jnp.bfloat16), vh,
                         preferred_element_type=jnp.float32)                # (H, T, d_k)
        ctx = ctx.transpose(1, 0, 2).reshape(q.shape[0], D)
        return jnp.dot(ctx.astype(jnp.bfloat16), wo_ref[...],
                       preferred_element_type=jnp.float32) + bo_ref[...]

    # --- masked self-attention (pre-norm residual) ---
    h = layer_norm(x, ln_ref[l, 0], ln_ref[l, 1]).astype(jnp.bfloat16)
    qkv = jnp.dot(h, sa_wqkv_ref[...],
                  preferred_element_type=jnp.float32) + sa_bqkv_ref[...]    # (T, 3D)
    x = x + attention(qkv[:, :D], qkv[:, D:2 * D], qkv[:, 2 * D:],
                      tgt_bias, sa_wo_ref, sa_bo_ref)

    # --- cross-attention over encoder output ---
    h = layer_norm(x, ln_ref[l, 2], ln_ref[l, 3]).astype(jnp.bfloat16)
    q = jnp.dot(h, ca_wq_ref[...],
                preferred_element_type=jnp.float32) + ca_bq_ref[...]        # (T, D)
    kv = jnp.dot(enc_ref[...].astype(jnp.bfloat16), ca_wkv_ref[...],
                 preferred_element_type=jnp.float32) + ca_bkv_ref[...]      # (S, 2D)
    x = x + attention(q, kv[:, :D], kv[:, D:], src_bias, ca_wo_ref, ca_bo_ref)

    # --- feed-forward ---
    h = layer_norm(x, ln_ref[l, 4], ln_ref[l, 5]).astype(jnp.bfloat16)
    ff = jnp.maximum(
        jnp.dot(h, ff_w1_ref[...], preferred_element_type=jnp.float32) + ff_b1_ref[...],
        0.0)
    ff = jnp.dot(ff.astype(jnp.bfloat16), ff_w2_ref[...],
                 preferred_element_type=jnp.float32) + ff_b2_ref[...]
    x = x + ff

    @pl.when(l < num_layers - 1)
    def _():
        o_ref[...] = x.astype(o_ref.dtype)

    # Final LayerNormalization (Decoder._norm) folded into the last layer step.
    @pl.when(l == num_layers - 1)
    def _():
        o_ref[...] = layer_norm(x, fln_ref[0], fln_ref[1]).astype(o_ref.dtype)


# ---------------------------------------------------------------------------
# Weight packing + wrapper
# ---------------------------------------------------------------------------
def _pack_layer_params(layer_params):
    """Stack per-layer params into (L, ...) arrays; weights in bf16, biases/LN in f32."""
    def stack(fn):
        return jnp.stack([fn(p) for p in layer_params], axis=0)

    bf16 = jnp.bfloat16
    return dict(
        sa_wqkv=stack(lambda p: jnp.concatenate(
            [p['sa_w'][0], p['sa_w'][1], p['sa_w'][2]], axis=1)).astype(bf16),
        sa_bqkv=stack(lambda p: jnp.concatenate(
            [p['sa_b'][0], p['sa_b'][1], p['sa_b'][2]])[None, :]),
        sa_wo=stack(lambda p: p['sa_w'][3]).astype(bf16),
        sa_bo=stack(lambda p: p['sa_b'][3][None, :]),
        ca_wq=stack(lambda p: p['ca_w'][0]).astype(bf16),
        ca_bq=stack(lambda p: p['ca_b'][0][None, :]),
        ca_wkv=stack(lambda p: jnp.concatenate(
            [p['ca_w'][1], p['ca_w'][2]], axis=1)).astype(bf16),
        ca_bkv=stack(lambda p: jnp.concatenate([p['ca_b'][1], p['ca_b'][2]])[None, :]),
        ca_wo=stack(lambda p: p['ca_w'][3]).astype(bf16),
        ca_bo=stack(lambda p: p['ca_b'][3][None, :]),
        ff_w1=stack(lambda p: p['ff_w1']).astype(bf16),
        ff_b1=stack(lambda p: p['ff_b1']),
        ff_w2=stack(lambda p: p['ff_w2']).astype(bf16),
        ff_b2=stack(lambda p: p['ff_b2']),
        ln=stack(lambda p: p['ln']),          # (L, 6) scalar alpha/bias per LayerNorm
    )


def decoder_forward(x, enc, src_pad_mask, tgt_pad_mask, layer_params, final_ln,
                    *, num_heads):
    """Decoder.forward: all layers + final LayerNormalization in a single pallas_call.

    src_pad_mask: (B, 1, S) int (1 = keep, 0 = pad); tgt_pad_mask: (B, 1, T) int.
    The causal part of the target mask is generated inside the kernel.
    """
    B, T, D = x.shape
    S = enc.shape[1]
    L = len(layer_params)
    pk = _pack_layer_params(layer_params)
    DFF = pk['ff_w1'].shape[-1]
    kernel = functools.partial(_decoder_kernel, num_heads=num_heads)

    def aspec(shape):   # activation/mask blocks: vary with batch, constant across layers
        return pl.BlockSpec((None,) + shape, lambda b, l: (b,) + (0,) * len(shape))

    def wspec(shape):   # weight blocks: vary with layer, constant across batch
        return pl.BlockSpec((None,) + shape, lambda b, l: (l,) + (0,) * len(shape))

    return pl.pallas_call(
        kernel,
        out_shape=jax.ShapeDtypeStruct((B, T, D), jnp.float32),
        grid=(B, L),
        in_specs=[
            aspec((T, D)),                                       # x
            aspec((S, D)),                                       # encoder_output
            aspec((1, S)),                                       # src padding mask
            aspec((1, T)),                                       # tgt padding mask
            wspec((D, 3 * D)), wspec((1, 3 * D)),                # self-attn Wqkv, bqkv
            wspec((D, D)), wspec((1, D)),                        # self-attn Wo, bo
            wspec((D, D)), wspec((1, D)),                        # cross-attn Wq, bq
            wspec((D, 2 * D)), wspec((1, 2 * D)),                # cross-attn Wkv, bkv
            wspec((D, D)), wspec((1, D)),                        # cross-attn Wo, bo
            wspec((D, DFF)), wspec((1, DFF)),                    # FFN W1, b1
            wspec((DFF, D)), wspec((1, D)),                      # FFN W2, b2
            pl.BlockSpec(memory_space=pltpu.MemorySpace.SMEM),   # per-layer LN scalars (L, 6)
            pl.BlockSpec(memory_space=pltpu.MemorySpace.SMEM),   # final LN scalars (2,)
        ],
        out_specs=aspec((T, D)),
        compiler_params=pltpu.CompilerParams(
            dimension_semantics=("parallel", "arbitrary"),
            vmem_limit_bytes=64 * 1024 * 1024),
    )(x, enc, src_pad_mask, tgt_pad_mask,
      pk['sa_wqkv'], pk['sa_bqkv'], pk['sa_wo'], pk['sa_bo'],
      pk['ca_wq'], pk['ca_bq'], pk['ca_wkv'], pk['ca_bkv'], pk['ca_wo'], pk['ca_bo'],
      pk['ff_w1'], pk['ff_b1'], pk['ff_w2'], pk['ff_b2'],
      pk['ln'], final_ln)


# ---------------------------------------------------------------------------
# Pure-JAX reference (mirrors the kernel math, incl. bf16 matmul operands)
# ---------------------------------------------------------------------------
def _ref_layer_norm(v, alpha, bias):
    mean = jnp.mean(v, axis=-1, keepdims=True)
    var = jnp.sum((v - mean) ** 2, axis=-1, keepdims=True) / (v.shape[-1] - 1)
    return alpha * (v - mean) / (jnp.sqrt(var) + EPS) + bias


def _bf16_dot(a, w):
    return jnp.einsum('...ij,jk->...ik', a.astype(jnp.bfloat16), w.astype(jnp.bfloat16),
                      preferred_element_type=jnp.float32)


def _ref_mha(q_in, kv_in, add_bias, w, b, H):
    B, T, D = q_in.shape
    Skv = kv_in.shape[1]
    d_k = D // H
    scale = float(d_k) ** -0.5
    q = _bf16_dot(q_in, w[0]) + b[0]
    k = _bf16_dot(kv_in, w[1]) + b[1]
    v = _bf16_dot(kv_in, w[2]) + b[2]
    q = q.reshape(B, T, H, d_k).transpose(0, 2, 1, 3)
    k = k.reshape(B, Skv, H, d_k).transpose(0, 2, 1, 3)
    v = v.reshape(B, Skv, H, d_k).transpose(0, 2, 1, 3)
    s = jnp.einsum('bhtd,bhsd->bhts', q.astype(jnp.bfloat16), k.astype(jnp.bfloat16),
                   preferred_element_type=jnp.float32) * scale
    s = s + add_bias[:, None, :, :]
    s = s - jnp.max(s, axis=-1, keepdims=True)
    p = jnp.exp(s)
    p = p / jnp.sum(p, axis=-1, keepdims=True)
    ctx = jnp.einsum('bhts,bhsd->bhtd', p.astype(jnp.bfloat16), v.astype(jnp.bfloat16),
                     preferred_element_type=jnp.float32)
    ctx = ctx.transpose(0, 2, 1, 3).reshape(B, T, D)
    return _bf16_dot(ctx, w[3]) + b[3]


def _ref_decoder(x, enc, src_pad, tgt_pad, layer_params, final_ln, H):
    B, T, D = x.shape
    causal = jnp.where(jnp.arange(T)[None, :] <= jnp.arange(T)[:, None], 0.0, -1e9)
    tgt_bias = causal[None, :, :] + jnp.where(tgt_pad == 0, -1e9, 0.0)   # (B, T, T)
    src_bias = jnp.where(src_pad == 0, -1e9, 0.0)                         # (B, 1, S)
    for p in layer_params:
        ln = p['ln']
        h = _ref_layer_norm(x, ln[0], ln[1])
        x = x + _ref_mha(h, h, tgt_bias, p['sa_w'], p['sa_b'], H)
        h = _ref_layer_norm(x, ln[2], ln[3])
        x = x + _ref_mha(h, enc, src_bias, p['ca_w'], p['ca_b'], H)
        h = _ref_layer_norm(x, ln[4], ln[5])
        ff = jnp.maximum(_bf16_dot(h, p['ff_w1']) + p['ff_b1'][0], 0.0)
        x = x + _bf16_dot(ff, p['ff_w2']) + p['ff_b2'][0]
    return _ref_layer_norm(x, final_ln[0], final_ln[1])


# ---------------------------------------------------------------------------
# Main
# ---------------------------------------------------------------------------
if __name__ == "__main__":
    B, T, S, D, H, DFF, L = 2, 8, 16, 32, 4, 64, 2

    key = jax.random.PRNGKey(0)
    keys = jax.random.split(key, 4 + L)

    x = jax.random.normal(keys[0], (B, T, D), jnp.float32)
    enc = jax.random.normal(keys[1], (B, S, D), jnp.float32)

    # source padding mask (1 = keep, 0 = pad); target padding all-ones, causal in-kernel
    src_pad = (jax.random.uniform(keys[2], (B, 1, S)) > 0.2).astype(jnp.int32)
    tgt_pad = jnp.ones((B, 1, T), jnp.int32)

    def init_layer(k):
        ks = jax.random.split(k, 6)
        scale = 0.1
        return dict(
            sa_w=scale * jax.random.normal(ks[0], (4, D, D), jnp.float32),
            sa_b=scale * jax.random.normal(ks[1], (4, D), jnp.float32),
            ca_w=scale * jax.random.normal(ks[2], (4, D, D), jnp.float32),
            ca_b=scale * jax.random.normal(ks[3], (4, D), jnp.float32),
            ff_w1=scale * jax.random.normal(ks[4], (D, DFF), jnp.float32),
            ff_b1=jnp.zeros((1, DFF), jnp.float32),
            ff_w2=scale * jax.random.normal(ks[5], (DFF, D), jnp.float32),
            ff_b2=jnp.zeros((1, D), jnp.float32),
            # 3 LayerNormalizations per block, each with scalar (alpha, bias)
            ln=jnp.array([1.0, 0.0, 1.1, 0.05, 0.9, -0.05], jnp.float32),
        )

    layer_params = [init_layer(keys[4 + i]) for i in range(L)]
    final_ln = jnp.array([1.05, 0.02], jnp.float32)   # Decoder._norm alpha, bias

    out = decoder_forward(x, enc, src_pad, tgt_pad, layer_params, final_ln, num_heads=H)
    out = jax.block_until_ready(out)

    ref = _ref_decoder(x, enc, src_pad, tgt_pad, layer_params, final_ln, H)
    assert out.shape == (B, T, D), out.shape
    err = float(jnp.max(jnp.abs(out - ref)))
    assert err < 2e-2, f"max abs err {err}"

    print("KERNEL_OK")
</pallas_src>

<mosaic_0001>
module attributes {stable_mosaic.version = 11 : i64} {
  func.func @_decoder_kernel(%arg0: i32, %arg1: i32, %arg2: memref<1x8x32xf32, #tpu.memory_space<vmem>>, %arg3: memref<1x16x32xf32, #tpu.memory_space<vmem>>, %arg4: memref<1x1x16xi32, #tpu.memory_space<vmem>>, %arg5: memref<1x1x8xi32, #tpu.memory_space<vmem>>, %arg6: memref<1x32x96xbf16, #tpu.memory_space<vmem>>, %arg7: memref<1x1x96xf32, #tpu.memory_space<vmem>>, %arg8: memref<1x32x32xbf16, #tpu.memory_space<vmem>>, %arg9: memref<1x1x32xf32, #tpu.memory_space<vmem>>, %arg10: memref<1x32x32xbf16, #tpu.memory_space<vmem>>, %arg11: memref<1x1x32xf32, #tpu.memory_space<vmem>>, %arg12: memref<1x32x64xbf16, #tpu.memory_space<vmem>>, %arg13: memref<1x1x64xf32, #tpu.memory_space<vmem>>, %arg14: memref<1x32x32xbf16, #tpu.memory_space<vmem>>, %arg15: memref<1x1x32xf32, #tpu.memory_space<vmem>>, %arg16: memref<1x32x64xbf16, #tpu.memory_space<vmem>>, %arg17: memref<1x1x64xf32, #tpu.memory_space<vmem>>, %arg18: memref<1x64x32xbf16, #tpu.memory_space<vmem>>, %arg19: memref<1x1x32xf32, #tpu.memory_space<vmem>>, %arg20: memref<2x6xf32, #tpu.memory_space<smem>>, %arg21: memref<2xf32, #tpu.memory_space<smem>>, %arg22: memref<1x8x32xf32, #tpu.memory_space<vmem>>) attributes {dimension_semantics = [#tpu.dimension_semantics<parallel>, #tpu.dimension_semantics<arbitrary>], iteration_bounds = array<i64: 2, 2>, scalar_prefetch = 0 : i64, scratch_operands = 0 : i64, tpu.core_type = #tpu.core_type<tc>, window_params = [{transform_indices = @transform_0, window_bounds = array<i64: 1, 8, 32>}, {transform_indices = @transform_1, window_bounds = array<i64: 1, 16, 32>}, {transform_indices = @transform_2, window_bounds = array<i64: 1, 1, 16>}, {transform_indices = @transform_3, window_bounds = array<i64: 1, 1, 8>}, {transform_indices = @transform_4, window_bounds = array<i64: 1, 32, 96>}, {transform_indices = @transform_5, window_bounds = array<i64: 1, 1, 96>}, {transform_indices = @transform_6, window_bounds = array<i64: 1, 32, 32>}, {transform_indices = @transform_7, window_bounds = array<i64: 1, 1, 32>}, {transform_indices = @transform_8, window_bounds = array<i64: 1, 32, 32>}, {transform_indices = @transform_9, window_bounds = array<i64: 1, 1, 32>}, {transform_indices = @transform_10, window_bounds = array<i64: 1, 32, 64>}, {transform_indices = @transform_11, window_bounds = array<i64: 1, 1, 64>}, {transform_indices = @transform_12, window_bounds = array<i64: 1, 32, 32>}, {transform_indices = @transform_13, window_bounds = array<i64: 1, 1, 32>}, {transform_indices = @transform_14, window_bounds = array<i64: 1, 32, 64>}, {transform_indices = @transform_15, window_bounds = array<i64: 1, 1, 64>}, {transform_indices = @transform_16, window_bounds = array<i64: 1, 64, 32>}, {transform_indices = @transform_17, window_bounds = array<i64: 1, 1, 32>}, {transform_indices = @transform_18, window_bounds = array<i64: 2, 6>}, {transform_indices = @transform_19, window_bounds = array<i64: 2>}, {transform_indices = @transform_20, window_bounds = array<i64: 1, 8, 32>}]} {
    %c0_i32 = arith.constant 0 : i32
    %0 = arith.cmpi eq, %arg1, %c0_i32 : i32
    %1 = arith.extui %0 : i1 to i32
    %c0_i32_0 = arith.constant 0 : i32
    %2 = arith.cmpi ne, %1, %c0_i32_0 : i32
    scf.if %2 {
      %c0_98 = arith.constant 0 : index
      %c0_99 = arith.constant 0 : index
      %c0_100 = arith.constant 0 : index
      %235 = vector.load %arg2[%c0_98, %c0_99, %c0_100] : memref<1x8x32xf32, #tpu.memory_space<vmem>>, vector<1x8x32xf32>
      %236 = vector.shape_cast %235 : vector<1x8x32xf32> to vector<8x32xf32>
      %c0_101 = arith.constant 0 : index
      %c0_102 = arith.constant 0 : index
      %c0_103 = arith.constant 0 : index
      %237 = vector.load %arg22[%c0_101, %c0_102, %c0_103] : memref<1x8x32xf32, #tpu.memory_space<vmem>>, vector<1x8x32xf32>
      %238 = vector.shape_cast %237 : vector<1x8x32xf32> to vector<8x32xf32>
      %239 = vector.shape_cast %236 : vector<8x32xf32> to vector<1x8x32xf32>
      tpu.vector_store %arg22[%c0_101, %c0_102, %c0_103], %239 {strides = array<i32>} : memref<1x8x32xf32, #tpu.memory_space<vmem>>, vector<1x8x32xf32>,
    } else {
    }
    %c0 = arith.constant 0 : index
    %c0_1 = arith.constant 0 : index
    %c0_2 = arith.constant 0 : index
    %3 = vector.load %arg22[%c0, %c0_1, %c0_2] : memref<1x8x32xf32, #tpu.memory_space<vmem>>, vector<1x8x32xf32>
    %4 = vector.shape_cast %3 : vector<1x8x32xf32> to vector<8x32xf32>
    %c0_3 = arith.constant 0 : index
    %c0_4 = arith.constant 0 : index
    %c0_5 = arith.constant 0 : index
    %5 = vector.load %arg4[%c0_3, %c0_4, %c0_5] : memref<1x1x16xi32, #tpu.memory_space<vmem>>, vector<1x1x16xi32>
    %6 = vector.shape_cast %5 : vector<1x1x16xi32> to vector<1x16xi32>
    %c0_i32_6 = arith.constant 0 : i32
    %7 = vector.broadcast %c0_i32_6 : i32 to vector<1x16xi32>
    %8 = arith.cmpi eq, %6, %7 : vector<1x16xi32>
    %cst = arith.constant -1.000000e+09 : f32
    %cst_7 = arith.constant 0.000000e+00 : f32
    %9 = vector.broadcast %cst : f32 to vector<1x16xf32>
    %10 = vector.broadcast %cst_7 : f32 to vector<1x16xf32>
    %11 = arith.select %8, %9, %10 : vector<1x16xi1>, vector<1x16xf32>
    %12 = tpu.iota {dimensions = array<i32: 0>} : vector<8x8xi32>
    %13 = tpu.iota {dimensions = array<i32: 1>} : vector<8x8xi32>
    %14 = arith.cmpi sle, %13, %12 : vector<8x8xi32>
    %cst_8 = arith.constant 0.000000e+00 : f32
    %cst_9 = arith.constant -1.000000e+09 : f32
    %15 = vector.broadcast %cst_8 : f32 to vector<8x8xf32>
    %16 = vector.broadcast %cst_9 : f32 to vector<8x8xf32>
    %17 = arith.select %14, %15, %16 : vector<8x8xi1>, vector<8x8xf32>
    %c0_10 = arith.constant 0 : index
    %c0_11 = arith.constant 0 : index
    %c0_12 = arith.constant 0 : index
    %18 = vector.load %arg5[%c0_10, %c0_11, %c0_12] : memref<1x1x8xi32, #tpu.memory_space<vmem>>, vector<1x1x8xi32>
    %19 = vector.shape_cast %18 : vector<1x1x8xi32> to vector<1x8xi32>
    %c0_i32_13 = arith.constant 0 : i32
    %20 = vector.broadcast %c0_i32_13 : i32 to vector<1x8xi32>
    %21 = arith.cmpi eq, %19, %20 : vector<1x8xi32>
    %cst_14 = arith.constant -1.000000e+09 : f32
    %cst_15 = arith.constant 0.000000e+00 : f32
    %22 = vector.broadcast %cst_14 : f32 to vector<1x8xf32>
    %23 = vector.broadcast %cst_15 : f32 to vector<1x8xf32>
    %24 = arith.select %21, %22, %23 : vector<1x8xi1>, vector<1x8xf32>
    %25 = vector.broadcast %24 : vector<1x8xf32> to vector<8x8xf32>
    %26 = arith.addf %17, %25 : vector<8x8xf32>
    %27 = arith.index_cast %arg1 : i32 to index
    %c0_16 = arith.constant 0 : index
    %28 = memref.load %arg20[%27, %c0_16] : memref<2x6xf32, #tpu.memory_space<smem>>
    %29 = arith.index_cast %arg1 : i32 to index
    %c1 = arith.constant 1 : index
    %30 = memref.load %arg20[%29, %c1] : memref<2x6xf32, #tpu.memory_space<smem>>
    %cst_17 = arith.constant dense<0.000000e+00> : vector<8xf32>
    %31 = vector.multi_reduction <add>, %4, %cst_17 [1] : vector<8x32xf32> to vector<8xf32>
    %32 = vector.shape_cast %31 : vector<8xf32> to vector<8x1xf32>
    %cst_18 = arith.constant 3.200000e+01 : f32
    %33 = vector.broadcast %cst_18 : f32 to vector<8x1xf32>
    %34 = arith.divf %32, %33 : vector<8x1xf32>
    %35 = vector.broadcast %34 : vector<8x1xf32> to vector<8x32xf32>
    %36 = arith.subf %4, %35 : vector<8x32xf32>
    %37 = arith.mulf %36, %36 : vector<8x32xf32>
    %cst_19 = arith.constant dense<0.000000e+00> : vector<8xf32>
    %38 = vector.multi_reduction <add>, %37, %cst_19 [1] : vector<8x32xf32> to vector<8xf32>
    %39 = vector.shape_cast %38 : vector<8xf32> to vector<8x1xf32>
    %cst_20 = arith.constant 3.100000e+01 : f32
    %40 = vector.broadcast %cst_20 : f32 to vector<8x1xf32>
    %41 = arith.divf %39, %40 : vector<8x1xf32>
    %42 = vector.broadcast %34 : vector<8x1xf32> to vector<8x32xf32>
    %43 = arith.subf %4, %42 : vector<8x32xf32>
    %44 = vector.broadcast %28 : f32 to vector<8x32xf32>
    %45 = arith.mulf %44, %43 : vector<8x32xf32>
    %46 = math.sqrt %41 : vector<8x1xf32>
    %cst_21 = arith.constant 9.99999997E-7 : f32
    %47 = vector.broadcast %cst_21 : f32 to vector<8x1xf32>
    %48 = arith.addf %46, %47 : vector<8x1xf32>
    %49 = vector.broadcast %48 : vector<8x1xf32> to vector<8x32xf32>
    %50 = arith.divf %45, %49 : vector<8x32xf32>
    %51 = vector.broadcast %30 : f32 to vector<8x32xf32>
    %52 = arith.addf %50, %51 : vector<8x32xf32>
    %53 = arith.truncf %52 : vector<8x32xf32> to vector<8x32xbf16>
    %c0_22 = arith.constant 0 : index
    %c0_23 = arith.constant 0 : index
    %c0_24 = arith.constant 0 : index
    %54 = vector.load %arg6[%c0_22, %c0_23, %c0_24] : memref<1x32x96xbf16, #tpu.memory_space<vmem>>, vector<1x32x96xbf16>
    %55 = vector.shape_cast %54 : vector<1x32x96xbf16> to vector<32x96xbf16>
    %cst_25 = arith.constant dense<0.000000e+00> : vector<8x96xf32>
    %56 = tpu.matmul %53, %55, %cst_25 {dimension_numbers = #tpu.dot_dimension_numbers<[1], [0], [0], [1], [0, 0, 1, 1], [], []>} : vector<8x32xbf16>, vector<32x96xbf16>, vector<8x96xf32> -> vector<8x96xf32>
    %c0_26 = arith.constant 0 : index
    %c0_27 = arith.constant 0 : index
    %c0_28 = arith.constant 0 : index
    %57 = vector.load %arg7[%c0_26, %c0_27, %c0_28] : memref<1x1x96xf32, #tpu.memory_space<vmem>>, vector<1x1x96xf32>
    %58 = vector.shape_cast %57 : vector<1x1x96xf32> to vector<1x96xf32>
    %59 = vector.broadcast %58 : vector<1x96xf32> to vector<8x96xf32>
    %60 = arith.addf %56, %59 : vector<8x96xf32>
    %61 = vector.extract_strided_slice %60 {offsets = [0, 0], sizes = [8, 32], strides = [1, 1]} : vector<8x96xf32> to vector<8x32xf32>
    %62 = vector.extract_strided_slice %60 {offsets = [0, 32], sizes = [8, 32], strides = [1, 1]} : vector<8x96xf32> to vector<8x32xf32>
    %63 = vector.extract_strided_slice %60 {offsets = [0, 64], sizes = [8, 32], strides = [1, 1]} : vector<8x96xf32> to vector<8x32xf32>
    %64 = vector.shape_cast %61 : vector<8x32xf32> to vector<8x4x8xf32>
    %65 = tpu.transpose %64, [1, 0, 2] : vector<8x4x8xf32> -> vector<4x8x8xf32>
    %66 = arith.truncf %65 : vector<4x8x8xf32> to vector<4x8x8xbf16>
    %67 = vector.shape_cast %62 : vector<8x32xf32> to vector<8x4x8xf32>
    %68 = tpu.transpose %67, [1, 0, 2] : vector<8x4x8xf32> -> vector<4x8x8xf32>
    %69 = arith.truncf %68 : vector<4x8x8xf32> to vector<4x8x8xbf16>
    %70 = vector.shape_cast %63 : vector<8x32xf32> to vector<8x4x8xf32>
    %71 = tpu.transpose %70, [1, 0, 2] : vector<8x4x8xf32> -> vector<4x8x8xf32>
    %72 = arith.truncf %71 : vector<4x8x8xf32> to vector<4x8x8xbf16>
    "tpu.trace_start"() <{level = 10 : i32, message = "htd,hsd->hts"}> : () -> ()
    %cst_29 = arith.constant dense<0.000000e+00> : vector<4x8x8xf32>
    %73 = tpu.matmul %66, %69, %cst_29 {dimension_numbers = #tpu.dot_dimension_numbers<[2], [2], [1], [1], [0, 0, 0, 1, 1, 1], [0], [0]>} : vector<4x8x8xbf16>, vector<4x8x8xbf16>, vector<4x8x8xf32> -> vector<4x8x8xf32>
    "tpu.trace_stop"() : () -> ()
    %cst_30 = arith.constant 0.353553385 : f32
    %74 = vector.broadcast %cst_30 : f32 to vector<4x8x8xf32>
    %75 = arith.mulf %73, %74 : vector<4x8x8xf32>
    %76 = vector.shape_cast %26 : vector<8x8xf32> to vector<1x8x8xf32>
    %77 = vector.broadcast %76 : vector<1x8x8xf32> to vector<4x8x8xf32>
    %78 = arith.addf %75, %77 : vector<4x8x8xf32>
    %cst_31 = arith.constant dense<0xFF800000> : vector<4x8xf32>
    %79 = vector.multi_reduction <maximumf>, %78, %cst_31 [2] : vector<4x8x8xf32> to vector<4x8xf32>
    %80 = vector.shape_cast %79 : vector<4x8xf32> to vector<4x8x1xf32>
    %81 = vector.broadcast %80 : vector<4x8x1xf32> to vector<4x8x8xf32>
    %82 = arith.subf %78, %81 : vector<4x8x8xf32>
    %83 = math.exp %82 : vector<4x8x8xf32>
    %cst_32 = arith.constant dense<0.000000e+00> : vector<4x8xf32>
    %84 = vector.multi_reduction <add>, %83, %cst_32 [2] : vector<4x8x8xf32> to vector<4x8xf32>
    %85 = vector.shape_cast %84 : vector<4x8xf32> to vector<4x8x1xf32>
    %86 = vector.broadcast %85 : vector<4x8x1xf32> to vector<4x8x8xf32>
    %87 = arith.divf %83, %86 : vector<4x8x8xf32>
    %88 = arith.truncf %87 : vector<4x8x8xf32> to vector<4x8x8xbf16>
    "tpu.trace_start"() <{level = 10 : i32, message = "hts,hsd->htd"}> : () -> ()
    %cst_33 = arith.constant dense<0.000000e+00> : vector<4x8x8xf32>
    %89 = tpu.matmul %88, %72, %cst_33 {dimension_numbers = #tpu.dot_dimension_numbers<[2], [1], [1], [2], [0, 0, 0, 1, 1, 2], [0], [0]>} : vector<4x8x8xbf16>, vector<4x8x8xbf16>, vector<4x8x8xf32> -> vector<4x8x8xf32>
    "tpu.trace_stop"() : () -> ()
    %90 = tpu.transpose %89, [1, 0, 2] : vector<4x8x8xf32> -> vector<8x4x8xf32>
    %91 = vector.shape_cast %90 : vector<8x4x8xf32> to vector<8x32xf32>
    %92 = arith.truncf %91 : vector<8x32xf32> to vector<8x32xbf16>
    %c0_34 = arith.constant 0 : index
    %c0_35 = arith.constant 0 : index
    %c0_36 = arith.constant 0 : index
    %93 = vector.load %arg8[%c0_34, %c0_35, %c0_36] : memref<1x32x32xbf16, #tpu.memory_space<vmem>>, vector<1x32x32xbf16>
    %94 = vector.shape_cast %93 : vector<1x32x32xbf16> to vector<32x32xbf16>
    %cst_37 = arith.constant dense<0.000000e+00> : vector<8x32xf32>
    %95 = tpu.matmul %92, %94, %cst_37 {dimension_numbers = #tpu.dot_dimension_numbers<[1], [0], [0], [1], [0, 0, 1, 1], [], []>} : vector<8x32xbf16>, vector<32x32xbf16>, vector<8x32xf32> -> vector<8x32xf32>
    %c0_38 = arith.constant 0 : index
    %c0_39 = arith.constant 0 : index
    %c0_40 = arith.constant 0 : index
    %96 = vector.load %arg9[%c0_38, %c0_39, %c0_40] : memref<1x1x32xf32, #tpu.memory_space<vmem>>, vector<1x1x32xf32>
    %97 = vector.shape_cast %96 : vector<1x1x32xf32> to vector<1x32xf32>
    %98 = vector.broadcast %97 : vector<1x32xf32> to vector<8x32xf32>
    %99 = arith.addf %95, %98 : vector<8x32xf32>
    %100 = arith.addf %4, %99 : vector<8x32xf32>
    %101 = arith.index_cast %arg1 : i32 to index
    %c2 = arith.constant 2 : index
    %102 = memref.load %arg20[%101, %c2] : memref<2x6xf32, #tpu.memory_space<smem>>
    %103 = arith.index_cast %arg1 : i32 to index
    %c3 = arith.constant 3 : index
    %104 = memref.load %arg20[%103, %c3] : memref<2x6xf32, #tpu.memory_space<smem>>
    %cst_41 = arith.constant dense<0.000000e+00> : vector<8xf32>
    %105 = vector.multi_reduction <add>, %100, %cst_41 [1] : vector<8x32xf32> to vector<8xf32>
    %106 = vector.shape_cast %105 : vector<8xf32> to vector<8x1xf32>
    %cst_42 = arith.constant 3.200000e+01 : f32
    %107 = vector.broadcast %cst_42 : f32 to vector<8x1xf32>
    %108 = arith.divf %106, %107 : vector<8x1xf32>
    %109 = vector.broadcast %108 : vector<8x1xf32> to vector<8x32xf32>
    %110 = arith.subf %100, %109 : vector<8x32xf32>
    %111 = arith.mulf %110, %110 : vector<8x32xf32>
    %cst_43 = arith.constant dense<0.000000e+00> : vector<8xf32>
    %112 = vector.multi_reduction <add>, %111, %cst_43 [1] : vector<8x32xf32> to vector<8xf32>
    %113 = vector.shape_cast %112 : vector<8xf32> to vector<8x1xf32>
    %cst_44 = arith.constant 3.100000e+01 : f32
    %114 = vector.broadcast %cst_44 : f32 to vector<8x1xf32>
    %115 = arith.divf %113, %114 : vector<8x1xf32>
    %116 = vector.broadcast %108 : vector<8x1xf32> to vector<8x32xf32>
    %117 = arith.subf %100, %116 : vector<8x32xf32>
    %118 = vector.broadcast %102 : f32 to vector<8x32xf32>
    %119 = arith.mulf %118, %117 : vector<8x32xf32>
    %120 = math.sqrt %115 : vector<8x1xf32>
    %cst_45 = arith.constant 9.99999997E-7 : f32
    %121 = vector.broadcast %cst_45 : f32 to vector<8x1xf32>
    %122 = arith.addf %120, %121 : vector<8x1xf32>
    %123 = vector.broadcast %122 : vector<8x1xf32> to vector<8x32xf32>
    %124 = arith.divf %119, %123 : vector<8x32xf32>
    %125 = vector.broadcast %104 : f32 to vector<8x32xf32>
    %126 = arith.addf %124, %125 : vector<8x32xf32>
    %127 = arith.truncf %126 : vector<8x32xf32> to vector<8x32xbf16>
    %c0_46 = arith.constant 0 : index
    %c0_47 = arith.constant 0 : index
    %c0_48 = arith.constant 0 : index
    %128 = vector.load %arg10[%c0_46, %c0_47, %c0_48] : memref<1x32x32xbf16, #tpu.memory_space<vmem>>, vector<1x32x32xbf16>
    %129 = vector.shape_cast %128 : vector<1x32x32xbf16> to vector<32x32xbf16>
    %cst_49 = arith.constant dense<0.000000e+00> : vector<8x32xf32>
    %130 = tpu.matmul %127, %129, %cst_49 {dimension_numbers = #tpu.dot_dimension_numbers<[1], [0], [0], [1], [0, 0, 1, 1], [], []>} : vector<8x32xbf16>, vector<32x32xbf16>, vector<8x32xf32> -> vector<8x32xf32>
    %c0_50 = arith.constant 0 : index
    %c0_51 = arith.constant 0 : index
    %c0_52 = arith.constant 0 : index
    %131 = vector.load %arg11[%c0_50, %c0_51, %c0_52] : memref<1x1x32xf32, #tpu.memory_space<vmem>>, vector<1x1x32xf32>
    %132 = vector.shape_cast %131 : vector<1x1x32xf32> to vector<1x32xf32>
    %133 = vector.broadcast %132 : vector<1x32xf32> to vector<8x32xf32>
    %134 = arith.addf %130, %133 : vector<8x32xf32>
    %c0_53 = arith.constant 0 : index
    %c0_54 = arith.constant 0 : index
    %c0_55 = arith.constant 0 : index
    %135 = vector.load %arg3[%c0_53, %c0_54, %c0_55] : memref<1x16x32xf32, #tpu.memory_space<vmem>>, vector<1x16x32xf32>
    %136 = vector.shape_cast %135 : vector<1x16x32xf32> to vector<16x32xf32>
    %137 = arith.truncf %136 : vector<16x32xf32> to vector<16x32xbf16>
    %c0_56 = arith.constant 0 : index
    %c0_57 = arith.constant 0 : index
    %c0_58 = arith.constant 0 : index
    %138 = vector.load %arg12[%c0_56, %c0_57, %c0_58] : memref<1x32x64xbf16, #tpu.memory_space<vmem>>, vector<1x32x64xbf16>
    %139 = vector.shape_cast %138 : vector<1x32x64xbf16> to vector<32x64xbf16>
    %cst_59 = arith.constant dense<0.000000e+00> : vector<16x64xf32>
    %140 = tpu.matmul %137, %139, %cst_59 {dimension_numbers = #tpu.dot_dimension_numbers<[1], [0], [0], [1], [0, 0, 1, 1], [], []>} : vector<16x32xbf16>, vector<32x64xbf16>, vector<16x64xf32> -> vector<16x64xf32>
    %c0_60 = arith.constant 0 : index
    %c0_61 = arith.constant 0 : index
    %c0_62 = arith.constant 0 : index
    %141 = vector.load %arg13[%c0_60, %c0_61, %c0_62] : memref<1x1x64xf32, #tpu.memory_space<vmem>>, vector<1x1x64xf32>
    %142 = vector.shape_cast %141 : vector<1x1x64xf32> to vector<1x64xf32>
    %143 = vector.broadcast %142 : vector<1x64xf32> to vector<16x64xf32>
    %144 = arith.addf %140, %143 : vector<16x64xf32>
    %145 = vector.extract_strided_slice %144 {offsets = [0, 0], sizes = [16, 32], strides = [1, 1]} : vector<16x64xf32> to vector<16x32xf32>
    %146 = vector.extract_strided_slice %144 {offsets = [0, 32], sizes = [16, 32], strides = [1, 1]} : vector<16x64xf32> to vector<16x32xf32>
    %147 = vector.shape_cast %134 : vector<8x32xf32> to vector<8x4x8xf32>
    %148 = tpu.transpose %147, [1, 0, 2] : vector<8x4x8xf32> -> vector<4x8x8xf32>
    %149 = arith.truncf %148 : vector<4x8x8xf32> to vector<4x8x8xbf16>
    %150 = vector.shape_cast %145 : vector<16x32xf32> to vector<16x4x8xf32>
    %151 = tpu.transpose %150, [1, 0, 2] : vector<16x4x8xf32> -> vector<4x16x8xf32>
    %152 = arith.truncf %151 : vector<4x16x8xf32> to vector<4x16x8xbf16>
    %153 = vector.shape_cast %146 : vector<16x32xf32> to vector<16x4x8xf32>
    %154 = tpu.transpose %153, [1, 0, 2] : vector<16x4x8xf32> -> vector<4x16x8xf32>
    %155 = arith.truncf %154 : vector<4x16x8xf32> to vector<4x16x8xbf16>
    "tpu.trace_start"() <{level = 10 : i32, message = "htd,hsd->hts"}> : () -> ()
    %cst_63 = arith.constant dense<0.000000e+00> : vector<4x8x16xf32>
    %156 = tpu.matmul %149, %152, %cst_63 {dimension_numbers = #tpu.dot_dimension_numbers<[2], [2], [1], [1], [0, 0, 0, 1, 1, 1], [0], [0]>} : vector<4x8x8xbf16>, vector<4x16x8xbf16>, vector<4x8x16xf32> -> vector<4x8x16xf32>
    "tpu.trace_stop"() : () -> ()
    %cst_64 = arith.constant 0.353553385 : f32
    %157 = vector.broadcast %cst_64 : f32 to vector<4x8x16xf32>
    %158 = arith.mulf %156, %157 : vector<4x8x16xf32>
    %159 = vector.shape_cast %11 : vector<1x16xf32> to vector<1x1x16xf32>
    %160 = vector.broadcast %159 : vector<1x1x16xf32> to vector<4x8x16xf32>
    %161 = arith.addf %158, %160 : vector<4x8x16xf32>
    %cst_65 = arith.constant dense<0xFF800000> : vector<4x8xf32>
    %162 = vector.multi_reduction <maximumf>, %161, %cst_65 [2] : vector<4x8x16xf32> to vector<4x8xf32>
    %163 = vector.shape_cast %162 : vector<4x8xf32> to vector<4x8x1xf32>
    %164 = vector.broadcast %163 : vector<4x8x1xf32> to vector<4x8x16xf32>
    %165 = arith.subf %161, %164 : vector<4x8x16xf32>
    %166 = math.exp %165 : vector<4x8x16xf32>
    %cst_66 = arith.constant dense<0.000000e+00> : vector<4x8xf32>
    %167 = vector.multi_reduction <add>, %166, %cst_66 [2] : vector<4x8x16xf32> to vector<4x8xf32>
    %168 = vector.shape_cast %167 : vector<4x8xf32> to vector<4x8x1xf32>
    %169 = vector.broadcast %168 : vector<4x8x1xf32> to vector<4x8x16xf32>
    %170 = arith.divf %166, %169 : vector<4x8x16xf32>
    %171 = arith.truncf %170 : vector<4x8x16xf32> to vector<4x8x16xbf16>
    "tpu.trace_start"() <{level = 10 : i32, message = "hts,hsd->htd"}> : () -> ()
    %cst_67 = arith.constant dense<0.000000e+00> : vector<4x8x8xf32>
    %172 = tpu.matmul %171, %155, %cst_67 {dimension_numbers = #tpu.dot_dimension_numbers<[2], [1], [1], [2], [0, 0, 0, 1, 1, 2], [0], [0]>} : vector<4x8x16xbf16>, vector<4x16x8xbf16>, vector<4x8x8xf32> -> vector<4x8x8xf32>
    "tpu.trace_stop"() : () -> ()
    %173 = tpu.transpose %172, [1, 0, 2] : vector<4x8x8xf32> -> vector<8x4x8xf32>
    %174 = vector.shape_cast %173 : vector<8x4x8xf32> to vector<8x32xf32>
    %175 = arith.truncf %174 : vector<8x32xf32> to vector<8x32xbf16>
    %c0_68 = arith.constant 0 : index
    %c0_69 = arith.constant 0 : index
    %c0_70 = arith.constant 0 : index
    %176 = vector.load %arg14[%c0_68, %c0_69, %c0_70] : memref<1x32x32xbf16, #tpu.memory_space<vmem>>, vector<1x32x32xbf16>
    %177 = vector.shape_cast %176 : vector<1x32x32xbf16> to vector<32x32xbf16>
    %cst_71 = arith.constant dense<0.000000e+00> : vector<8x32xf32>
    %178 = tpu.matmul %175, %177, %cst_71 {dimension_numbers = #tpu.dot_dimension_numbers<[1], [0], [0], [1], [0, 0, 1, 1], [], []>} : vector<8x32xbf16>, vector<32x32xbf16>, vector<8x32xf32> -> vector<8x32xf32>
    %c0_72 = arith.constant 0 : index
    %c0_73 = arith.constant 0 : index
    %c0_74 = arith.constant 0 : index
    %179 = vector.load %arg15[%c0_72, %c0_73, %c0_74] : memref<1x1x32xf32, #tpu.memory_space<vmem>>, vector<1x1x32xf32>
    %180 = vector.shape_cast %179 : vector<1x1x32xf32> to vector<1x32xf32>
    %181 = vector.broadcast %180 : vector<1x32xf32> to vector<8x32xf32>
    %182 = arith.addf %178, %181 : vector<8x32xf32>
    %183 = arith.addf %100, %182 : vector<8x32xf32>
    %184 = arith.index_cast %arg1 : i32 to index
    %c4 = arith.constant 4 : index
    %185 = memref.load %arg20[%184, %c4] : memref<2x6xf32, #tpu.memory_space<smem>>
    %186 = arith.index_cast %arg1 : i32 to index
    %c5 = arith.constant 5 : index
    %187 = memref.load %arg20[%186, %c5] : memref<2x6xf32, #tpu.memory_space<smem>>
    %cst_75 = arith.constant dense<0.000000e+00> : vector<8xf32>
    %188 = vector.multi_reduction <add>, %183, %cst_75 [1] : vector<8x32xf32> to vector<8xf32>
    %189 = vector.shape_cast %188 : vector<8xf32> to vector<8x1xf32>
    %cst_76 = arith.constant 3.200000e+01 : f32
    %190 = vector.broadcast %cst_76 : f32 to vector<8x1xf32>
    %191 = arith.divf %189, %190 : vector<8x1xf32>
    %192 = vector.broadcast %191 : vector<8x1xf32> to vector<8x32xf32>
    %193 = arith.subf %183, %192 : vector<8x32xf32>
    %194 = arith.mulf %193, %193 : vector<8x32xf32>
    %cst_77 = arith.constant dense<0.000000e+00> : vector<8xf32>
    %195 = vector.multi_reduction <add>, %194, %cst_77 [1] : vector<8x32xf32> to vector<8xf32>
    %196 = vector.shape_cast %195 : vector<8xf32> to vector<8x1xf32>
    %cst_78 = arith.constant 3.100000e+01 : f32
    %197 = vector.broadcast %cst_78 : f32 to vector<8x1xf32>
    %198 = arith.divf %196, %197 : vector<8x1xf32>
    %199 = vector.broadcast %191 : vector<8x1xf32> to vector<8x32xf32>
    %200 = arith.subf %183, %199 : vector<8x32xf32>
    %201 = vector.broadcast %185 : f32 to vector<8x32xf32>
    %202 = arith.mulf %201, %200 : vector<8x32xf32>
    %203 = math.sqrt %198 : vector<8x1xf32>
    %cst_79 = arith.constant 9.99999997E-7 : f32
    %204 = vector.broadcast %cst_79 : f32 to vector<8x1xf32>
    %205 = arith.addf %203, %204 : vector<8x1xf32>
    %206 = vector.broadcast %205 : vector<8x1xf32> to vector<8x32xf32>
    %207 = arith.divf %202, %206 : vector<8x32xf32>
    %208 = vector.broadcast %187 : f32 to vector<8x32xf32>
    %209 = arith.addf %207, %208 : vector<8x32xf32>
    %210 = arith.truncf %209 : vector<8x32xf32> to vector<8x32xbf16>
    %c0_80 = arith.constant 0 : index
    %c0_81 = arith.constant 0 : index
    %c0_82 = arith.constant 0 : index
    %211 = vector.load %arg16[%c0_80, %c0_81, %c0_82] : memref<1x32x64xbf16, #tpu.memory_space<vmem>>, vector<1x32x64xbf16>
    %212 = vector.shape_cast %211 : vector<1x32x64xbf16> to vector<32x64xbf16>
    %cst_83 = arith.constant dense<0.000000e+00> : vector<8x64xf32>
    %213 = tpu.matmul %210, %212, %cst_83 {dimension_numbers = #tpu.dot_dimension_numbers<[1], [0], [0], [1], [0, 0, 1, 1], [], []>} : vector<8x32xbf16>, vector<32x64xbf16>, vector<8x64xf32> -> vector<8x64xf32>
    %c0_84 = arith.constant 0 : index
    %c0_85 = arith.constant 0 : index
    %c0_86 = arith.constant 0 : index
    %214 = vector.load %arg17[%c0_84, %c0_85, %c0_86] : memref<1x1x64xf32, #tpu.memory_space<vmem>>, vector<1x1x64xf32>
    %215 = vector.shape_cast %214 : vector<1x1x64xf32> to vector<1x64xf32>
    %216 = vector.broadcast %215 : vector<1x64xf32> to vector<8x64xf32>
    %217 = arith.addf %213, %216 : vector<8x64xf32>
    %cst_87 = arith.constant 0.000000e+00 : f32
    %218 = vector.broadcast %cst_87 : f32 to vector<8x64xf32>
    %219 = arith.maximumf %217, %218 : vector<8x64xf32>
    %220 = arith.truncf %219 : vector<8x64xf32> to vector<8x64xbf16>
    %c0_88 = arith.constant 0 : index
    %c0_89 = arith.constant 0 : index
    %c0_90 = arith.constant 0 : index
    %221 = vector.load %arg18[%c0_88, %c0_89, %c0_90] : memref<1x64x32xbf16, #tpu.memory_space<vmem>>, vector<1x64x32xbf16>
    %222 = vector.shape_cast %221 : vector<1x64x32xbf16> to vector<64x32xbf16>
    %cst_91 = arith.constant dense<0.000000e+00> : vector<8x32xf32>
    %223 = tpu.matmul %220, %222, %cst_91 {dimension_numbers = #tpu.dot_dimension_numbers<[1], [0], [0], [1], [0, 0, 1, 1], [], []>} : vector<8x64xbf16>, vector<64x32xbf16>, vector<8x32xf32> -> vector<8x32xf32>
    %c0_92 = arith.constant 0 : index
    %c0_93 = arith.constant 0 : index
    %c0_94 = arith.constant 0 : index
    %224 = vector.load %arg19[%c0_92, %c0_93, %c0_94] : memref<1x1x32xf32, #tpu.memory_space<vmem>>, vector<1x1x32xf32>
    %225 = vector.shape_cast %224 : vector<1x1x32xf32> to vector<1x32xf32>
    %226 = vector.broadcast %225 : vector<1x32xf32> to vector<8x32xf32>
    %227 = arith.addf %223, %226 : vector<8x32xf32>
    %228 = arith.addf %183, %227 : vector<8x32xf32>
    %c1_i32 = arith.constant 1 : i32
    %229 = arith.cmpi slt, %arg1, %c1_i32 : i32
    %230 = arith.extui %229 : i1 to i32
    %c0_i32_95 = arith.constant 0 : i32
    %231 = arith.cmpi ne, %230, %c0_i32_95 : i32
    scf.if %231 {
      %c0_98 = arith.constant 0 : index
      %c0_99 = arith.constant 0 : index
      %c0_100 = arith.constant 0 : index
      %235 = vector.load %arg22[%c0_98, %c0_99, %c0_100] : memref<1x8x32xf32, #tpu.memory_space<vmem>>, vector<1x8x32xf32>
      %236 = vector.shape_cast %235 : vector<1x8x32xf32> to vector<8x32xf32>
      %237 = vector.shape_cast %228 : vector<8x32xf32> to vector<1x8x32xf32>
      tpu.vector_store %arg22[%c0_98, %c0_99, %c0_100], %237 {strides = array<i32>} : memref<1x8x32xf32, #tpu.memory_space<vmem>>, vector<1x8x32xf32>,
    } else {
    }
    %c1_i32_96 = arith.constant 1 : i32
    %232 = arith.cmpi eq, %arg1, %c1_i32_96 : i32
    %233 = arith.extui %232 : i1 to i32
    %c0_i32_97 = arith.constant 0 : i32
    %234 = arith.cmpi ne, %233, %c0_i32_97 : i32
    scf.if %234 {
      %c0_98 = arith.constant 0 : index
      %235 = memref.load %arg21[%c0_98] : memref<2xf32, #tpu.memory_space<smem>>
      %c1_99 = arith.constant 1 : index
      %236 = memref.load %arg21[%c1_99] : memref<2xf32, #tpu.memory_space<smem>>
      %cst_100 = arith.constant dense<0.000000e+00> : vector<8xf32>
      %237 = vector.multi_reduction <add>, %228, %cst_100 [1] : vector<8x32xf32> to vector<8xf32>
      %238 = vector.shape_cast %237 : vector<8xf32> to vector<8x1xf32>
      %cst_101 = arith.constant 3.200000e+01 : f32
      %239 = vector.broadcast %cst_101 : f32 to vector<8x1xf32>
      %240 = arith.divf %238, %239 : vector<8x1xf32>
      %241 = vector.broadcast %240 : vector<8x1xf32> to vector<8x32xf32>
      %242 = arith.subf %228, %241 : vector<8x32xf32>
      %243 = arith.mulf %242, %242 : vector<8x32xf32>
      %cst_102 = arith.constant dense<0.000000e+00> : vector<8xf32>
      %244 = vector.multi_reduction <add>, %243, %cst_102 [1] : vector<8x32xf32> to vector<8xf32>
      %245 = vector.shape_cast %244 : vector<8xf32> to vector<8x1xf32>
      %cst_103 = arith.constant 3.100000e+01 : f32
      %246 = vector.broadcast %cst_103 : f32 to vector<8x1xf32>
      %247 = arith.divf %245, %246 : vector<8x1xf32>
      %248 = vector.broadcast %240 : vector<8x1xf32> to vector<8x32xf32>
      %249 = arith.subf %228, %248 : vector<8x32xf32>
      %250 = vector.broadcast %235 : f32 to vector<8x32xf32>
      %251 = arith.mulf %250, %249 : vector<8x32xf32>
      %252 = math.sqrt %247 : vector<8x1xf32>
      %cst_104 = arith.constant 9.99999997E-7 : f32
      %253 = vector.broadcast %cst_104 : f32 to vector<8x1xf32>
      %254 = arith.addf %252, %253 : vector<8x1xf32>
      %255 = vector.broadcast %254 : vector<8x1xf32> to vector<8x32xf32>
      %256 = arith.divf %251, %255 : vector<8x32xf32>
      %257 = vector.broadcast %236 : f32 to vector<8x32xf32>
      %258 = arith.addf %256, %257 : vector<8x32xf32>
      %c0_105 = arith.constant 0 : index
      %c0_106 = arith.constant 0 : index
      %c0_107 = arith.constant 0 : index
      %259 = vector.load %arg22[%c0_105, %c0_106, %c0_107] : memref<1x8x32xf32, #tpu.memory_space<vmem>>, vector<1x8x32xf32>
      %260 = vector.shape_cast %259 : vector<1x8x32xf32> to vector<8x32xf32>
      %261 = vector.shape_cast %258 : vector<8x32xf32> to vector<1x8x32xf32>
      tpu.vector_store %arg22[%c0_105, %c0_106, %c0_107], %261 {strides = array<i32>} : memref<1x8x32xf32, #tpu.memory_space<vmem>>, vector<1x8x32xf32>,
    } else {
    }
    return
  }
  func.func @transform_0(%arg0: i32, %arg1: i32) -> (i32, i32, i32) {
    %c0_i32 = arith.constant 0 : i32
    %c0_i32_0 = arith.constant 0 : i32
    %c0_i32_1 = arith.constant 0 : i32
    return %arg0, %c0_i32, %c0_i32_0 : i32, i32, i32
  }
  func.func @transform_1(%arg0: i32, %arg1: i32) -> (i32, i32, i32) {
    %c0_i32 = arith.constant 0 : i32
    %c0_i32_0 = arith.constant 0 : i32
    %c0_i32_1 = arith.constant 0 : i32
    return %arg0, %c0_i32, %c0_i32_0 : i32, i32, i32
  }
  func.func @transform_2(%arg0: i32, %arg1: i32) -> (i32, i32, i32) {
    %c0_i32 = arith.constant 0 : i32
    %c0_i32_0 = arith.constant 0 : i32
    %c0_i32_1 = arith.constant 0 : i32
    return %arg0, %c0_i32, %c0_i32_0 : i32, i32, i32
  }
  func.func @transform_3(%arg0: i32, %arg1: i32) -> (i32, i32, i32) {
    %c0_i32 = arith.constant 0 : i32
    %c0_i32_0 = arith.constant 0 : i32
    %c0_i32_1 = arith.constant 0 : i32
    return %arg0, %c0_i32, %c0_i32_0 : i32, i32, i32
  }
  func.func @transform_4(%arg0: i32, %arg1: i32) -> (i32, i32, i32) {
    %c0_i32 = arith.constant 0 : i32
    %c0_i32_0 = arith.constant 0 : i32
    %c0_i32_1 = arith.constant 0 : i32
    return %arg1, %c0_i32, %c0_i32_0 : i32, i32, i32
  }
  func.func @transform_5(%arg0: i32, %arg1: i32) -> (i32, i32, i32) {
    %c0_i32 = arith.constant 0 : i32
    %c0_i32_0 = arith.constant 0 : i32
    %c0_i32_1 = arith.constant 0 : i32
    return %arg1, %c0_i32, %c0_i32_0 : i32, i32, i32
  }
  func.func @transform_6(%arg0: i32, %arg1: i32) -> (i32, i32, i32) {
    %c0_i32 = arith.constant 0 : i32
    %c0_i32_0 = arith.constant 0 : i32
    %c0_i32_1 = arith.constant 0 : i32
    return %arg1, %c0_i32, %c0_i32_0 : i32, i32, i32
  }
  func.func @transform_7(%arg0: i32, %arg1: i32) -> (i32, i32, i32) {
    %c0_i32 = arith.constant 0 : i32
    %c0_i32_0 = arith.constant 0 : i32
    %c0_i32_1 = arith.constant 0 : i32
    return %arg1, %c0_i32, %c0_i32_0 : i32, i32, i32
  }
  func.func @transform_8(%arg0: i32, %arg1: i32) -> (i32, i32, i32) {
    %c0_i32 = arith.constant 0 : i32
    %c0_i32_0 = arith.constant 0 : i32
    %c0_i32_1 = arith.constant 0 : i32
    return %arg1, %c0_i32, %c0_i32_0 : i32, i32, i32
  }
  func.func @transform_9(%arg0: i32, %arg1: i32) -> (i32, i32, i32) {
    %c0_i32 = arith.constant 0 : i32
    %c0_i32_0 = arith.constant 0 : i32
    %c0_i32_1 = arith.constant 0 : i32
    return %arg1, %c0_i32, %c0_i32_0 : i32, i32, i32
  }
  func.func @transform_10(%arg0: i32, %arg1: i32) -> (i32, i32, i32) {
    %c0_i32 = arith.constant 0 : i32
    %c0_i32_0 = arith.constant 0 : i32
    %c0_i32_1 = arith.constant 0 : i32
    return %arg1, %c0_i32, %c0_i32_0 : i32, i32, i32
  }
  func.func @transform_11(%arg0: i32, %arg1: i32) -> (i32, i32, i32) {
    %c0_i32 = arith.constant 0 : i32
    %c0_i32_0 = arith.constant 0 : i32
    %c0_i32_1 = arith.constant 0 : i32
    return %arg1, %c0_i32, %c0_i32_0 : i32, i32, i32
  }
  func.func @transform_12(%arg0: i32, %arg1: i32) -> (i32, i32, i32) {
    %c0_i32 = arith.constant 0 : i32
    %c0_i32_0 = arith.constant 0 : i32
    %c0_i32_1 = arith.constant 0 : i32
    return %arg1, %c0_i32, %c0_i32_0 : i32, i32, i32
  }
  func.func @transform_13(%arg0: i32, %arg1: i32) -> (i32, i32, i32) {
    %c0_i32 = arith.constant 0 : i32
    %c0_i32_0 = arith.constant 0 : i32
    %c0_i32_1 = arith.constant 0 : i32
    return %arg1, %c0_i32, %c0_i32_0 : i32, i32, i32
  }
  func.func @transform_14(%arg0: i32, %arg1: i32) -> (i32, i32, i32) {
    %c0_i32 = arith.constant 0 : i32
    %c0_i32_0 = arith.constant 0 : i32
    %c0_i32_1 = arith.constant 0 : i32
    return %arg1, %c0_i32, %c0_i32_0 : i32, i32, i32
  }
  func.func @transform_15(%arg0: i32, %arg1: i32) -> (i32, i32, i32) {
    %c0_i32 = arith.constant 0 : i32
    %c0_i32_0 = arith.constant 0 : i32
    %c0_i32_1 = arith.constant 0 : i32
    return %arg1, %c0_i32, %c0_i32_0 : i32, i32, i32
  }
  func.func @transform_16(%arg0: i32, %arg1: i32) -> (i32, i32, i32) {
    %c0_i32 = arith.constant 0 : i32
    %c0_i32_0 = arith.constant 0 : i32
    %c0_i32_1 = arith.constant 0 : i32
    return %arg1, %c0_i32, %c0_i32_0 : i32, i32, i32
  }
  func.func @transform_17(%arg0: i32, %arg1: i32) -> (i32, i32, i32) {
    %c0_i32 = arith.constant 0 : i32
    %c0_i32_0 = arith.constant 0 : i32
    %c0_i32_1 = arith.constant 0 : i32
    return %arg1, %c0_i32, %c0_i32_0 : i32, i32, i32
  }
  func.func @transform_18(%arg0: i32, %arg1: i32) -> (i32, i32) {
    %c0_i32 = arith.constant 0 : i32
    %c0_i32_0 = arith.constant 0 : i32
    %c0_i32_1 = arith.constant 0 : i32
    return %c0_i32, %c0_i32_0 : i32, i32
  }
  func.func @transform_19(%arg0: i32, %arg1: i32) -> i32 {
    %c0_i32 = arith.constant 0 : i32
    %c0_i32_0 = arith.constant 0 : i32
    return %c0_i32 : i32
  }
  func.func @transform_20(%arg0: i32, %arg1: i32) -> (i32, i32, i32) {
    %c0_i32 = arith.constant 0 : i32
    %c0_i32_0 = arith.constant 0 : i32
    %c0_i32_1 = arith.constant 0 : i32
    return %arg0, %c0_i32, %c0_i32_0 : i32, i32, i32
  }
}

</mosaic_0001>

<llo_original>
// kernel: tpu_custom_call.1
$region0: #{tpu_custom_call.1}
  #allocation0 [shape = 'u32[]', space=smem, size = 0x4, offset = 0x4, fixed_abs, tag = 'smem constant byte address 0x4 - core index']
  #allocation1 [shape = 'u32[144,128]{1,0:T(1,128)}', space=vmem, size = 0x12000, scoped, tag = 'internal scratch']
  %s0 = inlined_call_operand.hbm [shape: f32[2,8,32], index: 0, kind: input, shape index: {}]
  %s1 = inlined_call_operand.hbm [shape: f32[2,16,32], index: 1, kind: input, shape index: {}]
  %s2 = inlined_call_operand.hbm [shape: s32[2,1,16], index: 2, kind: input, shape index: {}]
  %s3 = inlined_call_operand.hbm [shape: s32[2,1,8], index: 3, kind: input, shape index: {}]
  %s4 = inlined_call_operand.hbm [shape: bf16[2,32,96], index: 4, kind: input, shape index: {}]
  %s5 = inlined_call_operand.hbm [shape: f32[2,1,96], index: 5, kind: input, shape index: {}]
  %s6 = inlined_call_operand.hbm [shape: bf16[2,32,32], index: 6, kind: input, shape index: {}]
  %s7 = inlined_call_operand.hbm [shape: f32[2,1,32], index: 7, kind: input, shape index: {}]
  %s8 = inlined_call_operand.hbm [shape: bf16[2,32,32], index: 8, kind: input, shape index: {}]
  %s9 = inlined_call_operand.hbm [shape: f32[2,1,32], index: 9, kind: input, shape index: {}]
  %s10 = inlined_call_operand.hbm [shape: bf16[2,32,64], index: 10, kind: input, shape index: {}]
  %s11 = inlined_call_operand.hbm [shape: f32[2,1,64], index: 11, kind: input, shape index: {}]
  %s12 = inlined_call_operand.hbm [shape: bf16[2,32,32], index: 12, kind: input, shape index: {}]
  %s13 = inlined_call_operand.hbm [shape: f32[2,1,32], index: 13, kind: input, shape index: {}]
  %s14 = inlined_call_operand.hbm [shape: bf16[2,32,64], index: 14, kind: input, shape index: {}]
  %s15 = inlined_call_operand.hbm [shape: f32[2,1,64], index: 15, kind: input, shape index: {}]
  %s16 = inlined_call_operand.hbm [shape: bf16[2,64,32], index: 16, kind: input, shape index: {}]
  %s17 = inlined_call_operand.hbm [shape: f32[2,1,32], index: 17, kind: input, shape index: {}]
  %s18 = inlined_call_operand.hbm [shape: f32[2,6], index: 18, kind: input, shape index: {}]
  %s19 = inlined_call_operand.hbm [shape: f32[2], index: 19, kind: input, shape index: {}]
  %s20 = inlined_call_operand.hbm [shape: f32[2,8,32], index: 20, kind: output, shape index: {}]
  %s21 = sld [smem:[#allocation0]]
  $region205: #{tpu_custom_call.1} parent=0
    _
  %s23 = ssub.s32 1, %s21
  %s24 = scalar_select 0, %s23, %s21
  $region1: #{tpu_custom_call.1} parent=0
    #allocation2 [shape = 'u8[8192]{0}', space=vmem, size = 0x2000, scoped, tag = 'input window, operand 0']
    #allocation3 [shape = 's32[2]{0}', space=sflag, size = 0x8, scoped, tag = 'scoped memory for tpu_custom_call.1']
    #allocation4 [shape = 's32[2]{0}', space=sflag, size = 0x8, scoped, tag = 'scoped memory for tpu_custom_call.1']
    #allocation5 [shape = 's32[2]{0}', space=sflag, size = 0x8, scoped, tag = 'scoped memory for tpu_custom_call.1']
    #allocation6 [shape = 'u8[16384]{0}', space=vmem, size = 0x4000, scoped, tag = 'input window, operand 1']
    #allocation7 [shape = 's32[2]{0}', space=sflag, size = 0x8, scoped, tag = 'scoped memory for tpu_custom_call.1']
    #allocation8 [shape = 'u8[1024]{0}', space=vmem, size = 0x400, scoped, tag = 'input window, operand 2']
    #allocation9 [shape = 'u8[1024]{0}', space=vmem, size = 0x400, scoped, tag = 'input window, operand 3']
    #allocation10 [shape = 's32[2]{0}', space=sflag, size = 0x8, scoped, tag = 'scoped memory for tpu_custom_call.1']
    #allocation11 [shape = 'u8[16384]{0}', space=vmem, size = 0x4000, scoped, tag = 'input window, operand 4']
    #allocation12 [shape = 'u8[1024]{0}', space=vmem, size = 0x400, scoped, tag = 'input window, operand 5']
    #allocation13 [shape = 's32[2]{0}', space=sflag, size = 0x8, scoped, tag = 'scoped memory for tpu_custom_call.1']
    #allocation14 [shape = 'u8[16384]{0}', space=vmem, size = 0x4000, scoped, tag = 'input window, operand 6']
    #allocation15 [shape = 'u8[1024]{0}', space=vmem, size = 0x400, scoped, tag = 'input window, operand 7']
    #allocation16 [shape = 's32[2]{0}', space=sflag, size = 0x8, scoped, tag = 'scoped memory for tpu_custom_call.1']
    #allocation17 [shape = 'u8[16384]{0}', space=vmem, size = 0x4000, scoped, tag = 'input window, operand 8']
    #allocation18 [shape = 'u8[1024]{0}', space=vmem, size = 0x400, scoped, tag = 'input window, operand 9']
    #allocation19 [shape = 's32[2]{0}', space=sflag, size = 0x8, scoped, tag = 'scoped memory for tpu_custom_call.1']
    #allocation20 [shape = 'u8[16384]{0}', space=vmem, size = 0x4000, scoped, tag = 'input window, operand 10']
    #allocation21 [shape = 'u8[1024]{0}', space=vmem, size = 0x400, scoped, tag = 'input window, operand 11']
    #allocation22 [shape = 's32[2]{0}', space=sflag, size = 0x8, scoped, tag = 'scoped memory for tpu_custom_call.1']
    #allocation23 [shape = 'u8[16384]{0}', space=vmem, size = 0x4000, scoped, tag = 'input window, operand 12']
    #allocation24 [shape = 'u8[1024]{0}', space=vmem, size = 0x400, scoped, tag = 'input window, operand 13']
    #allocation25 [shape = 's32[2]{0}', space=sflag, size = 0x8, scoped, tag = 'scoped memory for tpu_custom_call.1']
    #allocation26 [shape = 'u8[16384]{0}', space=vmem, size = 0x4000, scoped, tag = 'input window, operand 14']
    #allocation27 [shape = 'u8[1024]{0}', space=vmem, size = 0x400, scoped, tag = 'input window, operand 15']
    #allocation28 [shape = 's32[2]{0}', space=sflag, size = 0x8, scoped, tag = 'scoped memory for tpu_custom_call.1']
    #allocation29 [shape = 'u8[32768]{0}', space=vmem, size = 0x8000, scoped, tag = 'input window, operand 16']
    #allocation30 [shape = 'u8[1024]{0}', space=vmem, size = 0x400, scoped, tag = 'input window, operand 17']
    #allocation31 [shape = 's32[2]{0}', space=sflag, size = 0x8, scoped, tag = 'scoped memory for tpu_custom_call.1']
    #allocation32 [shape = 'u8[1024]{0}', space=smem, size = 0x400, scoped, tag = 'input window, operand 18, single buffered']
    #allocation33 [shape = 'u8[512]{0}', space=smem, size = 0x200, scoped, tag = 'input window, operand 19, single buffered']
    #allocation34 [shape = 's32[1]{0}', space=sflag, size = 0x4, scoped, tag = 'scoped memory for tpu_custom_call.1']
    #allocation35 [shape = 'u8[8192]{0}', space=vmem, size = 0x2000, scoped, tag = 'output window, operand 0']
    %25 = vsyncpa [#allocation3], 0
    %s26 = scalar_lea.sflag [#allocation3], 1
    %27 = vsyncpa %s26, 0
    %28 = vsyncpa [#allocation7], 0
    %s29 = scalar_lea.sflag [#allocation7], 1
    %30 = vsyncpa %s29, 0
    %31 = vsyncpa [#allocation10], 0
    %s32 = scalar_lea.sflag [#allocation10], 1
    %33 = vsyncpa %s32, 0
    %34 = vsyncpa [#allocation13], 0
    %s35 = scalar_lea.sflag [#allocation13], 1
    %36 = vsyncpa %s35, 0
    %37 = vsyncpa [#allocation16], 0
    %s38 = scalar_lea.sflag [#allocation16], 1
    %39 = vsyncpa %s38, 0
    %40 = vsyncpa [#allocation19], 0
    %s41 = scalar_lea.sflag [#allocation19], 1
    %42 = vsyncpa %s41, 0
    %43 = vsyncpa [#allocation22], 0
    %s44 = scalar_lea.sflag [#allocation22], 1
    %45 = vsyncpa %s44, 0
    %46 = vsyncpa [#allocation25], 0
    %s47 = scalar_lea.sflag [#allocation25], 1
    %48 = vsyncpa %s47, 0
    %49 = vsyncpa [#allocation28], 0
    %s50 = scalar_lea.sflag [#allocation28], 1
    %51 = vsyncpa %s50, 0
    %52 = vsyncpa [#allocation31], 0
    %s53 = scalar_lea.sflag [#allocation31], 1
    %54 = vsyncpa %s53, 0
    %55 = vsyncpa [#allocation5], 0
    %56 = vsyncpa [#allocation34], 0
    %57 = vsyncpa [#allocation4], 0
    %s58 = scalar_lea.sflag [#allocation4], 1
    %59 = vsyncpa %s58, 0
    loop: start=0, step=1, limit=6
    $region2: #{tpu_custom_call.1} parent=1 // loop_pre_header
      _
    $region3: #{tpu_custom_call.1} parent=1 // loop_header
      %s61 = sphi 0, %s65
      %p62 = scmp.ge.s32.totalorder %s61, 6
      %s68 = sphi 0, %s80
      %s69 = sphi 0, %s76
      %s70 = sphi 0, %s68
      %s71 = sphi 0, %s69
      %s72 = sphi 0, %s70
      %s73 = sphi 0, %s71
      %s83 = sphi 0, %s85
      %s86 = sphi 0, %s83
      %s87 = sphi 0, %s86
      %s103 = sphi 0, %s87
      %s109 = sphi 0, %s111
      %s112 = sphi 0, %s109
      %s113 = sphi 0, %s112
      %s129 = sphi 0, %s113
      %s135 = sphi 0, %s137
      %s138 = sphi 0, %s135
      %s139 = sphi 0, %s138
      %s155 = sphi 0, %s139
      %s161 = sphi 0, %s163
      %s164 = sphi 0, %s161
      %s165 = sphi 0, %s164
      %s181 = sphi 0, %s165
      %s187 = sphi 0, %s189
      %s190 = sphi 0, %s187
      %s191 = sphi 0, %s190
      %s207 = sphi 0, %s191
      %s213 = sphi 0, %s215
      %s216 = sphi 0, %s213
      %s217 = sphi 0, %s216
      %s233 = sphi 0, %s217
      %s239 = sphi 0, %s241
      %s242 = sphi 0, %s239
      %s243 = sphi 0, %s242
      %s259 = sphi 0, %s243
      %s265 = sphi 0, %s267
      %s268 = sphi 0, %s265
      %s269 = sphi 0, %s268
      %s285 = sphi 0, %s269
      %s291 = sphi 0, %s293
      %s294 = sphi 0, %s291
      %s295 = sphi 0, %s294
      %s311 = sphi 0, %s295
      %s317 = sphi 0, %s319
      %s320 = sphi 0, %s317
      %s321 = sphi 0, %s320
      %s337 = sphi 0, %s321
      %s343 = sphi 0, %s345
      %s346 = sphi 0, %s343
      %s347 = sphi 0, %s346
      %s363 = sphi 0, %s347
      %s369 = sphi 0, %s371
      %s372 = sphi 0, %s369
      %s373 = sphi 0, %s372
      %s389 = sphi 0, %s373
      %s395 = sphi 0, %s397
      %s398 = sphi 0, %s395
      %s399 = sphi 0, %s398
      %s415 = sphi 0, %s399
      %s421 = sphi 0, %s423
      %s424 = sphi 0, %s421
      %s425 = sphi 0, %s424
      %s441 = sphi 0, %s425
      %s447 = sphi 0, %s449
      %s450 = sphi 0, %s447
      %s451 = sphi 0, %s450
      %s467 = sphi 0, %s451
      %s473 = sphi 0, %s475
      %s476 = sphi 0, %s473
      %s477 = sphi 0, %s476
      %s493 = sphi 0, %s477
      %s499 = sphi 0, %s501
      %s502 = sphi 0, %s499
      %s503 = sphi 0, %s502
      %s519 = sphi 0, %s503
      %s525 = sphi 0, %s527
      %s528 = sphi 0, %s525
      %s529 = sphi 0, %s528
      %s545 = sphi 0, %s529
      %s549 = sphi 0, %s549
      %s551 = sphi 0, %s549
      %s552 = sphi 0, %s551
      %s566 = sphi 0, %s552
      %s570 = sphi 0, %s570
      %s572 = sphi 0, %s570
      %s573 = sphi 0, %s572
      %s587 = sphi 0, %s573
      %s593 = sphi 0, %s595
      %s596 = sphi 0, %s593
      %s597 = sphi 0, %s596
      %s613 = sphi 0, %s597
    $region4: #{tpu_custom_call.1} parent=1 // loop_header_branch
      %64 = sbr.rel (%p62) target = $region8
    $region5: #{tpu_custom_call.1} parent=1 // loop_body
      %s66 = ssub.s32 %s61, 1
      %s67 = ssub.s32 %s61, 2
      %s74 = sadd.s32 1, %s69
      %p75 = scmp.ge.s32.totalorder %s74, 2
      %s76 = scalar_select %p75, 0, %s74
      %s77 = sadd.s32 1, %s68
      %s78 = scalar_select %p75, %s77, %s68
      %p79 = scmp.ge.s32.totalorder %s78, 2
      %s80 = scalar_select %p79, 0, %s78
      %s81 = ssub.s32 %s68, %s80
      %p82 = scmp.eq.s32.totalorder %s81, 0
      %s84 = sadd.s32 %s83, 1
      %s85 = scalar_select %p82, %s83, %s84
      %p88 = pneg %p82
      %p89 = scmp.eq.s32.totalorder %s61, 3
      %p90 = por %p88, %p89
      %p91 = scmp.ne.s32.totalorder %s83, %s86
      %p92 = scmp.eq.s32.totalorder %s61, 0
      %p93 = por %p91, %p92
      %p94 = scmp.ne.s32.totalorder %s83, %s86
      %p95 = scmp.eq.s32.totalorder %s66, 3
      %p96 = por %p94, %p95
      %p97 = scmp.ne.s32.totalorder %s86, %s87
      %p98 = scmp.eq.s32.totalorder %s66, 0
      %p99 = por %p97, %p98
      %p100 = scmp.ne.s32.totalorder %s86, %s87
      %p101 = scmp.eq.s32.totalorder %s67, 3
      %p102 = por %p100, %p101
      %p104 = scmp.ne.s32.totalorder %s87, %s103
      %p105 = scmp.eq.s32.totalorder %s67, 0
      %p106 = por %p104, %p105
      %s107 = ssub.s32 %s68, %s80
      %p108 = scmp.eq.s32.totalorder %s107, 0
      %s110 = sadd.s32 %s109, 1
      %s111 = scalar_select %p108, %s109, %s110
      %p114 = pneg %p108
      %p115 = scmp.eq.s32.totalorder %s61, 3
      %p116 = por %p114, %p115
      %p117 = scmp.ne.s32.totalorder %s109, %s112
      %p118 = scmp.eq.s32.totalorder %s61, 0
      %p119 = por %p117, %p118
      %p120 = scmp.ne.s32.totalorder %s109, %s112
      %p121 = scmp.eq.s32.totalorder %s66, 3
      %p122 = por %p120, %p121
      %p123 = scmp.ne.s32.totalorder %s112, %s113
      %p124 = scmp.eq.s32.totalorder %s66, 0
      %p125 = por %p123, %p124
      %p126 = scmp.ne.s32.totalorder %s112, %s113
      %p127 = scmp.eq.s32.totalorder %s67, 3
      %p128 = por %p126, %p127
      %p130 = scmp.ne.s32.totalorder %s113, %s129
      %p131 = scmp.eq.s32.totalorder %s67, 0
      %p132 = por %p130, %p131
      %s133 = ssub.s32 %s68, %s80
      %p134 = scmp.eq.s32.totalorder %s133, 0
      %s136 = sadd.s32 %s135, 1
      %s137 = scalar_select %p134, %s135, %s136
      %p140 = pneg %p134
      %p141 = scmp.eq.s32.totalorder %s61, 3
      %p142 = por %p140, %p141
      %p143 = scmp.ne.s32.totalorder %s135, %s138
      %p144 = scmp.eq.s32.totalorder %s61, 0
      %p145 = por %p143, %p144
      %p146 = scmp.ne.s32.totalorder %s135, %s138
      %p147 = scmp.eq.s32.totalorder %s66, 3
      %p148 = por %p146, %p147
      %p149 = scmp.ne.s32.totalorder %s138, %s139
      %p150 = scmp.eq.s32.totalorder %s66, 0
      %p151 = por %p149, %p150
      %p152 = scmp.ne.s32.totalorder %s138, %s139
      %p153 = scmp.eq.s32.totalorder %s67, 3
      %p154 = por %p152, %p153
      %p156 = scmp.ne.s32.totalorder %s139, %s155
      %p157 = scmp.eq.s32.totalorder %s67, 0
      %p158 = por %p156, %p157
      %s159 = ssub.s32 %s68, %s80
      %p160 = scmp.eq.s32.totalorder %s159, 0
      %s162 = sadd.s32 %s161, 1
      %s163 = scalar_select %p160, %s161, %s162
      %p166 = pneg %p160
      %p167 = scmp.eq.s32.totalorder %s61, 3
      %p168 = por %p166, %p167
      %p169 = scmp.ne.s32.totalorder %s161, %s164
      %p170 = scmp.eq.s32.totalorder %s61, 0
      %p171 = por %p169, %p170
      %p172 = scmp.ne.s32.totalorder %s161, %s164
      %p173 = scmp.eq.s32.totalorder %s66, 3
      %p174 = por %p172, %p173
      %p175 = scmp.ne.s32.totalorder %s164, %s165
      %p176 = scmp.eq.s32.totalorder %s66, 0
      %p177 = por %p175, %p176
      %p178 = scmp.ne.s32.totalorder %s164, %s165
      %p179 = scmp.eq.s32.totalorder %s67, 3
      %p180 = por %p178, %p179
      %p182 = scmp.ne.s32.totalorder %s165, %s181
      %p183 = scmp.eq.s32.totalorder %s67, 0
      %p184 = por %p182, %p183
      %s185 = ssub.s32 %s69, %s76
      %p186 = scmp.eq.s32.totalorder %s185, 0
      %s188 = sadd.s32 %s187, 1
      %s189 = scalar_select %p186, %s187, %s188
      %p192 = pneg %p186
      %p193 = scmp.eq.s32.totalorder %s61, 3
      %p194 = por %p192, %p193
      %p195 = scmp.ne.s32.totalorder %s187, %s190
      %p196 = scmp.eq.s32.totalorder %s61, 0
      %p197 = por %p195, %p196
      %p198 = scmp.ne.s32.totalorder %s187, %s190
      %p199 = scmp.eq.s32.totalorder %s66, 3
      %p200 = por %p198, %p199
      %p201 = scmp.ne.s32.totalorder %s190, %s191
      %p202 = scmp.eq.s32.totalorder %s66, 0
      %p203 = por %p201, %p202
      %p204 = scmp.ne.s32.totalorder %s190, %s191
      %p205 = scmp.eq.s32.totalorder %s67, 3
      %p206 = por %p204, %p205
      %p208 = scmp.ne.s32.totalorder %s191, %s207
      %p209 = scmp.eq.s32.totalorder %s67, 0
      %p210 = por %p208, %p209
      %s211 = ssub.s32 %s69, %s76
      %p212 = scmp.eq.s32.totalorder %s211, 0
      %s214 = sadd.s32 %s213, 1
      %s215 = scalar_select %p212, %s213, %s214
      %p218 = pneg %p212
      %p219 = scmp.eq.s32.totalorder %s61, 3
      %p220 = por %p218, %p219
      %p221 = scmp.ne.s32.totalorder %s213, %s216
      %p222 = scmp.eq.s32.totalorder %s61, 0
      %p223 = por %p221, %p222
      %p224 = scmp.ne.s32.totalorder %s213, %s216
      %p225 = scmp.eq.s32.totalorder %s66, 3
      %p226 = por %p224, %p225
      %p227 = scmp.ne.s32.totalorder %s216, %s217
      %p228 = scmp.eq.s32.totalorder %s66, 0
      %p229 = por %p227, %p228
      %p230 = scmp.ne.s32.totalorder %s216, %s217
      %p231 = scmp.eq.s32.totalorder %s67, 3
      %p232 = por %p230, %p231
      %p234 = scmp.ne.s32.totalorder %s217, %s233
      %p235 = scmp.eq.s32.totalorder %s67, 0
      %p236 = por %p234, %p235
      %s237 = ssub.s32 %s69, %s76
      %p238 = scmp.eq.s32.totalorder %s237, 0
      %s240 = sadd.s32 %s239, 1
      %s241 = scalar_select %p238, %s239, %s240
      %p244 = pneg %p238
      %p245 = scmp.eq.s32.totalorder %s61, 3
      %p246 = por %p244, %p245
      %p247 = scmp.ne.s32.totalorder %s239, %s242
      %p248 = scmp.eq.s32.totalorder %s61, 0
      %p249 = por %p247, %p248
      %p250 = scmp.ne.s32.totalorder %s239, %s242
      %p251 = scmp.eq.s32.totalorder %s66, 3
      %p252 = por %p250, %p251
      %p253 = scmp.ne.s32.totalorder %s242, %s243
      %p254 = scmp.eq.s32.totalorder %s66, 0
      %p255 = por %p253, %p254
      %p256 = scmp.ne.s32.totalorder %s242, %s243
      %p257 = scmp.eq.s32.totalorder %s67, 3
      %p258 = por %p256, %p257
      %p260 = scmp.ne.s32.totalorder %s243, %s259
      %p261 = scmp.eq.s32.totalorder %s67, 0
      %p262 = por %p260, %p261
      %s263 = ssub.s32 %s69, %s76
      %p264 = scmp.eq.s32.totalorder %s263, 0
      %s266 = sadd.s32 %s265, 1
      %s267 = scalar_select %p264, %s265, %s266
      %p270 = pneg %p264
      %p271 = scmp.eq.s32.totalorder %s61, 3
      %p272 = por %p270, %p271
      %p273 = scmp.ne.s32.totalorder %s265, %s268
      %p274 = scmp.eq.s32.totalorder %s61, 0
      %p275 = por %p273, %p274
      %p276 = scmp.ne.s32.totalorder %s265, %s268
      %p277 = scmp.eq.s32.totalorder %s66, 3
      %p278 = por %p276, %p277
      %p279 = scmp.ne.s32.totalorder %s268, %s269
      %p280 = scmp.eq.s32.totalorder %s66, 0
      %p281 = por %p279, %p280
      %p282 = scmp.ne.s32.totalorder %s268, %s269
      %p283 = scmp.eq.s32.totalorder %s67, 3
      %p284 = por %p282, %p283
      %p286 = scmp.ne.s32.totalorder %s269, %s285
      %p287 = scmp.eq.s32.totalorder %s67, 0
      %p288 = por %p286, %p287
      %s289 = ssub.s32 %s69, %s76
      %p290 = scmp.eq.s32.totalorder %s289, 0
      %s292 = sadd.s32 %s291, 1
      %s293 = scalar_select %p290, %s291, %s292
      %p296 = pneg %p290
      %p297 = scmp.eq.s32.totalorder %s61, 3
      %p298 = por %p296, %p297
      %p299 = scmp.ne.s32.totalorder %s291, %s294
      %p300 = scmp.eq.s32.totalorder %s61, 0
      %p301 = por %p299, %p300
      %p302 = scmp.ne.s32.totalorder %s291, %s294
      %p303 = scmp.eq.s32.totalorder %s66, 3
      %p304 = por %p302, %p303
      %p305 = scmp.ne.s32.totalorder %s294, %s295
      %p306 = scmp.eq.s32.totalorder %s66, 0
      %p307 = por %p305, %p306
      %p308 = scmp.ne.s32.totalorder %s294, %s295
      %p309 = scmp.eq.s32.totalorder %s67, 3
      %p310 = por %p308, %p309
      %p312 = scmp.ne.s32.totalorder %s295, %s311
      %p313 = scmp.eq.s32.totalorder %s67, 0
      %p314 = por %p312, %p313
      %s315 = ssub.s32 %s69, %s76
      %p316 = scmp.eq.s32.totalorder %s315, 0
      %s318 = sadd.s32 %s317, 1
      %s319 = scalar_select %p316, %s317, %s318
      %p322 = pneg %p316
      %p323 = scmp.eq.s32.totalorder %s61, 3
      %p324 = por %p322, %p323
      %p325 = scmp.ne.s32.totalorder %s317, %s320
      %p326 = scmp.eq.s32.totalorder %s61, 0
      %p327 = por %p325, %p326
      %p328 = scmp.ne.s32.totalorder %s317, %s320
      %p329 = scmp.eq.s32.totalorder %s66, 3
      %p330 = por %p328, %p329
      %p331 = scmp.ne.s32.totalorder %s320, %s321
      %p332 = scmp.eq.s32.totalorder %s66, 0
      %p333 = por %p331, %p332
      %p334 = scmp.ne.s32.totalorder %s320, %s321
      %p335 = scmp.eq.s32.totalorder %s67, 3
      %p336 = por %p334, %p335
      %p338 = scmp.ne.s32.totalorder %s321, %s337
      %p339 = scmp.eq.s32.totalorder %s67, 0
      %p340 = por %p338, %p339
      %s341 = ssub.s32 %s69, %s76
      %p342 = scmp.eq.s32.totalorder %s341, 0
      %s344 = sadd.s32 %s343, 1
      %s345 = scalar_select %p342, %s343, %s344
      %p348 = pneg %p342
      %p349 = scmp.eq.s32.totalorder %s61, 3
      %p350 = por %p348, %p349
      %p351 = scmp.ne.s32.totalorder %s343, %s346
      %p352 = scmp.eq.s32.totalorder %s61, 0
      %p353 = por %p351, %p352
      %p354 = scmp.ne.s32.totalorder %s343, %s346
      %p355 = scmp.eq.s32.totalorder %s66, 3
      %p356 = por %p354, %p355
      %p357 = scmp.ne.s32.totalorder %s346, %s347
      %p358 = scmp.eq.s32.totalorder %s66, 0
      %p359 = por %p357, %p358
      %p360 = scmp.ne.s32.totalorder %s346, %s347
      %p361 = scmp.eq.s32.totalorder %s67, 3
      %p362 = por %p360, %p361
      %p364 = scmp.ne.s32.totalorder %s347, %s363
      %p365 = scmp.eq.s32.totalorder %s67, 0
      %p366 = por %p364, %p365
      %s367 = ssub.s32 %s69, %s76
      %p368 = scmp.eq.s32.totalorder %s367, 0
      %s370 = sadd.s32 %s369, 1
      %s371 = scalar_select %p368, %s369, %s370
      %p374 = pneg %p368
      %p375 = scmp.eq.s32.totalorder %s61, 3
      %p376 = por %p374, %p375
      %p377 = scmp.ne.s32.totalorder %s369, %s372
      %p378 = scmp.eq.s32.totalorder %s61, 0
      %p379 = por %p377, %p378
      %p380 = scmp.ne.s32.totalorder %s369, %s372
      %p381 = scmp.eq.s32.totalorder %s66, 3
      %p382 = por %p380, %p381
      %p383 = scmp.ne.s32.totalorder %s372, %s373
      %p384 = scmp.eq.s32.totalorder %s66, 0
      %p385 = por %p383, %p384
      %p386 = scmp.ne.s32.totalorder %s372, %s373
      %p387 = scmp.eq.s32.totalorder %s67, 3
      %p388 = por %p386, %p387
      %p390 = scmp.ne.s32.totalorder %s373, %s389
      %p391 = scmp.eq.s32.totalorder %s67, 0
      %p392 = por %p390, %p391
      %s393 = ssub.s32 %s69, %s76
      %p394 = scmp.eq.s32.totalorder %s393, 0
      %s396 = sadd.s32 %s395, 1
      %s397 = scalar_select %p394, %s395, %s396
      %p400 = pneg %p394
      %p401 = scmp.eq.s32.totalorder %s61, 3
      %p402 = por %p400, %p401
      %p403 = scmp.ne.s32.totalorder %s395, %s398
      %p404 = scmp.eq.s32.totalorder %s61, 0
      %p405 = por %p403, %p404
      %p406 = scmp.ne.s32.totalorder %s395, %s398
      %p407 = scmp.eq.s32.totalorder %s66, 3
      %p408 = por %p406, %p407
      %p409 = scmp.ne.s32.totalorder %s398, %s399
      %p410 = scmp.eq.s32.totalorder %s66, 0
      %p411 = por %p409, %p410
      %p412 = scmp.ne.s32.totalorder %s398, %s399
      %p413 = scmp.eq.s32.totalorder %s67, 3
      %p414 = por %p412, %p413
      %p416 = scmp.ne.s32.totalorder %s399, %s415
      %p417 = scmp.eq.s32.totalorder %s67, 0
      %p418 = por %p416, %p417
      %s419 = ssub.s32 %s69, %s76
      %p420 = scmp.eq.s32.totalorder %s419, 0
      %s422 = sadd.s32 %s421, 1
      %s423 = scalar_select %p420, %s421, %s422
      %p426 = pneg %p420
      %p427 = scmp.eq.s32.totalorder %s61, 3
      %p428 = por %p426, %p427
      %p429 = scmp.ne.s32.totalorder %s421, %s424
      %p430 = scmp.eq.s32.totalorder %s61, 0
      %p431 = por %p429, %p430
      %p432 = scmp.ne.s32.totalorder %s421, %s424
      %p433 = scmp.eq.s32.totalorder %s66, 3
      %p434 = por %p432, %p433
      %p435 = scmp.ne.s32.totalorder %s424, %s425
      %p436 = scmp.eq.s32.totalorder %s66, 0
      %p437 = por %p435, %p436
      %p438 = scmp.ne.s32.totalorder %s424, %s425
      %p439 = scmp.eq.s32.totalorder %s67, 3
      %p440 = por %p438, %p439
      %p442 = scmp.ne.s32.totalorder %s425, %s441
      %p443 = scmp.eq.s32.totalorder %s67, 0
      %p444 = por %p442, %p443
      %s445 = ssub.s32 %s69, %s76
      %p446 = scmp.eq.s32.totalorder %s445, 0
      %s448 = sadd.s32 %s447, 1
      %s449 = scalar_select %p446, %s447, %s448
      %p452 = pneg %p446
      %p453 = scmp.eq.s32.totalorder %s61, 3
      %p454 = por %p452, %p453
      %p455 = scmp.ne.s32.totalorder %s447, %s450
      %p456 = scmp.eq.s32.totalorder %s61, 0
      %p457 = por %p455, %p456
      %p458 = scmp.ne.s32.totalorder %s447, %s450
      %p459 = scmp.eq.s32.totalorder %s66, 3
      %p460 = por %p458, %p459
      %p461 = scmp.ne.s32.totalorder %s450, %s451
      %p462 = scmp.eq.s32.totalorder %s66, 0
      %p463 = por %p461, %p462
      %p464 = scmp.ne.s32.totalorder %s450, %s451
      %p465 = scmp.eq.s32.totalorder %s67, 3
      %p466 = por %p464, %p465
      %p468 = scmp.ne.s32.totalorder %s451, %s467
      %p469 = scmp.eq.s32.totalorder %s67, 0
      %p470 = por %p468, %p469
      %s471 = ssub.s32 %s69, %s76
      %p472 = scmp.eq.s32.totalorder %s471, 0
      %s474 = sadd.s32 %s473, 1
      %s475 = scalar_select %p472, %s473, %s474
      %p478 = pneg %p472
      %p479 = scmp.eq.s32.totalorder %s61, 3
      %p480 = por %p478, %p479
      %p481 = scmp.ne.s32.totalorder %s473, %s476
      %p482 = scmp.eq.s32.totalorder %s61, 0
      %p483 = por %p481, %p482
      %p484 = scmp.ne.s32.totalorder %s473, %s476
      %p485 = scmp.eq.s32.totalorder %s66, 3
      %p486 = por %p484, %p485
      %p487 = scmp.ne.s32.totalorder %s476, %s477
      %p488 = scmp.eq.s32.totalorder %s66, 0
      %p489 = por %p487, %p488
      %p490 = scmp.ne.s32.totalorder %s476, %s477
      %p491 = scmp.eq.s32.totalorder %s67, 3
      %p492 = por %p490, %p491
      %p494 = scmp.ne.s32.totalorder %s477, %s493
      %p495 = scmp.eq.s32.totalorder %s67, 0
      %p496 = por %p494, %p495
      %s497 = ssub.s32 %s69, %s76
      %p498 = scmp.eq.s32.totalorder %s497, 0
      %s500 = sadd.s32 %s499, 1
      %s501 = scalar_select %p498, %s499, %s500
      %p504 = pneg %p498
      %p505 = scmp.eq.s32.totalorder %s61, 3
      %p506 = por %p504, %p505
      %p507 = scmp.ne.s32.totalorder %s499, %s502
      %p508 = scmp.eq.s32.totalorder %s61, 0
      %p509 = por %p507, %p508
      %p510 = scmp.ne.s32.totalorder %s499, %s502
      %p511 = scmp.eq.s32.totalorder %s66, 3
      %p512 = por %p510, %p511
      %p513 = scmp.ne.s32.totalorder %s502, %s503
      %p514 = scmp.eq.s32.totalorder %s66, 0
      %p515 = por %p513, %p514
      %p516 = scmp.ne.s32.totalorder %s502, %s503
      %p517 = scmp.eq.s32.totalorder %s67, 3
      %p518 = por %p516, %p517
      %p520 = scmp.ne.s32.totalorder %s503, %s519
      %p521 = scmp.eq.s32.totalorder %s67, 0
      %p522 = por %p520, %p521
      %s523 = ssub.s32 %s69, %s76
      %p524 = scmp.eq.s32.totalorder %s523, 0
      %s526 = sadd.s32 %s525, 1
      %s527 = scalar_select %p524, %s525, %s526
      %p530 = pneg %p524
      %p531 = scmp.eq.s32.totalorder %s61, 3
      %p532 = por %p530, %p531
      %p533 = scmp.ne.s32.totalorder %s525, %s528
      %p534 = scmp.eq.s32.totalorder %s61, 0
      %p535 = por %p533, %p534
      %p536 = scmp.ne.s32.totalorder %s525, %s528
      %p537 = scmp.eq.s32.totalorder %s66, 3
      %p538 = por %p536, %p537
      %p539 = scmp.ne.s32.totalorder %s528, %s529
      %p540 = scmp.eq.s32.totalorder %s66, 0
      %p541 = por %p539, %p540
      %p542 = scmp.ne.s32.totalorder %s528, %s529
      %p543 = scmp.eq.s32.totalorder %s67, 3
      %p544 = por %p542, %p543
      %p546 = scmp.ne.s32.totalorder %s529, %s545
      %p547 = scmp.eq.s32.totalorder %s67, 0
      %p548 = por %p546, %p547
      %s550 = sadd.s32 %s549, 1
      %p553 = scmp.eq.s32.totalorder %s61, 3
      %p554 = scmp.ne.s32.totalorder %s549, %s551
      %p555 = scmp.eq.s32.totalorder %s61, 0
      %p556 = por %p554, %p555
      %p557 = scmp.ne.s32.totalorder %s549, %s551
      %p558 = scmp.eq.s32.totalorder %s66, 3
      %p559 = por %p557, %p558
      %p560 = scmp.ne.s32.totalorder %s551, %s552
      %p561 = scmp.eq.s32.totalorder %s66, 0
      %p562 = por %p560, %p561
      %p563 = scmp.ne.s32.totalorder %s551, %s552
      %p564 = scmp.eq.s32.totalorder %s67, 3
      %p565 = por %p563, %p564
      %p567 = scmp.ne.s32.totalorder %s552, %s566
      %p568 = scmp.eq.s32.totalorder %s67, 0
      %p569 = por %p567, %p568
      %s571 = sadd.s32 %s570, 1
      %p574 = scmp.eq.s32.totalorder %s61, 3
      %p575 = scmp.ne.s32.totalorder %s570, %s572
      %p576 = scmp.eq.s32.totalorder %s61, 0
      %p577 = por %p575, %p576
      %p578 = scmp.ne.s32.totalorder %s570, %s572
      %p579 = scmp.eq.s32.totalorder %s66, 3
      %p580 = por %p578, %p579
      %p581 = scmp.ne.s32.totalorder %s572, %s573
      %p582 = scmp.eq.s32.totalorder %s66, 0
      %p583 = por %p581, %p582
      %p584 = scmp.ne.s32.totalorder %s572, %s573
      %p585 = scmp.eq.s32.totalorder %s67, 3
      %p586 = por %p584, %p585
      %p588 = scmp.ne.s32.totalorder %s573, %s587
      %p589 = scmp.eq.s32.totalorder %s67, 0
      %p590 = por %p588, %p589
      %s591 = ssub.s32 %s68, %s80
      %p592 = scmp.eq.s32.totalorder %s591, 0
      %s594 = sadd.s32 %s593, 1
      %s595 = scalar_select %p592, %s593, %s594
      %p598 = pneg %p592
      %p599 = scmp.eq.s32.totalorder %s61, 3
      %p600 = por %p598, %p599
      %p601 = scmp.ne.s32.totalorder %s593, %s596
      %p602 = scmp.eq.s32.totalorder %s61, 0
      %p603 = por %p601, %p602
      %p604 = scmp.ne.s32.totalorder %s593, %s596
      %p605 = scmp.eq.s32.totalorder %s66, 3
      %p606 = por %p604, %p605
      %p607 = scmp.ne.s32.totalorder %s596, %s597
      %p608 = scmp.eq.s32.totalorder %s66, 0
      %p609 = por %p607, %p608
      %p610 = scmp.ne.s32.totalorder %s596, %s597
      %p611 = scmp.eq.s32.totalorder %s67, 3
      %p612 = por %p610, %p611
      %p614 = scmp.ne.s32.totalorder %s597, %s613
      %p615 = scmp.eq.s32.totalorder %s67, 0
      %p616 = por %p614, %p615
      %p617 = scmp.le.s32.totalorder 1, %s61
      %p618 = scmp.lt.s32.totalorder %s61, 5
      %p619 = pnand %p617, %p618
      %p620 = pneg %p619
      // Predicated region
      $region9: #{tpu_custom_call.1} parent=5 // pred_check
        _
      $region10: #{tpu_custom_call.1} parent=5 // pred_check_branch
        %622 = sbr.rel (%p619) target = $region12
      $region11: #{tpu_custom_call.1} parent=5 // pred_region
        %s623 = ssub.s32 %s61, 1
        // Predicated region
        $region13: #{tpu_custom_call.1} parent=11 // pred_check
          %p624 = pneg %p562
        $region14: #{tpu_custom_call.1} parent=11 // pred_check_branch
          %626 = sbr.rel (%p624) target = $region16
        $region15: #{tpu_custom_call.1} parent=11 // pred_region
          %s628 = ssub.s32 32, 32
          %629 = vsyncadd [#allocation5], %s628
          %632 = dma.hbm_to_smem %s18, 32, [#allocation32], [#allocation5]
        $region16: #{tpu_custom_call.1} parent=11 // pred_fallthru
          _
        // Predicated region
        $region17: #{tpu_custom_call.1} parent=11 // pred_check
          %p633 = pneg %p583
        $region18: #{tpu_custom_call.1} parent=11 // pred_check_branch
          %635 = sbr.rel (%p633) target = $region20
        $region19: #{tpu_custom_call.1} parent=11 // pred_region
          %s637 = ssub.s32 16, 16
          %638 = vsyncadd [#allocation34], %s637
          %641 = dma.hbm_to_smem %s19, 16, [#allocation33], [#allocation34]
        $region20: #{tpu_custom_call.1} parent=11 // pred_fallthru
          _
      $region12: #{tpu_custom_call.1} parent=5 // pred_fallthru
        _
      %p642 = scmp.lt.s32.totalorder %s61, 4
      // Predicated region
      $region21: #{tpu_custom_call.1} parent=5 // pred_check
        %p643 = pneg %p642
      $region22: #{tpu_custom_call.1} parent=5 // pred_check_branch
        %645 = sbr.rel (%p643) target = $region24
      $region23: #{tpu_custom_call.1} parent=5 // pred_region
        // Predicated region
        $region25: #{tpu_custom_call.1} parent=23 // pred_check
          %p646 = pneg %p93
        $region26: #{tpu_custom_call.1} parent=23 // pred_check_branch
          %648 = sbr.rel (%p646) target = $region28
        $region27: #{tpu_custom_call.1} parent=23 // pred_region
          %s649 = sand.u32 %s83, 1
          %s650 = scalar_lea.sflag [#allocation3], %s649
          %s651 = sand.u32 %s83, 1
          %s652 = smul.addr %s651, 8
          %s653 = scalar_lea.vmem [#allocation2], %s652
          %s655 = ssub.s32 128, 128
          %656 = vsyncadd %s650, %s655
          %s657 = smul.addr %s68, 128
          %s658 = scalar_lea.hbm %s0, %s657
          %s660 = sshll.u32 %s653, 4
          %s661 = int_to_ptr.vmem [resolvable:$true] %s660
          %663 = dma.hbm_to_vmem [thread:$0]  %s658, 128, %s661, %s650
        $region28: #{tpu_custom_call.1} parent=23 // pred_fallthru
          _
        // Predicated region
        $region29: #{tpu_custom_call.1} parent=23 // pred_check
          %p664 = pneg %p119
        $region30: #{tpu_custom_call.1} parent=23 // pred_check_branch
          %666 = sbr.rel (%p664) target = $region32
        $region31: #{tpu_custom_call.1} parent=23 // pred_region
          %s667 = sand.u32 %s61, 1
          %s668 = scalar_lea.sflag [#allocation7], %s667
          %s669 = sand.u32 %s109, 1
          %s670 = smul.addr %s669, 16
          %s671 = scalar_lea.vmem [#allocation6], %s670
          %s673 = ssub.s32 256, 256
          %674 = vsyncadd %s668, %s673
          %s675 = smul.addr %s68, 2
          %s676 = smul.addr %s675, 128
          %s677 = scalar_lea.hbm %s1, %s676
          %s678 = sshll.u32 %s671, 4
          %s679 = int_to_ptr.vmem [resolvable:$true] %s678
          %684 = dma.hbm_to_vmem [thread:$0]  %s677, 256, %s679, %s668, 128, 128, 8
        $region32: #{tpu_custom_call.1} parent=23 // pred_fallthru
          _
        // Predicated region
        $region33: #{tpu_custom_call.1} parent=23 // pred_check
          %p685 = pneg %p145
        $region34: #{tpu_custom_call.1} parent=23 // pred_check_branch
          %687 = sbr.rel (%p685) target = $region36
        $region35: #{tpu_custom_call.1} parent=23 // pred_region
          %s688 = sand.u32 %s61, 1
          %s689 = scalar_lea.sflag [#allocation7], %s688
          %s690 = sand.u32 %s135, 1
          %s691 = scalar_lea.vmem [#allocation8], %s690
          %s693 = ssub.s32 16, 16
          %694 = vsyncadd %s689, %s693
          %s695 = smul.addr %s68, 16
          %s696 = scalar_lea.hbm %s2, %s695
          %s698 = sshll.u32 %s691, 4
          %s699 = int_to_ptr.vmem [resolvable:$true] %s698
          %701 = dma.hbm_to_vmem [thread:$0]  %s696, 16, %s699, %s689
        $region36: #{tpu_custom_call.1} parent=23 // pred_fallthru
          _
        // Predicated region
        $region37: #{tpu_custom_call.1} parent=23 // pred_check
          %p702 = pneg %p171
        $region38: #{tpu_custom_call.1} parent=23 // pred_check_branch
          %704 = sbr.rel (%p702) target = $region40
        $region39: #{tpu_custom_call.1} parent=23 // pred_region
          %s705 = sand.u32 %s61, 1
          %s706 = scalar_lea.sflag [#allocation10], %s705
          %s707 = sand.u32 %s161, 1
          %s708 = scalar_lea.vmem [#allocation9], %s707
          %s710 = ssub.s32 16, 16
          %711 = vsyncadd %s706, %s710
          %s712 = smul.addr %s68, 16
          %s713 = scalar_lea.hbm %s3, %s712
          %s715 = sshll.u32 %s708, 4
          %s716 = int_to_ptr.vmem [resolvable:$true] %s715
          %718 = dma.hbm_to_vmem [thread:$0]  %s713, 16, %s716, %s706
        $region40: #{tpu_custom_call.1} parent=23 // pred_fallthru
          _
        // Predicated region
        $region41: #{tpu_custom_call.1} parent=23 // pred_check
          %p719 = pneg %p197
        $region42: #{tpu_custom_call.1} parent=23 // pred_check_branch
          %721 = sbr.rel (%p719) target = $region44
        $region43: #{tpu_custom_call.1} parent=23 // pred_region
          %s722 = sand.u32 %s61, 1
          %s723 = scalar_lea.sflag [#allocation10], %s722
          %s724 = sand.u32 %s187, 1
          %s725 = smul.addr %s724, 16
          %s726 = scalar_lea.vmem [#allocation11], %s725
          %s728 = ssub.s32 256, 256
          %729 = vsyncadd %s723, %s728
          %s730 = smul.addr %s69, 4
          %s731 = smul.addr %s730, 64
          %s732 = scalar_lea.hbm %s4, %s731
          %s733 = sshll.u32 %s726, 4
          %s734 = int_to_ptr.vmem [resolvable:$true] %s733
          %739 = dma.hbm_to_vmem [thread:$0]  %s732, 256, %s734, %s723, 64, 64, 4
        $region44: #{tpu_custom_call.1} parent=23 // pred_fallthru
          _
        // Predicated region
        $region45: #{tpu_custom_call.1} parent=23 // pred_check
          %p740 = pneg %p223
        $region46: #{tpu_custom_call.1} parent=23 // pred_check_branch
          %742 = sbr.rel (%p740) target = $region48
        $region47: #{tpu_custom_call.1} parent=23 // pred_region
          %s743 = sand.u32 %s61, 1
          %s744 = scalar_lea.sflag [#allocation13], %s743
          %s745 = sand.u32 %s213, 1
          %s746 = scalar_lea.vmem [#allocation12], %s745
          %s748 = ssub.s32 16, 16
          %749 = vsyncadd %s744, %s748
          %s750 = smul.addr %s69, 16
          %s751 = scalar_lea.hbm %s5, %s750
          %s753 = sshll.u32 %s746, 4
          %s754 = int_to_ptr.vmem [resolvable:$true] %s753
          %756 = dma.hbm_to_vmem [thread:$0]  %s751, 16, %s754, %s744
        $region48: #{tpu_custom_call.1} parent=23 // pred_fallthru
          _
        // Predicated region
        $region49: #{tpu_custom_call.1} parent=23 // pred_check
          %p757 = pneg %p249
        $region50: #{tpu_custom_call.1} parent=23 // pred_check_branch
          %759 = sbr.rel (%p757) target = $region52
        $region51: #{tpu_custom_call.1} parent=23 // pred_region
          %s760 = sand.u32 %s61, 1
          %s761 = scalar_lea.sflag [#allocation13], %s760
          %s762 = sand.u32 %s239, 1
          %s763 = smul.addr %s762, 16
          %s764 = scalar_lea.vmem [#allocation14], %s763
          %s766 = ssub.s32 256, 256
          %767 = vsyncadd %s761, %s766
          %s768 = smul.addr %s69, 4
          %s769 = smul.addr %s768, 64
          %s770 = scalar_lea.hbm %s6, %s769
          %s771 = sshll.u32 %s764, 4
          %s772 = int_to_ptr.vmem [resolvable:$true] %s771
          %777 = dma.hbm_to_vmem [thread:$0]  %s770, 256, %s772, %s761, 64, 64, 4
        $region52: #{tpu_custom_call.1} parent=23 // pred_fallthru
          _
        // Predicated region
        $region53: #{tpu_custom_call.1} parent=23 // pred_check
          %p778 = pneg %p275
        $region54: #{tpu_custom_call.1} parent=23 // pred_check_branch
          %780 = sbr.rel (%p778) target = $region56
        $region55: #{tpu_custom_call.1} parent=23 // pred_region
          %s781 = sand.u32 %s61, 1
          %s782 = scalar_lea.sflag [#allocation16], %s781
          %s783 = sand.u32 %s265, 1
          %s784 = scalar_lea.vmem [#allocation15], %s783
          %s786 = ssub.s32 16, 16
          %787 = vsyncadd %s782, %s786
          %s788 = smul.addr %s69, 16
          %s789 = scalar_lea.hbm %s7, %s788
          %s791 = sshll.u32 %s784, 4
          %s792 = int_to_ptr.vmem [resolvable:$true] %s791
          %794 = dma.hbm_to_vmem [thread:$0]  %s789, 16, %s792, %s782
        $region56: #{tpu_custom_call.1} parent=23 // pred_fallthru
          _
        // Predicated region
        $region57: #{tpu_custom_call.1} parent=23 // pred_check
          %p795 = pneg %p301
        $region58: #{tpu_custom_call.1} parent=23 // pred_check_branch
          %797 = sbr.rel (%p795) target = $region60
        $region59: #{tpu_custom_call.1} parent=23 // pred_region
          %s798 = sand.u32 %s61, 1
          %s799 = scalar_lea.sflag [#allocation16], %s798
          %s800 = sand.u32 %s291, 1
          %s801 = smul.addr %s800, 16
          %s802 = scalar_lea.vmem [#allocation17], %s801
          %s804 = ssub.s32 256, 256
          %805 = vsyncadd %s799, %s804
          %s806 = smul.addr %s69, 4
          %s807 = smul.addr %s806, 64
          %s808 = scalar_lea.hbm %s8, %s807
          %s809 = sshll.u32 %s802, 4
          %s810 = int_to_ptr.vmem [resolvable:$true] %s809
          %815 = dma.hbm_to_vmem [thread:$0]  %s808, 256, %s810, %s799, 64, 64, 4
        $region60: #{tpu_custom_call.1} parent=23 // pred_fallthru
          _
        // Predicated region
        $region61: #{tpu_custom_call.1} parent=23 // pred_check
          %p816 = pneg %p327
        $region62: #{tpu_custom_call.1} parent=23 // pred_check_branch
          %818 = sbr.rel (%p816) target = $region64
        $region63: #{tpu_custom_call.1} parent=23 // pred_region
          %s819 = sand.u32 %s61, 1
          %s820 = scalar_lea.sflag [#allocation19], %s819
          %s821 = sand.u32 %s317, 1
          %s822 = scalar_lea.vmem [#allocation18], %s821
          %s824 = ssub.s32 16, 16
          %825 = vsyncadd %s820, %s824
          %s826 = smul.addr %s69, 16
          %s827 = scalar_lea.hbm %s9, %s826
          %s829 = sshll.u32 %s822, 4
          %s830 = int_to_ptr.vmem [resolvable:$true] %s829
          %832 = dma.hbm_to_vmem [thread:$0]  %s827, 16, %s830, %s820
        $region64: #{tpu_custom_call.1} parent=23 // pred_fallthru
          _
        // Predicated region
        $region65: #{tpu_custom_call.1} parent=23 // pred_check
          %p833 = pneg %p353
        $region66: #{tpu_custom_call.1} parent=23 // pred_check_branch
          %835 = sbr.rel (%p833) target = $region68
        $region67: #{tpu_custom_call.1} parent=23 // pred_region
          %s836 = sand.u32 %s61, 1
          %s837 = scalar_lea.sflag [#allocation19], %s836
          %s838 = sand.u32 %s343, 1
          %s839 = smul.addr %s838, 16
          %s840 = scalar_lea.vmem [#allocation20], %s839
          %s842 = ssub.s32 256, 256
          %843 = vsyncadd %s837, %s842
          %s844 = smul.addr %s69, 4
          %s845 = smul.addr %s844, 64
          %s846 = scalar_lea.hbm %s10, %s845
          %s847 = sshll.u32 %s840, 4
          %s848 = int_to_ptr.vmem [resolvable:$true] %s847
          %853 = dma.hbm_to_vmem [thread:$0]  %s846, 256, %s848, %s837, 64, 64, 4
        $region68: #{tpu_custom_call.1} parent=23 // pred_fallthru
          _
        // Predicated region
        $region69: #{tpu_custom_call.1} parent=23 // pred_check
          %p854 = pneg %p379
        $region70: #{tpu_custom_call.1} parent=23 // pred_check_branch
          %856 = sbr.rel (%p854) target = $region72
        $region71: #{tpu_custom_call.1} parent=23 // pred_region
          %s857 = sand.u32 %s61, 1
          %s858 = scalar_lea.sflag [#allocation22], %s857
          %s859 = sand.u32 %s369, 1
          %s860 = scalar_lea.vmem [#allocation21], %s859
          %s862 = ssub.s32 16, 16
          %863 = vsyncadd %s858, %s862
          %s864 = smul.addr %s69, 16
          %s865 = scalar_lea.hbm %s11, %s864
          %s867 = sshll.u32 %s860, 4
          %s868 = int_to_ptr.vmem [resolvable:$true] %s867
          %870 = dma.hbm_to_vmem [thread:$0]  %s865, 16, %s868, %s858
        $region72: #{tpu_custom_call.1} parent=23 // pred_fallthru
          _
        // Predicated region
        $region73: #{tpu_custom_call.1} parent=23 // pred_check
          %p871 = pneg %p405
        $region74: #{tpu_custom_call.1} parent=23 // pred_check_branch
          %873 = sbr.rel (%p871) target = $region76
        $region75: #{tpu_custom_call.1} parent=23 // pred_region
          %s874 = sand.u32 %s61, 1
          %s875 = scalar_lea.sflag [#allocation22], %s874
          %s876 = sand.u32 %s395, 1
          %s877 = smul.addr %s876, 16
          %s878 = scalar_lea.vmem [#allocation23], %s877
          %s880 = ssub.s32 256, 256
          %881 = vsyncadd %s875, %s880
          %s882 = smul.addr %s69, 4
          %s883 = smul.addr %s882, 64
          %s884 = scalar_lea.hbm %s12, %s883
          %s885 = sshll.u32 %s878, 4
          %s886 = int_to_ptr.vmem [resolvable:$true] %s885
          %891 = dma.hbm_to_vmem [thread:$0]  %s884, 256, %s886, %s875, 64, 64, 4
        $region76: #{tpu_custom_call.1} parent=23 // pred_fallthru
          _
        // Predicated region
        $region77: #{tpu_custom_call.1} parent=23 // pred_check
          %p892 = pneg %p431
        $region78: #{tpu_custom_call.1} parent=23 // pred_check_branch
          %894 = sbr.rel (%p892) target = $region80
        $region79: #{tpu_custom_call.1} parent=23 // pred_region
          %s895 = sand.u32 %s61, 1
          %s896 = scalar_lea.sflag [#allocation25], %s895
          %s897 = sand.u32 %s421, 1
          %s898 = scalar_lea.vmem [#allocation24], %s897
          %s900 = ssub.s32 16, 16
          %901 = vsyncadd %s896, %s900
          %s902 = smul.addr %s69, 16
          %s903 = scalar_lea.hbm %s13, %s902
          %s905 = sshll.u32 %s898, 4
          %s906 = int_to_ptr.vmem [resolvable:$true] %s905
          %908 = dma.hbm_to_vmem [thread:$0]  %s903, 16, %s906, %s896
        $region80: #{tpu_custom_call.1} parent=23 // pred_fallthru
          _
        // Predicated region
        $region81: #{tpu_custom_call.1} parent=23 // pred_check
          %p909 = pneg %p457
        $region82: #{tpu_custom_call.1} parent=23 // pred_check_branch
          %911 = sbr.rel (%p909) target = $region84
        $region83: #{tpu_custom_call.1} parent=23 // pred_region
          %s912 = sand.u32 %s61, 1
          %s913 = scalar_lea.sflag [#allocation25], %s912
          %s914 = sand.u32 %s447, 1
          %s915 = smul.addr %s914, 16
          %s916 = scalar_lea.vmem [#allocation26], %s915
          %s918 = ssub.s32 256, 256
          %919 = vsyncadd %s913, %s918
          %s920 = smul.addr %s69, 4
          %s921 = smul.addr %s920, 64
          %s922 = scalar_lea.hbm %s14, %s921
          %s923 = sshll.u32 %s916, 4
          %s924 = int_to_ptr.vmem [resolvable:$true] %s923
          %929 = dma.hbm_to_vmem [thread:$0]  %s922, 256, %s924, %s913, 64, 64, 4
        $region84: #{tpu_custom_call.1} parent=23 // pred_fallthru
          _
        // Predicated region
        $region85: #{tpu_custom_call.1} parent=23 // pred_check
          %p930 = pneg %p483
        $region86: #{tpu_custom_call.1} parent=23 // pred_check_branch
          %932 = sbr.rel (%p930) target = $region88
        $region87: #{tpu_custom_call.1} parent=23 // pred_region
          %s933 = sand.u32 %s61, 1
          %s934 = scalar_lea.sflag [#allocation28], %s933
          %s935 = sand.u32 %s473, 1
          %s936 = scalar_lea.vmem [#allocation27], %s935
          %s938 = ssub.s32 16, 16
          %939 = vsyncadd %s934, %s938
          %s940 = smul.addr %s69, 16
          %s941 = scalar_lea.hbm %s15, %s940
          %s943 = sshll.u32 %s936, 4
          %s944 = int_to_ptr.vmem [resolvable:$true] %s943
          %946 = dma.hbm_to_vmem [thread:$0]  %s941, 16, %s944, %s934
        $region88: #{tpu_custom_call.1} parent=23 // pred_fallthru
          _
        // Predicated region
        $region89: #{tpu_custom_call.1} parent=23 // pred_check
          %p947 = pneg %p509
        $region90: #{tpu_custom_call.1} parent=23 // pred_check_branch
          %949 = sbr.rel (%p947) target = $region92
        $region91: #{tpu_custom_call.1} parent=23 // pred_region
          %s950 = sand.u32 %s61, 1
          %s951 = scalar_lea.sflag [#allocation28], %s950
          %s952 = sand.u32 %s499, 1
          %s953 = smul.addr %s952, 32
          %s954 = scalar_lea.vmem [#allocation29], %s953
          %s956 = ssub.s32 512, 512
          %957 = vsyncadd %s951, %s956
          %s958 = smul.addr %s69, 8
          %s959 = smul.addr %s958, 64
          %s960 = scalar_lea.hbm %s16, %s959
          %s961 = sshll.u32 %s954, 4
          %s962 = int_to_ptr.vmem [resolvable:$true] %s961
          %967 = dma.hbm_to_vmem [thread:$0]  %s960, 512, %s962, %s951, 64, 64, 4
        $region92: #{tpu_custom_call.1} parent=23 // pred_fallthru
          _
        // Predicated region
        $region93: #{tpu_custom_call.1} parent=23 // pred_check
          %p968 = pneg %p535
        $region94: #{tpu_custom_call.1} parent=23 // pred_check_branch
          %970 = sbr.rel (%p968) target = $region96
        $region95: #{tpu_custom_call.1} parent=23 // pred_region
          %s971 = sand.u32 %s525, 1
          %s972 = scalar_lea.sflag [#allocation31], %s971
          %s973 = sand.u32 %s525, 1
          %s974 = scalar_lea.vmem [#allocation30], %s973
          %s976 = ssub.s32 16, 16
          %977 = vsyncadd %s972, %s976
          %s978 = smul.addr %s69, 16
          %s979 = scalar_lea.hbm %s17, %s978
          %s981 = sshll.u32 %s974, 4
          %s982 = int_to_ptr.vmem [resolvable:$true] %s981
          %984 = dma.hbm_to_vmem [thread:$0]  %s979, 16, %s982, %s972
        $region96: #{tpu_custom_call.1} parent=23 // pred_fallthru
          _
      $region24: #{tpu_custom_call.1} parent=5 // pred_fallthru
        _
      %p985 = scmp.le.s32.totalorder 1, %s61
      %p986 = scmp.lt.s32.totalorder %s61, 5
      %p987 = pnand %p985, %p986
      %p988 = pneg %p987
      // Predicated region
      $region97: #{tpu_custom_call.1} parent=5 // pred_check
        _
      $region98: #{tpu_custom_call.1} parent=5 // pred_check_branch
        %990 = sbr.rel (%p987) target = $region100
      $region99: #{tpu_custom_call.1} parent=5 // pred_region
        %s991 = ssub.s32 %s61, 1
        %s992 = sand.u32 %s86, 1
        %s993 = scalar_lea.sflag [#allocation3], %s992
        %s994 = sand.u32 %s86, 1
        %s995 = smul.addr %s994, 8
        %s996 = scalar_lea.vmem [#allocation2], %s995
        // Predicated region
        $region101: #{tpu_custom_call.1} parent=99 // pred_check
          %p997 = pneg %p99
        $region102: #{tpu_custom_call.1} parent=99 // pred_check_branch
          %999 = sbr.rel (%p997) target = $region104
        $region103: #{tpu_custom_call.1} parent=99 // pred_region
          %1000 = dma.done %s993, 128
        $region104: #{tpu_custom_call.1} parent=99 // pred_fallthru
          _
        %s1001 = sand.u32 %s66, 1
        %s1002 = scalar_lea.sflag [#allocation7], %s1001
        %s1003 = sand.u32 %s112, 1
        %s1004 = smul.addr %s1003, 16
        %s1005 = scalar_lea.vmem [#allocation6], %s1004
        // Predicated region
        $region105: #{tpu_custom_call.1} parent=99 // pred_check
          %p1006 = pneg %p125
        $region106: #{tpu_custom_call.1} parent=99 // pred_check_branch
          %1008 = sbr.rel (%p1006) target = $region108
        $region107: #{tpu_custom_call.1} parent=99 // pred_region
          %1009 = dma.done %s1002, 256
        $region108: #{tpu_custom_call.1} parent=99 // pred_fallthru
          _
        %s1010 = sand.u32 %s66, 1
        %s1011 = scalar_lea.sflag [#allocation7], %s1010
        %s1012 = sand.u32 %s138, 1
        %s1013 = scalar_lea.vmem [#allocation8], %s1012
        // Predicated region
        $region109: #{tpu_custom_call.1} parent=99 // pred_check
          %p1014 = pneg %p151
        $region110: #{tpu_custom_call.1} parent=99 // pred_check_branch
          %1016 = sbr.rel (%p1014) target = $region112
        $region111: #{tpu_custom_call.1} parent=99 // pred_region
          %1017 = dma.done %s1011, 16
        $region112: #{tpu_custom_call.1} parent=99 // pred_fallthru
          _
        %s1018 = sand.u32 %s66, 1
        %s1019 = scalar_lea.sflag [#allocation10], %s1018
        %s1020 = sand.u32 %s164, 1
        %s1021 = scalar_lea.vmem [#allocation9], %s1020
        // Predicated region
        $region113: #{tpu_custom_call.1} parent=99 // pred_check
          %p1022 = pneg %p177
        $region114: #{tpu_custom_call.1} parent=99 // pred_check_branch
          %1024 = sbr.rel (%p1022) target = $region116
        $region115: #{tpu_custom_call.1} parent=99 // pred_region
          %1025 = dma.done %s1019, 16
        $region116: #{tpu_custom_call.1} parent=99 // pred_fallthru
          _
        %s1026 = sand.u32 %s66, 1
        %s1027 = scalar_lea.sflag [#allocation10], %s1026
        %s1028 = sand.u32 %s190, 1
        %s1029 = smul.addr %s1028, 16
        %s1030 = scalar_lea.vmem [#allocation11], %s1029
        // Predicated region
        $region117: #{tpu_custom_call.1} parent=99 // pred_check
          %p1031 = pneg %p203
        $region118: #{tpu_custom_call.1} parent=99 // pred_check_branch
          %1033 = sbr.rel (%p1031) target = $region120
        $region119: #{tpu_custom_call.1} parent=99 // pred_region
          %1034 = dma.done %s1027, 256
        $region120: #{tpu_custom_call.1} parent=99 // pred_fallthru
          _
        %s1035 = sand.u32 %s66, 1
        %s1036 = scalar_lea.sflag [#allocation13], %s1035
        %s1037 = sand.u32 %s216, 1
        %s1038 = scalar_lea.vmem [#allocation12], %s1037
        // Predicated region
        $region121: #{tpu_custom_call.1} parent=99 // pred_check
          %p1039 = pneg %p229
        $region122: #{tpu_custom_call.1} parent=99 // pred_check_branch
          %1041 = sbr.rel (%p1039) target = $region124
        $region123: #{tpu_custom_call.1} parent=99 // pred_region
          %1042 = dma.done %s1036, 16
        $region124: #{tpu_custom_call.1} parent=99 // pred_fallthru
          _
        %s1043 = sand.u32 %s66, 1
        %s1044 = scalar_lea.sflag [#allocation13], %s1043
        %s1045 = sand.u32 %s242, 1
        %s1046 = smul.addr %s1045, 16
        %s1047 = scalar_lea.vmem [#allocation14], %s1046
        // Predicated region
        $region125: #{tpu_custom_call.1} parent=99 // pred_check
          %p1048 = pneg %p255
        $region126: #{tpu_custom_call.1} parent=99 // pred_check_branch
          %1050 = sbr.rel (%p1048) target = $region128
        $region127: #{tpu_custom_call.1} parent=99 // pred_region
          %1051 = dma.done %s1044, 256
        $region128: #{tpu_custom_call.1} parent=99 // pred_fallthru
          _
        %s1052 = sand.u32 %s66, 1
        %s1053 = scalar_lea.sflag [#allocation16], %s1052
        %s1054 = sand.u32 %s268, 1
        %s1055 = scalar_lea.vmem [#allocation15], %s1054
        // Predicated region
        $region129: #{tpu_custom_call.1} parent=99 // pred_check
          %p1056 = pneg %p281
        $region130: #{tpu_custom_call.1} parent=99 // pred_check_branch
          %1058 = sbr.rel (%p1056) target = $region132
        $region131: #{tpu_custom_call.1} parent=99 // pred_region
          %1059 = dma.done %s1053, 16
        $region132: #{tpu_custom_call.1} parent=99 // pred_fallthru
          _
        %s1060 = sand.u32 %s66, 1
        %s1061 = scalar_lea.sflag [#allocation16], %s1060
        %s1062 = sand.u32 %s294, 1
        %s1063 = smul.addr %s1062, 16
        %s1064 = scalar_lea.vmem [#allocation17], %s1063
        // Predicated region
        $region133: #{tpu_custom_call.1} parent=99 // pred_check
          %p1065 = pneg %p307
        $region134: #{tpu_custom_call.1} parent=99 // pred_check_branch
          %1067 = sbr.rel (%p1065) target = $region136
        $region135: #{tpu_custom_call.1} parent=99 // pred_region
          %1068 = dma.done %s1061, 256
        $region136: #{tpu_custom_call.1} parent=99 // pred_fallthru
          _
        %s1069 = sand.u32 %s66, 1
        %s1070 = scalar_lea.sflag [#allocation19], %s1069
        %s1071 = sand.u32 %s320, 1
        %s1072 = scalar_lea.vmem [#allocation18], %s1071
        // Predicated region
        $region137: #{tpu_custom_call.1} parent=99 // pred_check
          %p1073 = pneg %p333
        $region138: #{tpu_custom_call.1} parent=99 // pred_check_branch
          %1075 = sbr.rel (%p1073) target = $region140
        $region139: #{tpu_custom_call.1} parent=99 // pred_region
          %1076 = dma.done %s1070, 16
        $region140: #{tpu_custom_call.1} parent=99 // pred_fallthru
          _
        %s1077 = sand.u32 %s66, 1
        %s1078 = scalar_lea.sflag [#allocation19], %s1077
        %s1079 = sand.u32 %s346, 1
        %s1080 = smul.addr %s1079, 16
        %s1081 = scalar_lea.vmem [#allocation20], %s1080
        // Predicated region
        $region141: #{tpu_custom_call.1} parent=99 // pred_check
          %p1082 = pneg %p359
        $region142: #{tpu_custom_call.1} parent=99 // pred_check_branch
          %1084 = sbr.rel (%p1082) target = $region144
        $region143: #{tpu_custom_call.1} parent=99 // pred_region
          %1085 = dma.done %s1078, 256
        $region144: #{tpu_custom_call.1} parent=99 // pred_fallthru
          _
        %s1086 = sand.u32 %s66, 1
        %s1087 = scalar_lea.sflag [#allocation22], %s1086
        %s1088 = sand.u32 %s372, 1
        %s1089 = scalar_lea.vmem [#allocation21], %s1088
        // Predicated region
        $region145: #{tpu_custom_call.1} parent=99 // pred_check
          %p1090 = pneg %p385
        $region146: #{tpu_custom_call.1} parent=99 // pred_check_branch
          %1092 = sbr.rel (%p1090) target = $region148
        $region147: #{tpu_custom_call.1} parent=99 // pred_region
          %1093 = dma.done %s1087, 16
        $region148: #{tpu_custom_call.1} parent=99 // pred_fallthru
          _
        %s1094 = sand.u32 %s66, 1
        %s1095 = scalar_lea.sflag [#allocation22], %s1094
        %s1096 = sand.u32 %s398, 1
        %s1097 = smul.addr %s1096, 16
        %s1098 = scalar_lea.vmem [#allocation23], %s1097
        // Predicated region
        $region149: #{tpu_custom_call.1} parent=99 // pred_check
          %p1099 = pneg %p411
        $region150: #{tpu_custom_call.1} parent=99 // pred_check_branch
          %1101 = sbr.rel (%p1099) target = $region152
        $region151: #{tpu_custom_call.1} parent=99 // pred_region
          %1102 = dma.done %s1095, 256
        $region152: #{tpu_custom_call.1} parent=99 // pred_fallthru
          _
        %s1103 = sand.u32 %s66, 1
        %s1104 = scalar_lea.sflag [#allocation25], %s1103
        %s1105 = sand.u32 %s424, 1
        %s1106 = scalar_lea.vmem [#allocation24], %s1105
        // Predicated region
        $region153: #{tpu_custom_call.1} parent=99 // pred_check
          %p1107 = pneg %p437
        $region154: #{tpu_custom_call.1} parent=99 // pred_check_branch
          %1109 = sbr.rel (%p1107) target = $region156
        $region155: #{tpu_custom_call.1} parent=99 // pred_region
          %1110 = dma.done %s1104, 16
        $region156: #{tpu_custom_call.1} parent=99 // pred_fallthru
          _
        %s1111 = sand.u32 %s66, 1
        %s1112 = scalar_lea.sflag [#allocation25], %s1111
        %s1113 = sand.u32 %s450, 1
        %s1114 = smul.addr %s1113, 16
        %s1115 = scalar_lea.vmem [#allocation26], %s1114
        // Predicated region
        $region157: #{tpu_custom_call.1} parent=99 // pred_check
          %p1116 = pneg %p463
        $region158: #{tpu_custom_call.1} parent=99 // pred_check_branch
          %1118 = sbr.rel (%p1116) target = $region160
        $region159: #{tpu_custom_call.1} parent=99 // pred_region
          %1119 = dma.done %s1112, 256
        $region160: #{tpu_custom_call.1} parent=99 // pred_fallthru
          _
        %s1120 = sand.u32 %s66, 1
        %s1121 = scalar_lea.sflag [#allocation28], %s1120
        %s1122 = sand.u32 %s476, 1
        %s1123 = scalar_lea.vmem [#allocation27], %s1122
        // Predicated region
        $region161: #{tpu_custom_call.1} parent=99 // pred_check
          %p1124 = pneg %p489
        $region162: #{tpu_custom_call.1} parent=99 // pred_check_branch
          %1126 = sbr.rel (%p1124) target = $region164
        $region163: #{tpu_custom_call.1} parent=99 // pred_region
          %1127 = dma.done %s1121, 16
        $region164: #{tpu_custom_call.1} parent=99 // pred_fallthru
          _
        %s1128 = sand.u32 %s66, 1
        %s1129 = scalar_lea.sflag [#allocation28], %s1128
        %s1130 = sand.u32 %s502, 1
        %s1131 = smul.addr %s1130, 32
        %s1132 = scalar_lea.vmem [#allocation29], %s1131
        // Predicated region
        $region165: #{tpu_custom_call.1} parent=99 // pred_check
          %p1133 = pneg %p515
        $region166: #{tpu_custom_call.1} parent=99 // pred_check_branch
          %1135 = sbr.rel (%p1133) target = $region168
        $region167: #{tpu_custom_call.1} parent=99 // pred_region
          %1136 = dma.done %s1129, 512
        $region168: #{tpu_custom_call.1} parent=99 // pred_fallthru
          _
        %s1137 = sand.u32 %s528, 1
        %s1138 = scalar_lea.sflag [#allocation31], %s1137
        %s1139 = sand.u32 %s528, 1
        %s1140 = scalar_lea.vmem [#allocation30], %s1139
        // Predicated region
        $region169: #{tpu_custom_call.1} parent=99 // pred_check
          %p1141 = pneg %p541
        $region170: #{tpu_custom_call.1} parent=99 // pred_check_branch
          %1143 = sbr.rel (%p1141) target = $region172
        $region171: #{tpu_custom_call.1} parent=99 // pred_region
          %1144 = dma.done %s1138, 16
        $region172: #{tpu_custom_call.1} parent=99 // pred_fallthru
          _
        // Predicated region
        $region173: #{tpu_custom_call.1} parent=99 // pred_check
          %p1145 = pneg %p562
        $region174: #{tpu_custom_call.1} parent=99 // pred_check_branch
          %1147 = sbr.rel (%p1145) target = $region176
        $region175: #{tpu_custom_call.1} parent=99 // pred_region
          %1148 = dma.done [#allocation5], 32
        $region176: #{tpu_custom_call.1} parent=99 // pred_fallthru
          _
        // Predicated region
        $region177: #{tpu_custom_call.1} parent=99 // pred_check
          %p1149 = pneg %p583
        $region178: #{tpu_custom_call.1} parent=99 // pred_check_branch
          %1151 = sbr.rel (%p1149) target = $region180
        $region179: #{tpu_custom_call.1} parent=99 // pred_region
          %1152 = dma.done [#allocation34], 16
        $region180: #{tpu_custom_call.1} parent=99 // pred_fallthru
          _
        %1153 = sfence
        %s1154 = sand.u32 %s86, 1
        %s1155 = scalar_lea.sflag [#allocation3], %s1154
        %s1156 = sand.u32 %s86, 1
        %s1157 = smul.addr %s1156, 8
        %s1158 = scalar_lea.vmem [#allocation2], %s1157
        %p1159 = pneg %p99
        %p1160 = pneg %p96
        %s1161 = sand.u32 %s66, 1
        %s1162 = scalar_lea.sflag [#allocation7], %s1161
        %s1163 = sand.u32 %s112, 1
        %s1164 = smul.addr %s1163, 16
        %s1165 = scalar_lea.vmem [#allocation6], %s1164
        %p1166 = pneg %p125
        %p1167 = pneg %p122
        %s1168 = sand.u32 %s66, 1
        %s1169 = scalar_lea.sflag [#allocation7], %s1168
        %s1170 = sand.u32 %s138, 1
        %s1171 = scalar_lea.vmem [#allocation8], %s1170
        %p1172 = pneg %p151
        %p1173 = pneg %p148
        %s1174 = sand.u32 %s66, 1
        %s1175 = scalar_lea.sflag [#allocation10], %s1174
        %s1176 = sand.u32 %s164, 1
        %s1177 = scalar_lea.vmem [#allocation9], %s1176
        %p1178 = pneg %p177
        %p1179 = pneg %p174
        %s1180 = sand.u32 %s66, 1
        %s1181 = scalar_lea.sflag [#allocation10], %s1180
        %s1182 = sand.u32 %s190, 1
        %s1183 = smul.addr %s1182, 16
        %s1184 = scalar_lea.vmem [#allocation11], %s1183
        %p1185 = pneg %p203
        %p1186 = pneg %p200
        %s1187 = sand.u32 %s66, 1
        %s1188 = scalar_lea.sflag [#allocation13], %s1187
        %s1189 = sand.u32 %s216, 1
        %s1190 = scalar_lea.vmem [#allocation12], %s1189
        %p1191 = pneg %p229
        %p1192 = pneg %p226
        %s1193 = sand.u32 %s66, 1
        %s1194 = scalar_lea.sflag [#allocation13], %s1193
        %s1195 = sand.u32 %s242, 1
        %s1196 = smul.addr %s1195, 16
        %s1197 = scalar_lea.vmem [#allocation14], %s1196
        %p1198 = pneg %p255
        %p1199 = pneg %p252
        %s1200 = sand.u32 %s66, 1
        %s1201 = scalar_lea.sflag [#allocation16], %s1200
        %s1202 = sand.u32 %s268, 1
        %s1203 = scalar_lea.vmem [#allocation15], %s1202
        %p1204 = pneg %p281
        %p1205 = pneg %p278
        %s1206 = sand.u32 %s66, 1
        %s1207 = scalar_lea.sflag [#allocation16], %s1206
        %s1208 = sand.u32 %s294, 1
        %s1209 = smul.addr %s1208, 16
        %s1210 = scalar_lea.vmem [#allocation17], %s1209
        %p1211 = pneg %p307
        %p1212 = pneg %p304
        %s1213 = sand.u32 %s66, 1
        %s1214 = scalar_lea.sflag [#allocation19], %s1213
        %s1215 = sand.u32 %s320, 1
        %s1216 = scalar_lea.vmem [#allocation18], %s1215
        %p1217 = pneg %p333
        %p1218 = pneg %p330
        %s1219 = sand.u32 %s66, 1
        %s1220 = scalar_lea.sflag [#allocation19], %s1219
        %s1221 = sand.u32 %s346, 1
        %s1222 = smul.addr %s1221, 16
        %s1223 = scalar_lea.vmem [#allocation20], %s1222
        %p1224 = pneg %p359
        %p1225 = pneg %p356
        %s1226 = sand.u32 %s66, 1
        %s1227 = scalar_lea.sflag [#allocation22], %s1226
        %s1228 = sand.u32 %s372, 1
        %s1229 = scalar_lea.vmem [#allocation21], %s1228
        %p1230 = pneg %p385
        %p1231 = pneg %p382
        %s1232 = sand.u32 %s66, 1
        %s1233 = scalar_lea.sflag [#allocation22], %s1232
        %s1234 = sand.u32 %s398, 1
        %s1235 = smul.addr %s1234, 16
        %s1236 = scalar_lea.vmem [#allocation23], %s1235
        %p1237 = pneg %p411
        %p1238 = pneg %p408
        %s1239 = sand.u32 %s66, 1
        %s1240 = scalar_lea.sflag [#allocation25], %s1239
        %s1241 = sand.u32 %s424, 1
        %s1242 = scalar_lea.vmem [#allocation24], %s1241
        %p1243 = pneg %p437
        %p1244 = pneg %p434
        %s1245 = sand.u32 %s66, 1
        %s1246 = scalar_lea.sflag [#allocation25], %s1245
        %s1247 = sand.u32 %s450, 1
        %s1248 = smul.addr %s1247, 16
        %s1249 = scalar_lea.vmem [#allocation26], %s1248
        %p1250 = pneg %p463
        %p1251 = pneg %p460
        %s1252 = sand.u32 %s66, 1
        %s1253 = scalar_lea.sflag [#allocation28], %s1252
        %s1254 = sand.u32 %s476, 1
        %s1255 = scalar_lea.vmem [#allocation27], %s1254
        %p1256 = pneg %p489
        %p1257 = pneg %p486
        %s1258 = sand.u32 %s66, 1
        %s1259 = scalar_lea.sflag [#allocation28], %s1258
        %s1260 = sand.u32 %s502, 1
        %s1261 = smul.addr %s1260, 32
        %s1262 = scalar_lea.vmem [#allocation29], %s1261
        %p1263 = pneg %p515
        %p1264 = pneg %p512
        %s1265 = sand.u32 %s528, 1
        %s1266 = scalar_lea.sflag [#allocation31], %s1265
        %s1267 = sand.u32 %s528, 1
        %s1268 = scalar_lea.vmem [#allocation30], %s1267
        %p1269 = pneg %p541
        %p1270 = pneg %p538
        %p1271 = pneg %p562
        %p1272 = pneg %p559
        %p1273 = pneg %p583
        %p1274 = pneg %p580
        %p1275 = pneg %p609
        %p1276 = pneg %p606
        %s1277 = sand.u32 %s596, 1
        %s1278 = scalar_lea.sflag [#allocation4], %s1277
        %s1279 = sand.u32 %s596, 1
        %s1280 = smul.addr %s1279, 8
        %s1281 = scalar_lea.vmem [#allocation35], %s1280
        %p1283 = scmp.eq.s32.totalorder %s71, 0
        // Predicated region
        $region181: #{tpu_custom_call.1} parent=99 // pred_check
          %p1284 = pneg %p1283
        $region182: #{tpu_custom_call.1} parent=99 // pred_check_branch
          %1286 = sbr.rel (%p1284) target = $region184
        $region183: #{tpu_custom_call.1} parent=99 // pred_region
          %v1287 = vld [vmem:[%s996] sm:$0xff]
          %vm1288 = vcmask 261120
          %1289 = vst.msk [vmem:[%s1281] sm:$0xff] %vm1288, %v1287
        $region184: #{tpu_custom_call.1} parent=99 // pred_fallthru
          _
        %v1290 = vld [vmem:[%s1281] sm:$0xff]
        %v1291 = vld [vmem:[%s1013] sm:$0x1]
        %vm1292 = vcmp.eq.s32.totalorder %v1291, 0
        %v1293 = vsel %vm1292, -1e+09, 0.0
        %v1294 = vlaneseq
        %v1295 = vshrl.u32 %v1294, 7
        %v1296 = vlaneseq
        %v1297 = vand.u32 %v1296, 127
        %vm1298 = vcmp.le.s32.totalorder %v1297, %v1295
        %v1299 = vsel %vm1298, 0.0, -1e+09
        %v1300 = vld [vmem:[%s1021] sm:$0x1]
        %vm1301 = vcmp.eq.s32.totalorder %v1300, 0
        %v1302 = vsel %vm1301, -1e+09, 0.0
        %v1304 = vlaneseq
        %v1305 = vshrl.u32 %v1304, 7
        %v1306 = vsub.s32 0, %v1305
        %v1307 = vrot.slane %v1302, %v1306
        %v1309 = vadd.f32 %v1299, %v1307
        %s1310 = smul.u32 %s71, 128
        %s1311 = sld [smem:[#allocation32 + %s1310]]
        %s1312 = sadd.s32 %s1310, 1
        %s1313 = sld [smem:[#allocation32 + %s1312]]
        %vm1314 = vcmask 261120
        %v1315 = vsel %vm1314, %v1290, 0.0
        %1316 = vadd.xlane.f32.xlu0 %v1315
        %v1317 = vpop.xlane.xlu0 %1316
        %v1318 = vrcp.pop 32.0
        %v1319 = vmul.f32 %v1317, %v1318
        %v1320 = vsub.f32 %v1290, %v1319
        %v1321 = vmul.f32 %v1320, %v1320
        %v1322 = vsel %vm1314, %v1321, 0.0
        %1323 = vadd.xlane.f32.xlu0 %v1322
        %v1324 = vpop.xlane.xlu0 %1323
        %v1325 = vrcp.pop 31.0
        %v1326 = vmul.f32 %v1324, %v1325
        %v1327 = vstv %s1311
        %v1328 = vmul.f32 %v1327, %v1320
        %v1329 = vrsqrt.pop %v1326
        %v1330 = vmul.f32 %v1326, %v1329
        %vm1331 = vcmp.eq.f32.partialorder %v1326, inf
        %v1332 = vsel %vm1331, %v1326, %v1330
        %vm1333 = vcmp.eq.f32.partialorder %v1326, 0.0
        %v1334 = vand.u32 %v1326, 2147483648
        %v1335 = vsel %vm1333, %v1334, %v1332
        %v1336 = vadd.f32 %v1335, 1e-06
        %v1337 = vrcp.pop %v1336
        %v1338 = vmul.f32 %v1328, %v1337
        %v1339 = vstv %s1313
        %v1340 = vadd.f32 %v1338, %v1339
        %v1341 = vpack.c.bf16 %v1340, %v1340
        %v1342 = vld [vmem:[%s1030] sm:$0xf]
        %v1343 = vld [vmem:[%s1030 + $0x4] sm:$0xf]
        %v1344 = vld [vmem:[%s1030 + $0x8] sm:$0xf]
        %v1345 = vld [vmem:[%s1030 + $0xc] sm:$0xf]
        %v1346 = vld [vmem:[%s1038] sm:$0x1]
        %v1348 = vlaneseq
        %v1349 = vshrl.u32 %v1348, 7
        %v1350 = vsub.s32 0, %v1349
        %v1351 = vrot.slane %v1346, %v1350
        %v1357 = vunpack.c.l.b16 %v1342
        %v1358 = vunpack.c.l.b16 %v1343
        %v1359 = vunpack.c.l.b16 %v1344
        %v1360 = vunpack.c.l.b16 %v1345
        %v1361 = vpack.c.b16 %v1358, %v1357
        %v1362 = vpack.c.b16 %v1360, %v1359
        %v1366 = vsel %vm1314, %v1341, 0
        %1368 = vmatprep.subr.bf16.mxu0 0
        %1369 = vmatpush1.bf16.msra.mxu0 %v1361
        %1370 = vmatprep.subr.bf16.mxu0 0
        %1371 = vmatpush1.bf16.msra.mxu0 %v1362
        %1372 = vmatprep.subr.bf16.mxu0 0
        %1373 = vmatpush1.bf16.msra.mxu0 0
        %1374 = vmatprep.subr.bf16.mxu0 0
        %1375 = vmatpush1.bf16.msra.mxu0 0
        %1376 = vmatprep.subr.bf16.mxu0 0
        %1377 = vmatpush1.bf16.msra.mxu0 0
        %1378 = vmatprep.subr.bf16.mxu0 0
        %1379 = vmatpush1.bf16.msra.mxu0 0
        %1380 = vmatprep.subr.bf16.mxu0 0
        %1381 = vmatpush1.bf16.msra.mxu0 0
        %1382 = vmatprep.subr.bf16.mxu0 0
        %1383 = vmatpush1.bf16.msra.mxu0 0
        %1384 = vmatprep.subr.bf16.mxu0 0
        %1385 = vmatpush1.bf16.msra.mxu0 0
        %1386 = vmatprep.subr.bf16.mxu0 0
        %1387 = vmatpush1.bf16.msra.mxu0 0
        %1388 = vmatprep.subr.bf16.mxu0 0
        %1389 = vmatpush1.bf16.msra.mxu0 0
        %1390 = vmatprep.subr.bf16.mxu0 0
        %1391 = vmatpush1.bf16.msra.mxu0 0
        %1392 = vmatprep.subr.bf16.mxu0 0
        %1393 = vmatpush1.bf16.msra.mxu0 0
        %1394 = vmatprep.subr.bf16.mxu0 0
        %1395 = vmatpush1.bf16.msra.mxu0 0
        %1396 = vmatprep.subr.bf16.mxu0 0
        %1397 = vmatpush1.bf16.msra.mxu0 0
        %1398 = vmatprep.subr.bf16.mxu0 0
        %1399 = vmatpush1.bf16.msra.mxu0 0
        %1400 = vmatprep.mubr.bf16.mxu0 0
        %1401 = vmatmul.mubr.bf16.gmra.mrb[0].mxu0 %v1366
        %v1402 = vpop.f32.mrb[0].mxu0
        %v1403 = vadd.f32 %v1351, %v1402
        %v1404 = vpop.f32.mrb[0].mxu0
        %v1405 = vpop.f32.mrb[0].mxu0
        %v1406 = vpop.f32.mrb[0].mxu0
        %1407 = vdwg.mxu0
        %1409 = vrot.lane.b32.xlu0 %v1403, 120
        %v1410 = vpop.permute.xlu0 %1409
        %1412 = vrot.lane.b32.xlu0 %v1403, 112
        %v1413 = vpop.permute.xlu0 %1412
        %1415 = vrot.lane.b32.xlu0 %v1403, 104
        %v1416 = vpop.permute.xlu0 %1415
        %v1418 = vcombine.low %v1403, %v1413
        %v1419 = vcombine.high %v1403, %v1413
        %v1421 = vunpack.c.l.s4 1983009808
        %v1422 = vunpack.c.0.s8 %v1421
        %v1423 = vlaneseq
        %v1424 = vshrl.u32 %v1423, 7
        %v1425 = vsub.s32 %v1422, %v1424
        %v1426 = vrot.slane %v1418, %v1425
        %v1428 = vunpack.c.l.s4 1983009808
        %v1429 = vunpack.c.0.s8 %v1428
        %v1430 = vlaneseq
        %v1431 = vshrl.u32 %v1430, 7
        %v1432 = vsub.s32 %v1429, %v1431
        %v1433 = vrot.slane %v1419, %v1432
        %v1434 = vcombine.low %v1410, %v1416
        %v1435 = vcombine.high %v1410, %v1416
        %v1437 = vunpack.c.l.s4 1983009808
        %v1438 = vunpack.c.0.s8 %v1437
        %v1439 = vlaneseq
        %v1440 = vshrl.u32 %v1439, 7
        %v1441 = vsub.s32 %v1438, %v1440
        %v1442 = vrot.slane %v1434, %v1441
        %v1444 = vunpack.c.l.s4 1983009808
        %v1445 = vunpack.c.0.s8 %v1444
        %v1446 = vlaneseq
        %v1447 = vshrl.u32 %v1446, 7
        %v1448 = vsub.s32 %v1445, %v1447
        %v1449 = vrot.slane %v1435, %v1448
        %v1450 = vcombine.low %v1426, %v1442
        %v1451 = vcombine.high %v1426, %v1442
        %v1453 = vunpack.c.l.s4 1934713408
        %v1454 = vunpack.c.0.s8 %v1453
        %v1455 = vlaneseq
        %v1456 = vshrl.u32 %v1455, 7
        %v1457 = vsub.s32 %v1454, %v1456
        %v1458 = vrot.slane %v1450, %v1457
        %v1460 = vunpack.c.l.s4 1934713408
        %v1461 = vunpack.c.0.s8 %v1460
        %v1462 = vlaneseq
        %v1463 = vshrl.u32 %v1462, 7
        %v1464 = vsub.s32 %v1461, %v1463
        %v1465 = vrot.slane %v1451, %v1464
        %v1466 = vcombine.low %v1433, %v1449
        %v1467 = vcombine.high %v1433, %v1449
        %v1469 = vunpack.c.l.s4 1934713408
        %v1470 = vunpack.c.0.s8 %v1469
        %v1471 = vlaneseq
        %v1472 = vshrl.u32 %v1471, 7
        %v1473 = vsub.s32 %v1470, %v1472
        %v1474 = vrot.slane %v1466, %v1473
        %v1476 = vunpack.c.l.s4 1934713408
        %v1477 = vunpack.c.0.s8 %v1476
        %v1478 = vlaneseq
        %v1479 = vshrl.u32 %v1478, 7
        %v1480 = vsub.s32 %v1477, %v1479
        %v1481 = vrot.slane %v1467, %v1480
        %v1482 = vcombine.high %v1458, 0.0
        %v1483 = vcombine.high %v1465, 0.0
        %v1484 = vcombine.high %v1474, 0.0
        %v1485 = vcombine.high %v1481, 0.0
        %v1486 = vcombine.low %v1458, %v1465
        %v1488 = vunpack.c.l.s4 1983009808
        %v1489 = vunpack.c.0.s8 %v1488
        %v1490 = vlaneseq
        %v1491 = vshrl.u32 %v1490, 7
        %v1492 = vsub.s32 %v1489, %v1491
        %v1493 = vrot.slane %v1486, %v1492
        %v1494 = vcombine.low %v1482, %v1483
        %v1496 = vunpack.c.l.s4 1983009808
        %v1497 = vunpack.c.0.s8 %v1496
        %v1498 = vlaneseq
        %v1499 = vshrl.u32 %v1498, 7
        %v1500 = vsub.s32 %v1497, %v1499
        %v1501 = vrot.slane %v1494, %v1500
        %v1502 = vcombine.low %v1474, %v1481
        %v1504 = vunpack.c.l.s4 1983009808
        %v1505 = vunpack.c.0.s8 %v1504
        %v1506 = vlaneseq
        %v1507 = vshrl.u32 %v1506, 7
        %v1508 = vsub.s32 %v1505, %v1507
        %v1509 = vrot.slane %v1502, %v1508
        %v1510 = vcombine.low %v1484, %v1485
        %v1512 = vunpack.c.l.s4 1983009808
        %v1513 = vunpack.c.0.s8 %v1512
        %v1514 = vlaneseq
        %v1515 = vshrl.u32 %v1514, 7
        %v1516 = vsub.s32 %v1513, %v1515
        %v1517 = vrot.slane %v1510, %v1516
        %v1518 = vcombine.low %v1493, %v1501
        %v1519 = vcombine.high %v1493, %v1501
        %v1521 = vunpack.c.l.s4 1934713408
        %v1522 = vunpack.c.0.s8 %v1521
        %v1523 = vlaneseq
        %v1524 = vshrl.u32 %v1523, 7
        %v1525 = vsub.s32 %v1522, %v1524
        %v1526 = vrot.slane %v1518, %v1525
        %v1528 = vunpack.c.l.s4 1934713408
        %v1529 = vunpack.c.0.s8 %v1528
        %v1530 = vlaneseq
        %v1531 = vshrl.u32 %v1530, 7
        %v1532 = vsub.s32 %v1529, %v1531
        %v1533 = vrot.slane %v1519, %v1532
        %v1534 = vcombine.low %v1509, %v1517
        %v1535 = vcombine.high %v1509, %v1517
        %v1537 = vunpack.c.l.s4 1934713408
        %v1538 = vunpack.c.0.s8 %v1537
        %v1539 = vlaneseq
        %v1540 = vshrl.u32 %v1539, 7
        %v1541 = vsub.s32 %v1538, %v1540
        %v1542 = vrot.slane %v1534, %v1541
        %v1544 = vunpack.c.l.s4 1934713408
        %v1545 = vunpack.c.0.s8 %v1544
        %v1546 = vlaneseq
        %v1547 = vshrl.u32 %v1546, 7
        %v1548 = vsub.s32 %v1545, %v1547
        %v1549 = vrot.slane %v1535, %v1548
        %v1550 = vcombine.low %v1526, %v1542
        %v1551 = vcombine.high %v1526, %v1542
        %v1552 = vcombine.low %v1533, %v1549
        %v1553 = vcombine.high %v1533, %v1549
        %v1554 = vpack.c.bf16 %v1550, %v1550
        %v1555 = vpack.c.bf16 %v1551, %v1551
        %v1556 = vpack.c.bf16 %v1552, %v1552
        %v1557 = vpack.c.bf16 %v1553, %v1553
        %1558 = vrot.lane.b32.xlu0 %v1403, 96
        %v1559 = vpop.permute.xlu0 %1558
        %1560 = vrot.lane.b32.xlu0 %v1410, 96
        %v1561 = vpop.permute.xlu0 %1560
        %1562 = vrot.lane.b32.xlu0 %v1413, 96
        %v1563 = vpop.permute.xlu0 %1562
        %1564 = vrot.lane.b32.xlu0 %v1416, 96
        %v1565 = vpop.permute.xlu0 %1564
        %v1570 = vcombine.low %v1559, %v1563
        %v1571 = vcombine.high %v1559, %v1563
        %v1573 = vunpack.c.l.s4 1983009808
        %v1574 = vunpack.c.0.s8 %v1573
        %v1575 = vlaneseq
        %v1576 = vshrl.u32 %v1575, 7
        %v1577 = vsub.s32 %v1574, %v1576
        %v1578 = vrot.slane %v1570, %v1577
        %v1580 = vunpack.c.l.s4 1983009808
        %v1581 = vunpack.c.0.s8 %v1580
        %v1582 = vlaneseq
        %v1583 = vshrl.u32 %v1582, 7
        %v1584 = vsub.s32 %v1581, %v1583
        %v1585 = vrot.slane %v1571, %v1584
        %v1586 = vcombine.low %v1561, %v1565
        %v1587 = vcombine.high %v1561, %v1565
        %v1589 = vunpack.c.l.s4 1983009808
        %v1590 = vunpack.c.0.s8 %v1589
        %v1591 = vlaneseq
        %v1592 = vshrl.u32 %v1591, 7
        %v1593 = vsub.s32 %v1590, %v1592
        %v1594 = vrot.slane %v1586, %v1593
        %v1596 = vunpack.c.l.s4 1983009808
        %v1597 = vunpack.c.0.s8 %v1596
        %v1598 = vlaneseq
        %v1599 = vshrl.u32 %v1598, 7
        %v1600 = vsub.s32 %v1597, %v1599
        %v1601 = vrot.slane %v1587, %v1600
        %v1602 = vcombine.low %v1578, %v1594
        %v1603 = vcombine.high %v1578, %v1594
        %v1605 = vunpack.c.l.s4 1934713408
        %v1606 = vunpack.c.0.s8 %v1605
        %v1607 = vlaneseq
        %v1608 = vshrl.u32 %v1607, 7
        %v1609 = vsub.s32 %v1606, %v1608
        %v1610 = vrot.slane %v1602, %v1609
        %v1612 = vunpack.c.l.s4 1934713408
        %v1613 = vunpack.c.0.s8 %v1612
        %v1614 = vlaneseq
        %v1615 = vshrl.u32 %v1614, 7
        %v1616 = vsub.s32 %v1613, %v1615
        %v1617 = vrot.slane %v1603, %v1616
        %v1618 = vcombine.low %v1585, %v1601
        %v1619 = vcombine.high %v1585, %v1601
        %v1621 = vunpack.c.l.s4 1934713408
        %v1622 = vunpack.c.0.s8 %v1621
        %v1623 = vlaneseq
        %v1624 = vshrl.u32 %v1623, 7
        %v1625 = vsub.s32 %v1622, %v1624
        %v1626 = vrot.slane %v1618, %v1625
        %v1628 = vunpack.c.l.s4 1934713408
        %v1629 = vunpack.c.0.s8 %v1628
        %v1630 = vlaneseq
        %v1631 = vshrl.u32 %v1630, 7
        %v1632 = vsub.s32 %v1629, %v1631
        %v1633 = vrot.slane %v1619, %v1632
        %v1634 = vcombine.high %v1610, 0.0
        %v1635 = vcombine.high %v1617, 0.0
        %v1636 = vcombine.high %v1626, 0.0
        %v1637 = vcombine.high %v1633, 0.0
        %v1638 = vcombine.low %v1610, %v1617
        %v1640 = vunpack.c.l.s4 1983009808
        %v1641 = vunpack.c.0.s8 %v1640
        %v1642 = vlaneseq
        %v1643 = vshrl.u32 %v1642, 7
        %v1644 = vsub.s32 %v1641, %v1643
        %v1645 = vrot.slane %v1638, %v1644
        %v1646 = vcombine.low %v1634, %v1635
        %v1648 = vunpack.c.l.s4 1983009808
        %v1649 = vunpack.c.0.s8 %v1648
        %v1650 = vlaneseq
        %v1651 = vshrl.u32 %v1650, 7
        %v1652 = vsub.s32 %v1649, %v1651
        %v1653 = vrot.slane %v1646, %v1652
        %v1654 = vcombine.low %v1626, %v1633
        %v1656 = vunpack.c.l.s4 1983009808
        %v1657 = vunpack.c.0.s8 %v1656
        %v1658 = vlaneseq
        %v1659 = vshrl.u32 %v1658, 7
        %v1660 = vsub.s32 %v1657, %v1659
        %v1661 = vrot.slane %v1654, %v1660
        %v1662 = vcombine.low %v1636, %v1637
        %v1664 = vunpack.c.l.s4 1983009808
        %v1665 = vunpack.c.0.s8 %v1664
        %v1666 = vlaneseq
        %v1667 = vshrl.u32 %v1666, 7
        %v1668 = vsub.s32 %v1665, %v1667
        %v1669 = vrot.slane %v1662, %v1668
        %v1670 = vcombine.low %v1645, %v1653
        %v1671 = vcombine.high %v1645, %v1653
        %v1673 = vunpack.c.l.s4 1934713408
        %v1674 = vunpack.c.0.s8 %v1673
        %v1675 = vlaneseq
        %v1676 = vshrl.u32 %v1675, 7
        %v1677 = vsub.s32 %v1674, %v1676
        %v1678 = vrot.slane %v1670, %v1677
        %v1680 = vunpack.c.l.s4 1934713408
        %v1681 = vunpack.c.0.s8 %v1680
        %v1682 = vlaneseq
        %v1683 = vshrl.u32 %v1682, 7
        %v1684 = vsub.s32 %v1681, %v1683
        %v1685 = vrot.slane %v1671, %v1684
        %v1686 = vcombine.low %v1661, %v1669
        %v1687 = vcombine.high %v1661, %v1669
        %v1689 = vunpack.c.l.s4 1934713408
        %v1690 = vunpack.c.0.s8 %v1689
        %v1691 = vlaneseq
        %v1692 = vshrl.u32 %v1691, 7
        %v1693 = vsub.s32 %v1690, %v1692
        %v1694 = vrot.slane %v1686, %v1693
        %v1696 = vunpack.c.l.s4 1934713408
        %v1697 = vunpack.c.0.s8 %v1696
        %v1698 = vlaneseq
        %v1699 = vshrl.u32 %v1698, 7
        %v1700 = vsub.s32 %v1697, %v1699
        %v1701 = vrot.slane %v1687, %v1700
        %v1702 = vcombine.low %v1678, %v1694
        %v1703 = vcombine.high %v1678, %v1694
        %v1704 = vcombine.low %v1685, %v1701
        %v1705 = vcombine.high %v1685, %v1701
        %v1706 = vpack.c.bf16 %v1702, %v1702
        %v1707 = vpack.c.bf16 %v1703, %v1703
        %v1708 = vpack.c.bf16 %v1704, %v1704
        %v1709 = vpack.c.bf16 %v1705, %v1705
        %1710 = vrot.lane.b32.xlu0 %v1403, 64
        %v1711 = vpop.permute.xlu0 %1710
        %1712 = vrot.lane.b32.xlu0 %v1410, 64
        %v1713 = vpop.permute.xlu0 %1712
        %1714 = vrot.lane.b32.xlu0 %v1413, 64
        %v1715 = vpop.permute.xlu0 %1714
        %1716 = vrot.lane.b32.xlu0 %v1416, 64
        %v1717 = vpop.permute.xlu0 %1716
        %v1722 = vcombine.low %v1711, %v1715
        %v1723 = vcombine.high %v1711, %v1715
        %v1725 = vunpack.c.l.s4 1983009808
        %v1726 = vunpack.c.0.s8 %v1725
        %v1727 = vlaneseq
        %v1728 = vshrl.u32 %v1727, 7
        %v1729 = vsub.s32 %v1726, %v1728
        %v1730 = vrot.slane %v1722, %v1729
        %v1732 = vunpack.c.l.s4 1983009808
        %v1733 = vunpack.c.0.s8 %v1732
        %v1734 = vlaneseq
        %v1735 = vshrl.u32 %v1734, 7
        %v1736 = vsub.s32 %v1733, %v1735
        %v1737 = vrot.slane %v1723, %v1736
        %v1738 = vcombine.low %v1713, %v1717
        %v1739 = vcombine.high %v1713, %v1717
        %v1741 = vunpack.c.l.s4 1983009808
        %v1742 = vunpack.c.0.s8 %v1741
        %v1743 = vlaneseq
        %v1744 = vshrl.u32 %v1743, 7
        %v1745 = vsub.s32 %v1742, %v1744
        %v1746 = vrot.slane %v1738, %v1745
        %v1748 = vunpack.c.l.s4 1983009808
        %v1749 = vunpack.c.0.s8 %v1748
        %v1750 = vlaneseq
        %v1751 = vshrl.u32 %v1750, 7
        %v1752 = vsub.s32 %v1749, %v1751
        %v1753 = vrot.slane %v1739, %v1752
        %v1754 = vcombine.low %v1730, %v1746
        %v1755 = vcombine.high %v1730, %v1746
        %v1757 = vunpack.c.l.s4 1934713408
        %v1758 = vunpack.c.0.s8 %v1757
        %v1759 = vlaneseq
        %v1760 = vshrl.u32 %v1759, 7
        %v1761 = vsub.s32 %v1758, %v1760
        %v1762 = vrot.slane %v1754, %v1761
        %v1764 = vunpack.c.l.s4 1934713408
        %v1765 = vunpack.c.0.s8 %v1764
        %v1766 = vlaneseq
        %v1767 = vshrl.u32 %v1766, 7
        %v1768 = vsub.s32 %v1765, %v1767
        %v1769 = vrot.slane %v1755, %v1768
        %v1770 = vcombine.low %v1737, %v1753
        %v1771 = vcombine.high %v1737, %v1753
        %v1773 = vunpack.c.l.s4 1934713408
        %v1774 = vunpack.c.0.s8 %v1773
        %v1775 = vlaneseq
        %v1776 = vshrl.u32 %v1775, 7
        %v1777 = vsub.s32 %v1774, %v1776
        %v1778 = vrot.slane %v1770, %v1777
        %v1780 = vunpack.c.l.s4 1934713408
        %v1781 = vunpack.c.0.s8 %v1780
        %v1782 = vlaneseq
        %v1783 = vshrl.u32 %v1782, 7
        %v1784 = vsub.s32 %v1781, %v1783
        %v1785 = vrot.slane %v1771, %v1784
        %v1786 = vcombine.high %v1762, 0.0
        %v1787 = vcombine.high %v1769, 0.0
        %v1788 = vcombine.high %v1778, 0.0
        %v1789 = vcombine.high %v1785, 0.0
        %v1790 = vcombine.low %v1762, %v1769
        %v1792 = vunpack.c.l.s4 1983009808
        %v1793 = vunpack.c.0.s8 %v1792
        %v1794 = vlaneseq
        %v1795 = vshrl.u32 %v1794, 7
        %v1796 = vsub.s32 %v1793, %v1795
        %v1797 = vrot.slane %v1790, %v1796
        %v1798 = vcombine.low %v1786, %v1787
        %v1800 = vunpack.c.l.s4 1983009808
        %v1801 = vunpack.c.0.s8 %v1800
        %v1802 = vlaneseq
        %v1803 = vshrl.u32 %v1802, 7
        %v1804 = vsub.s32 %v1801, %v1803
        %v1805 = vrot.slane %v1798, %v1804
        %v1806 = vcombine.low %v1778, %v1785
        %v1808 = vunpack.c.l.s4 1983009808
        %v1809 = vunpack.c.0.s8 %v1808
        %v1810 = vlaneseq
        %v1811 = vshrl.u32 %v1810, 7
        %v1812 = vsub.s32 %v1809, %v1811
        %v1813 = vrot.slane %v1806, %v1812
        %v1814 = vcombine.low %v1788, %v1789
        %v1816 = vunpack.c.l.s4 1983009808
        %v1817 = vunpack.c.0.s8 %v1816
        %v1818 = vlaneseq
        %v1819 = vshrl.u32 %v1818, 7
        %v1820 = vsub.s32 %v1817, %v1819
        %v1821 = vrot.slane %v1814, %v1820
        %v1822 = vcombine.low %v1797, %v1805
        %v1823 = vcombine.high %v1797, %v1805
        %v1825 = vunpack.c.l.s4 1934713408
        %v1826 = vunpack.c.0.s8 %v1825
        %v1827 = vlaneseq
        %v1828 = vshrl.u32 %v1827, 7
        %v1829 = vsub.s32 %v1826, %v1828
        %v1830 = vrot.slane %v1822, %v1829
        %v1832 = vunpack.c.l.s4 1934713408
        %v1833 = vunpack.c.0.s8 %v1832
        %v1834 = vlaneseq
        %v1835 = vshrl.u32 %v1834, 7
        %v1836 = vsub.s32 %v1833, %v1835
        %v1837 = vrot.slane %v1823, %v1836
        %v1838 = vcombine.low %v1813, %v1821
        %v1839 = vcombine.high %v1813, %v1821
        %v1841 = vunpack.c.l.s4 1934713408
        %v1842 = vunpack.c.0.s8 %v1841
        %v1843 = vlaneseq
        %v1844 = vshrl.u32 %v1843, 7
        %v1845 = vsub.s32 %v1842, %v1844
        %v1846 = vrot.slane %v1838, %v1845
        %v1848 = vunpack.c.l.s4 1934713408
        %v1849 = vunpack.c.0.s8 %v1848
        %v1850 = vlaneseq
        %v1851 = vshrl.u32 %v1850, 7
        %v1852 = vsub.s32 %v1849, %v1851
        %v1853 = vrot.slane %v1839, %v1852
        %v1854 = vcombine.low %v1830, %v1846
        %v1855 = vcombine.high %v1830, %v1846
        %v1856 = vcombine.low %v1837, %v1853
        %v1857 = vcombine.high %v1837, %v1853
        %v1858 = vpack.c.bf16 %v1854, %v1854
        %v1859 = vpack.c.bf16 %v1855, %v1855
        %v1860 = vpack.c.bf16 %v1856, %v1856
        %v1861 = vpack.c.bf16 %v1857, %v1857
        %vm1862 = vcmask 64512
        %v1864 = vsel %vm1862, %v1554, 0
        %v1867 = vsel %vm1862, %v1706, 0
        %1869 = vmatprep.subr.bf16.mxu0 0
        %1870 = vmatpush1.bf16.xpose.msra.mxu0 %v1867
        %1871 = vmatprep.subr.bf16.mxu0 0
        %1872 = vmatpush1.bf16.xpose.msra.mxu0 0
        %1873 = vmatprep.subr.bf16.mxu0 0
        %1874 = vmatpush1.bf16.xpose.msra.mxu0 0
        %1875 = vmatprep.subr.bf16.mxu0 0
        %1876 = vmatpush1.bf16.xpose.msra.mxu0 0
        %1877 = vmatprep.subr.bf16.mxu0 0
        %1878 = vmatpush1.bf16.xpose.msra.mxu0 0
        %1879 = vmatprep.subr.bf16.mxu0 0
        %1880 = vmatpush1.bf16.xpose.msra.mxu0 0
        %1881 = vmatprep.subr.bf16.mxu0 0
        %1882 = vmatpush1.bf16.xpose.msra.mxu0 0
        %1883 = vmatprep.subr.bf16.mxu0 0
        %1884 = vmatpush1.bf16.xpose.msra.mxu0 0
        %1885 = vmatprep.subr.bf16.mxu0 0
        %1886 = vmatpush1.bf16.xpose.msra.mxu0 0
        %1887 = vmatprep.subr.bf16.mxu0 0
        %1888 = vmatpush1.bf16.xpose.msra.mxu0 0
        %1889 = vmatprep.subr.bf16.mxu0 0
        %1890 = vmatpush1.bf16.xpose.msra.mxu0 0
        %1891 = vmatprep.subr.bf16.mxu0 0
        %1892 = vmatpush1.bf16.xpose.msra.mxu0 0
        %1893 = vmatprep.subr.bf16.mxu0 0
        %1894 = vmatpush1.bf16.xpose.msra.mxu0 0
        %1895 = vmatprep.subr.bf16.mxu0 0
        %1896 = vmatpush1.bf16.xpose.msra.mxu0 0
        %1897 = vmatprep.subr.bf16.mxu0 0
        %1898 = vmatpush1.bf16.xpose.msra.mxu0 0
        %1899 = vmatprep.subr.bf16.mxu0 0
        %1900 = vmatpush1.bf16.xpose.msra.mxu0 0
        %1901 = vmatprep.mubr.bf16.mxu0 0
        %1902 = vmatmul.mubr.bf16.gmra.mrb[0].mxu0 %v1864
        %v1903 = vpop.f32.mrb[0].mxu0
        %v1904 = vadd.f32 0.0, %v1903
        %v1905 = vpop.f32.mrb[0].mxu0
        %v1906 = vpop.f32.mrb[0].mxu0
        %v1907 = vpop.f32.mrb[0].mxu0
        %1908 = vdwg.mxu0
        %v1910 = vsel %vm1862, %v1555, 0
        %v1913 = vsel %vm1862, %v1707, 0
        %1915 = vmatprep.subr.bf16.mxu0 0
        %1916 = vmatpush1.bf16.xpose.msra.mxu0 %v1913
        %1917 = vmatprep.subr.bf16.mxu0 0
        %1918 = vmatpush1.bf16.xpose.msra.mxu0 0
        %1919 = vmatprep.subr.bf16.mxu0 0
        %1920 = vmatpush1.bf16.xpose.msra.mxu0 0
        %1921 = vmatprep.subr.bf16.mxu0 0
        %1922 = vmatpush1.bf16.xpose.msra.mxu0 0
        %1923 = vmatprep.subr.bf16.mxu0 0
        %1924 = vmatpush1.bf16.xpose.msra.mxu0 0
        %1925 = vmatprep.subr.bf16.mxu0 0
        %1926 = vmatpush1.bf16.xpose.msra.mxu0 0
        %1927 = vmatprep.subr.bf16.mxu0 0
        %1928 = vmatpush1.bf16.xpose.msra.mxu0 0
        %1929 = vmatprep.subr.bf16.mxu0 0
        %1930 = vmatpush1.bf16.xpose.msra.mxu0 0
        %1931 = vmatprep.subr.bf16.mxu0 0
        %1932 = vmatpush1.bf16.xpose.msra.mxu0 0
        %1933 = vmatprep.subr.bf16.mxu0 0
        %1934 = vmatpush1.bf16.xpose.msra.mxu0 0
        %1935 = vmatprep.subr.bf16.mxu0 0
        %1936 = vmatpush1.bf16.xpose.msra.mxu0 0
        %1937 = vmatprep.subr.bf16.mxu0 0
        %1938 = vmatpush1.bf16.xpose.msra.mxu0 0
        %1939 = vmatprep.subr.bf16.mxu0 0
        %1940 = vmatpush1.bf16.xpose.msra.mxu0 0
        %1941 = vmatprep.subr.bf16.mxu0 0
        %1942 = vmatpush1.bf16.xpose.msra.mxu0 0
        %1943 = vmatprep.subr.bf16.mxu0 0
        %1944 = vmatpush1.bf16.xpose.msra.mxu0 0
        %1945 = vmatprep.subr.bf16.mxu0 0
        %1946 = vmatpush1.bf16.xpose.msra.mxu0 0
        %1947 = vmatprep.mubr.bf16.mxu0 0
        %1948 = vmatmul.mubr.bf16.gmra.mrb[0].mxu0 %v1910
        %v1949 = vpop.f32.mrb[0].mxu0
        %v1950 = vadd.f32 0.0, %v1949
        %v1951 = vpop.f32.mrb[0].mxu0
        %v1952 = vpop.f32.mrb[0].mxu0
        %v1953 = vpop.f32.mrb[0].mxu0
        %1954 = vdwg.mxu0
        %v1956 = vsel %vm1862, %v1556, 0
        %v1959 = vsel %vm1862, %v1708, 0
        %1961 = vmatprep.subr.bf16.mxu0 0
        %1962 = vmatpush1.bf16.xpose.msra.mxu0 %v1959
        %1963 = vmatprep.subr.bf16.mxu0 0
        %1964 = vmatpush1.bf16.xpose.msra.mxu0 0
        %1965 = vmatprep.subr.bf16.mxu0 0
        %1966 = vmatpush1.bf16.xpose.msra.mxu0 0
        %1967 = vmatprep.subr.bf16.mxu0 0
        %1968 = vmatpush1.bf16.xpose.msra.mxu0 0
        %1969 = vmatprep.subr.bf16.mxu0 0
        %1970 = vmatpush1.bf16.xpose.msra.mxu0 0
        %1971 = vmatprep.subr.bf16.mxu0 0
        %1972 = vmatpush1.bf16.xpose.msra.mxu0 0
        %1973 = vmatprep.subr.bf16.mxu0 0
        %1974 = vmatpush1.bf16.xpose.msra.mxu0 0
        %1975 = vmatprep.subr.bf16.mxu0 0
        %1976 = vmatpush1.bf16.xpose.msra.mxu0 0
        %1977 = vmatprep.subr.bf16.mxu0 0
        %1978 = vmatpush1.bf16.xpose.msra.mxu0 0
        %1979 = vmatprep.subr.bf16.mxu0 0
        %1980 = vmatpush1.bf16.xpose.msra.mxu0 0
        %1981 = vmatprep.subr.bf16.mxu0 0
        %1982 = vmatpush1.bf16.xpose.msra.mxu0 0
        %1983 = vmatprep.subr.bf16.mxu0 0
        %1984 = vmatpush1.bf16.xpose.msra.mxu0 0
        %1985 = vmatprep.subr.bf16.mxu0 0
        %1986 = vmatpush1.bf16.xpose.msra.mxu0 0
        %1987 = vmatprep.subr.bf16.mxu0 0
        %1988 = vmatpush1.bf16.xpose.msra.mxu0 0
        %1989 = vmatprep.subr.bf16.mxu0 0
        %1990 = vmatpush1.bf16.xpose.msra.mxu0 0
        %1991 = vmatprep.subr.bf16.mxu0 0
        %1992 = vmatpush1.bf16.xpose.msra.mxu0 0
        %1993 = vmatprep.mubr.bf16.mxu0 0
        %1994 = vmatmul.mubr.bf16.gmra.mrb[0].mxu0 %v1956
        %v1995 = vpop.f32.mrb[0].mxu0
        %v1996 = vadd.f32 0.0, %v1995
        %v1997 = vpop.f32.mrb[0].mxu0
        %v1998 = vpop.f32.mrb[0].mxu0
        %v1999 = vpop.f32.mrb[0].mxu0
        %2000 = vdwg.mxu0
        %v2002 = vsel %vm1862, %v1557, 0
        %v2005 = vsel %vm1862, %v1709, 0
        %2007 = vmatprep.subr.bf16.mxu0 0
        %2008 = vmatpush1.bf16.xpose.msra.mxu0 %v2005
        %2009 = vmatprep.subr.bf16.mxu0 0
        %2010 = vmatpush1.bf16.xpose.msra.mxu0 0
        %2011 = vmatprep.subr.bf16.mxu0 0
        %2012 = vmatpush1.bf16.xpose.msra.mxu0 0
        %2013 = vmatprep.subr.bf16.mxu0 0
        %2014 = vmatpush1.bf16.xpose.msra.mxu0 0
        %2015 = vmatprep.subr.bf16.mxu0 0
        %2016 = vmatpush1.bf16.xpose.msra.mxu0 0
        %2017 = vmatprep.subr.bf16.mxu0 0
        %2018 = vmatpush1.bf16.xpose.msra.mxu0 0
        %2019 = vmatprep.subr.bf16.mxu0 0
        %2020 = vmatpush1.bf16.xpose.msra.mxu0 0
        %2021 = vmatprep.subr.bf16.mxu0 0
        %2022 = vmatpush1.bf16.xpose.msra.mxu0 0
        %2023 = vmatprep.subr.bf16.mxu0 0
        %2024 = vmatpush1.bf16.xpose.msra.mxu0 0
        %2025 = vmatprep.subr.bf16.mxu0 0
        %2026 = vmatpush1.bf16.xpose.msra.mxu0 0
        %2027 = vmatprep.subr.bf16.mxu0 0
        %2028 = vmatpush1.bf16.xpose.msra.mxu0 0
        %2029 = vmatprep.subr.bf16.mxu0 0
        %2030 = vmatpush1.bf16.xpose.msra.mxu0 0
        %2031 = vmatprep.subr.bf16.mxu0 0
        %2032 = vmatpush1.bf16.xpose.msra.mxu0 0
        %2033 = vmatprep.subr.bf16.mxu0 0
        %2034 = vmatpush1.bf16.xpose.msra.mxu0 0
        %2035 = vmatprep.subr.bf16.mxu0 0
        %2036 = vmatpush1.bf16.xpose.msra.mxu0 0
        %2037 = vmatprep.subr.bf16.mxu0 0
        %2038 = vmatpush1.bf16.xpose.msra.mxu0 0
        %2039 = vmatprep.mubr.bf16.mxu0 0
        %2040 = vmatmul.mubr.bf16.gmra.mrb[0].mxu0 %v2002
        %v2041 = vpop.f32.mrb[0].mxu0
        %v2042 = vadd.f32 0.0, %v2041
        %v2043 = vpop.f32.mrb[0].mxu0
        %v2044 = vpop.f32.mrb[0].mxu0
        %v2045 = vpop.f32.mrb[0].mxu0
        %2046 = vdwg.mxu0
        %v2047 = vmul.f32 %v1904, 0.35355338
        %v2048 = vmul.f32 %v1950, 0.35355338
        %v2049 = vmul.f32 %v1996, 0.35355338
        %v2050 = vmul.f32 %v2042, 0.35355338
        %v2051 = vadd.f32 %v2047, %v1309
        %v2052 = vadd.f32 %v2048, %v1309
        %v2053 = vadd.f32 %v2049, %v1309
        %v2054 = vadd.f32 %v2050, %v1309
        %v2055 = vsel %vm1862, %v2051, -inf
        %2056 = vmax.xlane.f32.xlu0 %v2055
        %v2057 = vpop.xlane.xlu0 %2056
        %v2058 = vsel %vm1862, %v2052, -inf
        %2059 = vmax.xlane.f32.xlu0 %v2058
        %v2060 = vpop.xlane.xlu0 %2059
        %v2061 = vsel %vm1862, %v2053, -inf
        %2062 = vmax.xlane.f32.xlu0 %v2061
        %v2063 = vpop.xlane.xlu0 %2062
        %v2064 = vsel %vm1862, %v2054, -inf
        %2065 = vmax.xlane.f32.xlu0 %v2064
        %v2066 = vpop.xlane.xlu0 %2065
        %v2067 = vsub.f32 %v2051, %v2057
        %v2068 = vsub.f32 %v2052, %v2060
        %v2069 = vsub.f32 %v2053, %v2063
        %v2070 = vsub.f32 %v2054, %v2066
        %v2071 = vmul.f32 %v2067, 1.442695
        %v2072 = vpow.pop %v2071
        %v2073 = vmul.f32 %v2068, 1.442695
        %v2074 = vpow.pop %v2073
        %v2075 = vmul.f32 %v2069, 1.442695
        %v2076 = vpow.pop %v2075
        %v2077 = vmul.f32 %v2070, 1.442695
        %v2078 = vpow.pop %v2077
        %v2079 = vsel %vm1862, %v2072, 0.0
        %2080 = vadd.xlane.f32.xlu0 %v2079
        %v2081 = vpop.xlane.xlu0 %2080
        %v2082 = vsel %vm1862, %v2074, 0.0
        %2083 = vadd.xlane.f32.xlu0 %v2082
        %v2084 = vpop.xlane.xlu0 %2083
        %v2085 = vsel %vm1862, %v2076, 0.0
        %2086 = vadd.xlane.f32.xlu0 %v2085
        %v2087 = vpop.xlane.xlu0 %2086
        %v2088 = vsel %vm1862, %v2078, 0.0
        %2089 = vadd.xlane.f32.xlu0 %v2088
        %v2090 = vpop.xlane.xlu0 %2089
        %v2091 = vrcp.pop %v2081
        %v2092 = vmul.f32 %v2072, %v2091
        %v2093 = vrcp.pop %v2084
        %v2094 = vmul.f32 %v2074, %v2093
        %v2095 = vrcp.pop %v2087
        %v2096 = vmul.f32 %v2076, %v2095
        %v2097 = vrcp.pop %v2090
        %v2098 = vmul.f32 %v2078, %v2097
        %v2099 = vpack.c.bf16 %v2092, %v2092
        %v2100 = vpack.c.bf16 %v2094, %v2094
        %v2101 = vpack.c.bf16 %v2096, %v2096
        %v2102 = vpack.c.bf16 %v2098, %v2098
        %v2104 = vsel %vm1862, %v2099, 0
        %vm2106 = vcmask 1043456
        %v2108 = vsel %vm2106, %v1858, 0
        %2110 = vmatprep.subr.bf16.mxu0 0
        %2111 = vmatpush1.bf16.msra.mxu0 %v2108
        %2112 = vmatprep.subr.bf16.mxu0 0
        %2113 = vmatpush1.bf16.msra.mxu0 0
        %2114 = vmatprep.subr.bf16.mxu0 0
        %2115 = vmatpush1.bf16.msra.mxu0 0
        %2116 = vmatprep.subr.bf16.mxu0 0
        %2117 = vmatpush1.bf16.msra.mxu0 0
        %2118 = vmatprep.subr.bf16.mxu0 0
        %2119 = vmatpush1.bf16.msra.mxu0 0
        %2120 = vmatprep.subr.bf16.mxu0 0
        %2121 = vmatpush1.bf16.msra.mxu0 0
        %2122 = vmatprep.subr.bf16.mxu0 0
        %2123 = vmatpush1.bf16.msra.mxu0 0
        %2124 = vmatprep.subr.bf16.mxu0 0
        %2125 = vmatpush1.bf16.msra.mxu0 0
        %2126 = vmatprep.subr.bf16.mxu0 0
        %2127 = vmatpush1.bf16.msra.mxu0 0
        %2128 = vmatprep.subr.bf16.mxu0 0
        %2129 = vmatpush1.bf16.msra.mxu0 0
        %2130 = vmatprep.subr.bf16.mxu0 0
        %2131 = vmatpush1.bf16.msra.mxu0 0
        %2132 = vmatprep.subr.bf16.mxu0 0
        %2133 = vmatpush1.bf16.msra.mxu0 0
        %2134 = vmatprep.subr.bf16.mxu0 0
        %2135 = vmatpush1.bf16.msra.mxu0 0
        %2136 = vmatprep.subr.bf16.mxu0 0
        %2137 = vmatpush1.bf16.msra.mxu0 0
        %2138 = vmatprep.subr.bf16.mxu0 0
        %2139 = vmatpush1.bf16.msra.mxu0 0
        %2140 = vmatprep.subr.bf16.mxu0 0
        %2141 = vmatpush1.bf16.msra.mxu0 0
        %2142 = vmatprep.mubr.bf16.mxu0 0
        %2143 = vmatmul.mubr.bf16.gmra.mrb[0].mxu0 %v2104
        %v2144 = vpop.f32.mrb[0].mxu0
        %v2145 = vadd.f32 0.0, %v2144
        %v2146 = vpop.f32.mrb[0].mxu0
        %v2147 = vpop.f32.mrb[0].mxu0
        %v2148 = vpop.f32.mrb[0].mxu0
        %2149 = vdwg.mxu0
        %v2151 = vsel %vm1862, %v2100, 0
        %v2154 = vsel %vm2106, %v1859, 0
        %2156 = vmatprep.subr.bf16.mxu0 0
        %2157 = vmatpush1.bf16.msra.mxu0 %v2154
        %2158 = vmatprep.subr.bf16.mxu0 0
        %2159 = vmatpush1.bf16.msra.mxu0 0
        %2160 = vmatprep.subr.bf16.mxu0 0
        %2161 = vmatpush1.bf16.msra.mxu0 0
        %2162 = vmatprep.subr.bf16.mxu0 0
        %2163 = vmatpush1.bf16.msra.mxu0 0
        %2164 = vmatprep.subr.bf16.mxu0 0
        %2165 = vmatpush1.bf16.msra.mxu0 0
        %2166 = vmatprep.subr.bf16.mxu0 0
        %2167 = vmatpush1.bf16.msra.mxu0 0
        %2168 = vmatprep.subr.bf16.mxu0 0
        %2169 = vmatpush1.bf16.msra.mxu0 0
        %2170 = vmatprep.subr.bf16.mxu0 0
        %2171 = vmatpush1.bf16.msra.mxu0 0
        %2172 = vmatprep.subr.bf16.mxu0 0
        %2173 = vmatpush1.bf16.msra.mxu0 0
        %2174 = vmatprep.subr.bf16.mxu0 0
        %2175 = vmatpush1.bf16.msra.mxu0 0
        %2176 = vmatprep.subr.bf16.mxu0 0
        %2177 = vmatpush1.bf16.msra.mxu0 0
        %2178 = vmatprep.subr.bf16.mxu0 0
        %2179 = vmatpush1.bf16.msra.mxu0 0
        %2180 = vmatprep.subr.bf16.mxu0 0
        %2181 = vmatpush1.bf16.msra.mxu0 0
        %2182 = vmatprep.subr.bf16.mxu0 0
        %2183 = vmatpush1.bf16.msra.mxu0 0
        %2184 = vmatprep.subr.bf16.mxu0 0
        %2185 = vmatpush1.bf16.msra.mxu0 0
        %2186 = vmatprep.subr.bf16.mxu0 0
        %2187 = vmatpush1.bf16.msra.mxu0 0
        %2188 = vmatprep.mubr.bf16.mxu0 0
        %2189 = vmatmul.mubr.bf16.gmra.mrb[0].mxu0 %v2151
        %v2190 = vpop.f32.mrb[0].mxu0
        %v2191 = vadd.f32 0.0, %v2190
        %v2192 = vpop.f32.mrb[0].mxu0
        %v2193 = vpop.f32.mrb[0].mxu0
        %v2194 = vpop.f32.mrb[0].mxu0
        %2195 = vdwg.mxu0
        %v2197 = vsel %vm1862, %v2101, 0
        %v2200 = vsel %vm2106, %v1860, 0
        %2202 = vmatprep.subr.bf16.mxu0 0
        %2203 = vmatpush1.bf16.msra.mxu0 %v2200
        %2204 = vmatprep.subr.bf16.mxu0 0
        %2205 = vmatpush1.bf16.msra.mxu0 0
        %2206 = vmatprep.subr.bf16.mxu0 0
        %2207 = vmatpush1.bf16.msra.mxu0 0
        %2208 = vmatprep.subr.bf16.mxu0 0
        %2209 = vmatpush1.bf16.msra.mxu0 0
        %2210 = vmatprep.subr.bf16.mxu0 0
        %2211 = vmatpush1.bf16.msra.mxu0 0
        %2212 = vmatprep.subr.bf16.mxu0 0
        %2213 = vmatpush1.bf16.msra.mxu0 0
        %2214 = vmatprep.subr.bf16.mxu0 0
        %2215 = vmatpush1.bf16.msra.mxu0 0
        %2216 = vmatprep.subr.bf16.mxu0 0
        %2217 = vmatpush1.bf16.msra.mxu0 0
        %2218 = vmatprep.subr.bf16.mxu0 0
        %2219 = vmatpush1.bf16.msra.mxu0 0
        %2220 = vmatprep.subr.bf16.mxu0 0
        %2221 = vmatpush1.bf16.msra.mxu0 0
        %2222 = vmatprep.subr.bf16.mxu0 0
        %2223 = vmatpush1.bf16.msra.mxu0 0
        %2224 = vmatprep.subr.bf16.mxu0 0
        %2225 = vmatpush1.bf16.msra.mxu0 0
        %2226 = vmatprep.subr.bf16.mxu0 0
        %2227 = vmatpush1.bf16.msra.mxu0 0
        %2228 = vmatprep.subr.bf16.mxu0 0
        %2229 = vmatpush1.bf16.msra.mxu0 0
        %2230 = vmatprep.subr.bf16.mxu0 0
        %2231 = vmatpush1.bf16.msra.mxu0 0
        %2232 = vmatprep.subr.bf16.mxu0 0
        %2233 = vmatpush1.bf16.msra.mxu0 0
        %2234 = vmatprep.mubr.bf16.mxu0 0
        %2235 = vmatmul.mubr.bf16.gmra.mrb[0].mxu0 %v2197
        %v2236 = vpop.f32.mrb[0].mxu0
        %v2237 = vadd.f32 0.0, %v2236
        %v2238 = vpop.f32.mrb[0].mxu0
        %v2239 = vpop.f32.mrb[0].mxu0
        %v2240 = vpop.f32.mrb[0].mxu0
        %2241 = vdwg.mxu0
        %v2243 = vsel %vm1862, %v2102, 0
        %v2246 = vsel %vm2106, %v1861, 0
        %2248 = vmatprep.subr.bf16.mxu0 0
        %2249 = vmatpush1.bf16.msra.mxu0 %v2246
        %2250 = vmatprep.subr.bf16.mxu0 0
        %2251 = vmatpush1.bf16.msra.mxu0 0
        %2252 = vmatprep.subr.bf16.mxu0 0
        %2253 = vmatpush1.bf16.msra.mxu0 0
        %2254 = vmatprep.subr.bf16.mxu0 0
        %2255 = vmatpush1.bf16.msra.mxu0 0
        %2256 = vmatprep.subr.bf16.mxu0 0
        %2257 = vmatpush1.bf16.msra.mxu0 0
        %2258 = vmatprep.subr.bf16.mxu0 0
        %2259 = vmatpush1.bf16.msra.mxu0 0
        %2260 = vmatprep.subr.bf16.mxu0 0
        %2261 = vmatpush1.bf16.msra.mxu0 0
        %2262 = vmatprep.subr.bf16.mxu0 0
        %2263 = vmatpush1.bf16.msra.mxu0 0
        %2264 = vmatprep.subr.bf16.mxu0 0
        %2265 = vmatpush1.bf16.msra.mxu0 0
        %2266 = vmatprep.subr.bf16.mxu0 0
        %2267 = vmatpush1.bf16.msra.mxu0 0
        %2268 = vmatprep.subr.bf16.mxu0 0
        %2269 = vmatpush1.bf16.msra.mxu0 0
        %2270 = vmatprep.subr.bf16.mxu0 0
        %2271 = vmatpush1.bf16.msra.mxu0 0
        %2272 = vmatprep.subr.bf16.mxu0 0
        %2273 = vmatpush1.bf16.msra.mxu0 0
        %2274 = vmatprep.subr.bf16.mxu0 0
        %2275 = vmatpush1.bf16.msra.mxu0 0
        %2276 = vmatprep.subr.bf16.mxu0 0
        %2277 = vmatpush1.bf16.msra.mxu0 0
        %2278 = vmatprep.subr.bf16.mxu0 0
        %2279 = vmatpush1.bf16.msra.mxu0 0
        %2280 = vmatprep.mubr.bf16.mxu0 0
        %2281 = vmatmul.mubr.bf16.gmra.mrb[0].mxu0 %v2243
        %v2282 = vpop.f32.mrb[0].mxu0
        %v2283 = vadd.f32 0.0, %v2282
        %v2284 = vpop.f32.mrb[0].mxu0
        %v2285 = vpop.f32.mrb[0].mxu0
        %v2286 = vpop.f32.mrb[0].mxu0
        %2287 = vdwg.mxu0
        %v2288 = vcombine.low %v2145, %v2237
        %v2289 = vcombine.high %v2145, %v2237
        %v2291 = vunpack.c.l.s4 1983009808
        %v2292 = vunpack.c.0.s8 %v2291
        %v2293 = vlaneseq
        %v2294 = vshrl.u32 %v2293, 7
        %v2295 = vsub.s32 %v2292, %v2294
        %v2296 = vrot.slane %v2288, %v2295
        %v2298 = vunpack.c.l.s4 1983009808
        %v2299 = vunpack.c.0.s8 %v2298
        %v2300 = vlaneseq
        %v2301 = vshrl.u32 %v2300, 7
        %v2302 = vsub.s32 %v2299, %v2301
        %v2303 = vrot.slane %v2289, %v2302
        %v2304 = vcombine.low %v2191, %v2283
        %v2305 = vcombine.high %v2191, %v2283
        %v2307 = vunpack.c.l.s4 1983009808
        %v2308 = vunpack.c.0.s8 %v2307
        %v2309 = vlaneseq
        %v2310 = vshrl.u32 %v2309, 7
        %v2311 = vsub.s32 %v2308, %v2310
        %v2312 = vrot.slane %v2304, %v2311
        %v2314 = vunpack.c.l.s4 1983009808
        %v2315 = vunpack.c.0.s8 %v2314
        %v2316 = vlaneseq
        %v2317 = vshrl.u32 %v2316, 7
        %v2318 = vsub.s32 %v2315, %v2317
        %v2319 = vrot.slane %v2305, %v2318
        %v2320 = vcombine.low %v2296, %v2312
        %v2321 = vcombine.high %v2296, %v2312
        %v2323 = vunpack.c.l.s4 1934713408
        %v2324 = vunpack.c.0.s8 %v2323
        %v2325 = vlaneseq
        %v2326 = vshrl.u32 %v2325, 7
        %v2327 = vsub.s32 %v2324, %v2326
        %v2328 = vrot.slane %v2320, %v2327
        %v2330 = vunpack.c.l.s4 1934713408
        %v2331 = vunpack.c.0.s8 %v2330
        %v2332 = vlaneseq
        %v2333 = vshrl.u32 %v2332, 7
        %v2334 = vsub.s32 %v2331, %v2333
        %v2335 = vrot.slane %v2321, %v2334
        %v2336 = vcombine.low %v2303, %v2319
        %v2337 = vcombine.high %v2303, %v2319
        %v2339 = vunpack.c.l.s4 1934713408
        %v2340 = vunpack.c.0.s8 %v2339
        %v2341 = vlaneseq
        %v2342 = vshrl.u32 %v2341, 7
        %v2343 = vsub.s32 %v2340, %v2342
        %v2344 = vrot.slane %v2336, %v2343
        %v2346 = vunpack.c.l.s4 1934713408
        %v2347 = vunpack.c.0.s8 %v2346
        %v2348 = vlaneseq
        %v2349 = vshrl.u32 %v2348, 7
        %v2350 = vsub.s32 %v2347, %v2349
        %v2351 = vrot.slane %v2337, %v2350
        %v2352 = vcombine.high %v2328, 0.0
        %v2353 = vcombine.high %v2335, 0.0
        %v2354 = vcombine.high %v2344, 0.0
        %v2355 = vcombine.high %v2351, 0.0
        %v2356 = vcombine.low %v2328, %v2335
        %v2358 = vunpack.c.l.s4 1983009808
        %v2359 = vunpack.c.0.s8 %v2358
        %v2360 = vlaneseq
        %v2361 = vshrl.u32 %v2360, 7
        %v2362 = vsub.s32 %v2359, %v2361
        %v2363 = vrot.slane %v2356, %v2362
        %v2364 = vcombine.low %v2352, %v2353
        %v2366 = vunpack.c.l.s4 1983009808
        %v2367 = vunpack.c.0.s8 %v2366
        %v2368 = vlaneseq
        %v2369 = vshrl.u32 %v2368, 7
        %v2370 = vsub.s32 %v2367, %v2369
        %v2371 = vrot.slane %v2364, %v2370
        %v2372 = vcombine.low %v2344, %v2351
        %v2374 = vunpack.c.l.s4 1983009808
        %v2375 = vunpack.c.0.s8 %v2374
        %v2376 = vlaneseq
        %v2377 = vshrl.u32 %v2376, 7
        %v2378 = vsub.s32 %v2375, %v2377
        %v2379 = vrot.slane %v2372, %v2378
        %v2380 = vcombine.low %v2354, %v2355
        %v2382 = vunpack.c.l.s4 1983009808
        %v2383 = vunpack.c.0.s8 %v2382
        %v2384 = vlaneseq
        %v2385 = vshrl.u32 %v2384, 7
        %v2386 = vsub.s32 %v2383, %v2385
        %v2387 = vrot.slane %v2380, %v2386
        %v2388 = vcombine.low %v2363, %v2371
        %v2389 = vcombine.high %v2363, %v2371
        %v2391 = vunpack.c.l.s4 1934713408
        %v2392 = vunpack.c.0.s8 %v2391
        %v2393 = vlaneseq
        %v2394 = vshrl.u32 %v2393, 7
        %v2395 = vsub.s32 %v2392, %v2394
        %v2396 = vrot.slane %v2388, %v2395
        %v2398 = vunpack.c.l.s4 1934713408
        %v2399 = vunpack.c.0.s8 %v2398
        %v2400 = vlaneseq
        %v2401 = vshrl.u32 %v2400, 7
        %v2402 = vsub.s32 %v2399, %v2401
        %v2403 = vrot.slane %v2389, %v2402
        %v2404 = vcombine.low %v2379, %v2387
        %v2405 = vcombine.high %v2379, %v2387
        %v2407 = vunpack.c.l.s4 1934713408
        %v2408 = vunpack.c.0.s8 %v2407
        %v2409 = vlaneseq
        %v2410 = vshrl.u32 %v2409, 7
        %v2411 = vsub.s32 %v2408, %v2410
        %v2412 = vrot.slane %v2404, %v2411
        %v2414 = vunpack.c.l.s4 1934713408
        %v2415 = vunpack.c.0.s8 %v2414
        %v2416 = vlaneseq
        %v2417 = vshrl.u32 %v2416, 7
        %v2418 = vsub.s32 %v2415, %v2417
        %v2419 = vrot.slane %v2405, %v2418
        %v2420 = vcombine.low %v2396, %v2412
        %v2421 = vcombine.high %v2396, %v2412
        %v2422 = vcombine.low %v2403, %v2419
        %v2423 = vcombine.high %v2403, %v2419
        %2425 = vrot.lane.b32.xlu0 %v2421, 8
        %v2426 = vpop.permute.xlu0 %2425
        %2429 = vrot.lane.b32.xlu0 %v2422, 16
        %v2430 = vpop.permute.xlu0 %2429
        %2433 = vrot.lane.b32.xlu0 %v2423, 24
        %v2434 = vpop.permute.xlu0 %2433
        %v2436 = vsel %vm1862, %v2420, %v2426
        %vm2437 = vcmask 130048
        %v2438 = vsel %vm2437, %v2436, %v2430
        %vm2439 = vcmask 195584
        %v2440 = vsel %vm2439, %v2438, %v2434
        %v2441 = vpack.c.bf16 %v2440, %v2440
        %v2442 = vld [vmem:[%s1047] sm:$0xf]
        %v2443 = vld [vmem:[%s1047 + $0x4] sm:$0xf]
        %v2444 = vld [vmem:[%s1047 + $0x8] sm:$0xf]
        %v2445 = vld [vmem:[%s1047 + $0xc] sm:$0xf]
        %v2446 = vld [vmem:[%s1055] sm:$0x1]
        %v2448 = vlaneseq
        %v2449 = vshrl.u32 %v2448, 7
        %v2450 = vsub.s32 0, %v2449
        %v2451 = vrot.slane %v2446, %v2450
        %v2457 = vunpack.c.l.b16 %v2442
        %v2458 = vunpack.c.l.b16 %v2443
        %v2459 = vunpack.c.l.b16 %v2444
        %v2460 = vunpack.c.l.b16 %v2445
        %v2461 = vpack.c.b16 %v2458, %v2457
        %v2462 = vpack.c.b16 %v2460, %v2459
        %v2466 = vsel %vm1314, %v2441, 0
        %2468 = vmatprep.subr.bf16.mxu0 0
        %2469 = vmatpush1.bf16.msra.mxu0 %v2461
        %2470 = vmatprep.subr.bf16.mxu0 0
        %2471 = vmatpush1.bf16.msra.mxu0 %v2462
        %2472 = vmatprep.subr.bf16.mxu0 0
        %2473 = vmatpush1.bf16.msra.mxu0 0
        %2474 = vmatprep.subr.bf16.mxu0 0
        %2475 = vmatpush1.bf16.msra.mxu0 0
        %2476 = vmatprep.subr.bf16.mxu0 0
        %2477 = vmatpush1.bf16.msra.mxu0 0
        %2478 = vmatprep.subr.bf16.mxu0 0
        %2479 = vmatpush1.bf16.msra.mxu0 0
        %2480 = vmatprep.subr.bf16.mxu0 0
        %2481 = vmatpush1.bf16.msra.mxu0 0
        %2482 = vmatprep.subr.bf16.mxu0 0
        %2483 = vmatpush1.bf16.msra.mxu0 0
        %2484 = vmatprep.subr.bf16.mxu0 0
        %2485 = vmatpush1.bf16.msra.mxu0 0
        %2486 = vmatprep.subr.bf16.mxu0 0
        %2487 = vmatpush1.bf16.msra.mxu0 0
        %2488 = vmatprep.subr.bf16.mxu0 0
        %2489 = vmatpush1.bf16.msra.mxu0 0
        %2490 = vmatprep.subr.bf16.mxu0 0
        %2491 = vmatpush1.bf16.msra.mxu0 0
        %2492 = vmatprep.subr.bf16.mxu0 0
        %2493 = vmatpush1.bf16.msra.mxu0 0
        %2494 = vmatprep.subr.bf16.mxu0 0
        %2495 = vmatpush1.bf16.msra.mxu0 0
        %2496 = vmatprep.subr.bf16.mxu0 0
        %2497 = vmatpush1.bf16.msra.mxu0 0
        %2498 = vmatprep.subr.bf16.mxu0 0
        %2499 = vmatpush1.bf16.msra.mxu0 0
        %2500 = vmatprep.mubr.bf16.mxu0 0
        %2501 = vmatmul.mubr.bf16.gmra.mrb[0].mxu0 %v2466
        %v2502 = vpop.f32.mrb[0].mxu0
        %v2503 = vadd.f32 %v2451, %v2502
        %v2504 = vpop.f32.mrb[0].mxu0
        %v2505 = vpop.f32.mrb[0].mxu0
        %v2506 = vpop.f32.mrb[0].mxu0
        %2507 = vdwg.mxu0
        %v2508 = vadd.f32 %v1290, %v2503
        %s2509 = sadd.s32 %s1310, 2
        %s2510 = sld [smem:[#allocation32 + %s2509]]
        %s2511 = sadd.s32 %s1310, 3
        %s2512 = sld [smem:[#allocation32 + %s2511]]
        %v2513 = vsel %vm1314, %v2508, 0.0
        %2514 = vadd.xlane.f32.xlu0 %v2513
        %v2515 = vpop.xlane.xlu0 %2514
        %v2516 = vmul.f32 %v2515, %v1318
        %v2517 = vsub.f32 %v2508, %v2516
        %v2518 = vmul.f32 %v2517, %v2517
        %v2519 = vsel %vm1314, %v2518, 0.0
        %2520 = vadd.xlane.f32.xlu0 %v2519
        %v2521 = vpop.xlane.xlu0 %2520
        %v2522 = vmul.f32 %v2521, %v1325
        %v2523 = vstv %s2510
        %v2524 = vmul.f32 %v2523, %v2517
        %v2525 = vrsqrt.pop %v2522
        %v2526 = vmul.f32 %v2522, %v2525
        %vm2527 = vcmp.eq.f32.partialorder %v2522, inf
        %v2528 = vsel %vm2527, %v2522, %v2526
        %vm2529 = vcmp.eq.f32.partialorder %v2522, 0.0
        %v2530 = vand.u32 %v2522, 2147483648
        %v2531 = vsel %vm2529, %v2530, %v2528
        %v2532 = vadd.f32 %v2531, 1e-06
        %v2533 = vrcp.pop %v2532
        %v2534 = vmul.f32 %v2524, %v2533
        %v2535 = vstv %s2512
        %v2536 = vadd.f32 %v2534, %v2535
        %v2537 = vpack.c.bf16 %v2536, %v2536
        %v2538 = vld [vmem:[%s1064] sm:$0xf]
        %v2539 = vld [vmem:[%s1064 + $0x4] sm:$0xf]
        %v2540 = vld [vmem:[%s1064 + $0x8] sm:$0xf]
        %v2541 = vld [vmem:[%s1064 + $0xc] sm:$0xf]
        %v2542 = vld [vmem:[%s1072] sm:$0x1]
        %v2544 = vlaneseq
        %v2545 = vshrl.u32 %v2544, 7
        %v2546 = vsub.s32 0, %v2545
        %v2547 = vrot.slane %v2542, %v2546
        %v2553 = vunpack.c.l.b16 %v2538
        %v2554 = vunpack.c.l.b16 %v2539
        %v2555 = vunpack.c.l.b16 %v2540
        %v2556 = vunpack.c.l.b16 %v2541
        %v2557 = vpack.c.b16 %v2554, %v2553
        %v2558 = vpack.c.b16 %v2556, %v2555
        %v2562 = vsel %vm1314, %v2537, 0
        %2564 = vmatprep.subr.bf16.mxu0 0
        %2565 = vmatpush1.bf16.msra.mxu0 %v2557
        %2566 = vmatprep.subr.bf16.mxu0 0
        %2567 = vmatpush1.bf16.msra.mxu0 %v2558
        %2568 = vmatprep.subr.bf16.mxu0 0
        %2569 = vmatpush1.bf16.msra.mxu0 0
        %2570 = vmatprep.subr.bf16.mxu0 0
        %2571 = vmatpush1.bf16.msra.mxu0 0
        %2572 = vmatprep.subr.bf16.mxu0 0
        %2573 = vmatpush1.bf16.msra.mxu0 0
        %2574 = vmatprep.subr.bf16.mxu0 0
        %2575 = vmatpush1.bf16.msra.mxu0 0
        %2576 = vmatprep.subr.bf16.mxu0 0
        %2577 = vmatpush1.bf16.msra.mxu0 0
        %2578 = vmatprep.subr.bf16.mxu0 0
        %2579 = vmatpush1.bf16.msra.mxu0 0
        %2580 = vmatprep.subr.bf16.mxu0 0
        %2581 = vmatpush1.bf16.msra.mxu0 0
        %2582 = vmatprep.subr.bf16.mxu0 0
        %2583 = vmatpush1.bf16.msra.mxu0 0
        %2584 = vmatprep.subr.bf16.mxu0 0
        %2585 = vmatpush1.bf16.msra.mxu0 0
        %2586 = vmatprep.subr.bf16.mxu0 0
        %2587 = vmatpush1.bf16.msra.mxu0 0
        %2588 = vmatprep.subr.bf16.mxu0 0
        %2589 = vmatpush1.bf16.msra.mxu0 0
        %2590 = vmatprep.subr.bf16.mxu0 0
        %2591 = vmatpush1.bf16.msra.mxu0 0
        %2592 = vmatprep.subr.bf16.mxu0 0
        %2593 = vmatpush1.bf16.msra.mxu0 0
        %2594 = vmatprep.subr.bf16.mxu0 0
        %2595 = vmatpush1.bf16.msra.mxu0 0
        %2596 = vmatprep.mubr.bf16.mxu0 0
        %2597 = vmatmul.mubr.bf16.gmra.mrb[0].mxu0 %v2562
        %v2598 = vpop.f32.mrb[0].mxu0
        %v2599 = vadd.f32 %v2547, %v2598
        %v2600 = vpop.f32.mrb[0].mxu0
        %v2601 = vpop.f32.mrb[0].mxu0
        %v2602 = vpop.f32.mrb[0].mxu0
        %2603 = vdwg.mxu0
        %v2604 = vld [vmem:[%s1005] sm:$0xff]
        %v2605 = vld [vmem:[%s1005 + $0x8] sm:$0xff]
        %v2606 = vpack.c.bf16 %v2605, %v2604
        %v2607 = vld [vmem:[%s1081] sm:$0xf]
        %v2608 = vld [vmem:[%s1081 + $0x4] sm:$0xf]
        %v2609 = vld [vmem:[%s1081 + $0x8] sm:$0xf]
        %v2610 = vld [vmem:[%s1081 + $0xc] sm:$0xf]
        %v2611 = vld [vmem:[%s1089] sm:$0x1]
        %v2613 = vlaneseq
        %v2614 = vshrl.u32 %v2613, 7
        %v2615 = vsub.s32 0, %v2614
        %v2616 = vrot.slane %v2611, %v2615
        %v2622 = vunpack.c.l.b16 %v2607
        %v2623 = vunpack.c.l.b16 %v2608
        %v2624 = vunpack.c.l.b16 %v2609
        %v2625 = vunpack.c.l.b16 %v2610
        %v2626 = vpack.c.b16 %v2623, %v2622
        %v2627 = vpack.c.b16 %v2625, %v2624
        %v2631 = vsel %vm1314, %v2606, 0
        %2633 = vmatprep.subr.bf16.mxu0 0
        %2634 = vmatpush1.bf16.msra.mxu0 %v2626
        %2635 = vmatprep.subr.bf16.mxu0 0
        %2636 = vmatpush1.bf16.msra.mxu0 %v2627
        %2637 = vmatprep.subr.bf16.mxu0 0
        %2638 = vmatpush1.bf16.msra.mxu0 0
        %2639 = vmatprep.subr.bf16.mxu0 0
        %2640 = vmatpush1.bf16.msra.mxu0 0
        %2641 = vmatprep.subr.bf16.mxu0 0
        %2642 = vmatpush1.bf16.msra.mxu0 0
        %2643 = vmatprep.subr.bf16.mxu0 0
        %2644 = vmatpush1.bf16.msra.mxu0 0
        %2645 = vmatprep.subr.bf16.mxu0 0
        %2646 = vmatpush1.bf16.msra.mxu0 0
        %2647 = vmatprep.subr.bf16.mxu0 0
        %2648 = vmatpush1.bf16.msra.mxu0 0
        %2649 = vmatprep.subr.bf16.mxu0 0
        %2650 = vmatpush1.bf16.msra.mxu0 0
        %2651 = vmatprep.subr.bf16.mxu0 0
        %2652 = vmatpush1.bf16.msra.mxu0 0
        %2653 = vmatprep.subr.bf16.mxu0 0
        %2654 = vmatpush1.bf16.msra.mxu0 0
        %2655 = vmatprep.subr.bf16.mxu0 0
        %2656 = vmatpush1.bf16.msra.mxu0 0
        %2657 = vmatprep.subr.bf16.mxu0 0
        %2658 = vmatpush1.bf16.msra.mxu0 0
        %2659 = vmatprep.subr.bf16.mxu0 0
        %2660 = vmatpush1.bf16.msra.mxu0 0
        %2661 = vmatprep.subr.bf16.mxu0 0
        %2662 = vmatpush1.bf16.msra.mxu0 0
        %2663 = vmatprep.subr.bf16.mxu0 0
        %2664 = vmatpush1.bf16.msra.mxu0 0
        %2665 = vmatprep.mubr.bf16.mxu0 0
        %2666 = vmatmul.mubr.bf16.gmra.mrb[0].mxu0 %v2631
        %v2667 = vpop.f32.mrb[0].mxu0
        %v2668 = vadd.f32 %v2616, %v2667
        %v2669 = vpop.f32.mrb[0].mxu0
        %v2670 = vpop.f32.mrb[0].mxu0
        %v2671 = vadd.f32 %v2616, %v2670
        %v2672 = vpop.f32.mrb[0].mxu0
        %2673 = vdwg.mxu0
        %2675 = vrot.lane.b32.xlu0 %v2599, 120
        %v2676 = vpop.permute.xlu0 %2675
        %2678 = vrot.lane.b32.xlu0 %v2599, 112
        %v2679 = vpop.permute.xlu0 %2678
        %2681 = vrot.lane.b32.xlu0 %v2599, 104
        %v2682 = vpop.permute.xlu0 %2681
        %v2684 = vcombine.low %v2599, %v2679
        %v2685 = vcombine.high %v2599, %v2679
        %v2687 = vunpack.c.l.s4 1983009808
        %v2688 = vunpack.c.0.s8 %v2687
        %v2689 = vlaneseq
        %v2690 = vshrl.u32 %v2689, 7
        %v2691 = vsub.s32 %v2688, %v2690
        %v2692 = vrot.slane %v2684, %v2691
        %v2694 = vunpack.c.l.s4 1983009808
        %v2695 = vunpack.c.0.s8 %v2694
        %v2696 = vlaneseq
        %v2697 = vshrl.u32 %v2696, 7
        %v2698 = vsub.s32 %v2695, %v2697
        %v2699 = vrot.slane %v2685, %v2698
        %v2700 = vcombine.low %v2676, %v2682
        %v2701 = vcombine.high %v2676, %v2682
        %v2703 = vunpack.c.l.s4 1983009808
        %v2704 = vunpack.c.0.s8 %v2703
        %v2705 = vlaneseq
        %v2706 = vshrl.u32 %v2705, 7
        %v2707 = vsub.s32 %v2704, %v2706
        %v2708 = vrot.slane %v2700, %v2707
        %v2710 = vunpack.c.l.s4 1983009808
        %v2711 = vunpack.c.0.s8 %v2710
        %v2712 = vlaneseq
        %v2713 = vshrl.u32 %v2712, 7
        %v2714 = vsub.s32 %v2711, %v2713
        %v2715 = vrot.slane %v2701, %v2714
        %v2716 = vcombine.low %v2692, %v2708
        %v2717 = vcombine.high %v2692, %v2708
        %v2719 = vunpack.c.l.s4 1934713408
        %v2720 = vunpack.c.0.s8 %v2719
        %v2721 = vlaneseq
        %v2722 = vshrl.u32 %v2721, 7
        %v2723 = vsub.s32 %v2720, %v2722
        %v2724 = vrot.slane %v2716, %v2723
        %v2726 = vunpack.c.l.s4 1934713408
        %v2727 = vunpack.c.0.s8 %v2726
        %v2728 = vlaneseq
        %v2729 = vshrl.u32 %v2728, 7
        %v2730 = vsub.s32 %v2727, %v2729
        %v2731 = vrot.slane %v2717, %v2730
        %v2732 = vcombine.low %v2699, %v2715
        %v2733 = vcombine.high %v2699, %v2715
        %v2735 = vunpack.c.l.s4 1934713408
        %v2736 = vunpack.c.0.s8 %v2735
        %v2737 = vlaneseq
        %v2738 = vshrl.u32 %v2737, 7
        %v2739 = vsub.s32 %v2736, %v2738
        %v2740 = vrot.slane %v2732, %v2739
        %v2742 = vunpack.c.l.s4 1934713408
        %v2743 = vunpack.c.0.s8 %v2742
        %v2744 = vlaneseq
        %v2745 = vshrl.u32 %v2744, 7
        %v2746 = vsub.s32 %v2743, %v2745
        %v2747 = vrot.slane %v2733, %v2746
        %v2748 = vcombine.high %v2724, 0.0
        %v2749 = vcombine.high %v2731, 0.0
        %v2750 = vcombine.high %v2740, 0.0
        %v2751 = vcombine.high %v2747, 0.0
        %v2752 = vcombine.low %v2724, %v2731
        %v2754 = vunpack.c.l.s4 1983009808
        %v2755 = vunpack.c.0.s8 %v2754
        %v2756 = vlaneseq
        %v2757 = vshrl.u32 %v2756, 7
        %v2758 = vsub.s32 %v2755, %v2757
        %v2759 = vrot.slane %v2752, %v2758
        %v2760 = vcombine.low %v2748, %v2749
        %v2762 = vunpack.c.l.s4 1983009808
        %v2763 = vunpack.c.0.s8 %v2762
        %v2764 = vlaneseq
        %v2765 = vshrl.u32 %v2764, 7
        %v2766 = vsub.s32 %v2763, %v2765
        %v2767 = vrot.slane %v2760, %v2766
        %v2768 = vcombine.low %v2740, %v2747
        %v2770 = vunpack.c.l.s4 1983009808
        %v2771 = vunpack.c.0.s8 %v2770
        %v2772 = vlaneseq
        %v2773 = vshrl.u32 %v2772, 7
        %v2774 = vsub.s32 %v2771, %v2773
        %v2775 = vrot.slane %v2768, %v2774
        %v2776 = vcombine.low %v2750, %v2751
        %v2778 = vunpack.c.l.s4 1983009808
        %v2779 = vunpack.c.0.s8 %v2778
        %v2780 = vlaneseq
        %v2781 = vshrl.u32 %v2780, 7
        %v2782 = vsub.s32 %v2779, %v2781
        %v2783 = vrot.slane %v2776, %v2782
        %v2784 = vcombine.low %v2759, %v2767
        %v2785 = vcombine.high %v2759, %v2767
        %v2787 = vunpack.c.l.s4 1934713408
        %v2788 = vunpack.c.0.s8 %v2787
        %v2789 = vlaneseq
        %v2790 = vshrl.u32 %v2789, 7
        %v2791 = vsub.s32 %v2788, %v2790
        %v2792 = vrot.slane %v2784, %v2791
        %v2794 = vunpack.c.l.s4 1934713408
        %v2795 = vunpack.c.0.s8 %v2794
        %v2796 = vlaneseq
        %v2797 = vshrl.u32 %v2796, 7
        %v2798 = vsub.s32 %v2795, %v2797
        %v2799 = vrot.slane %v2785, %v2798
        %v2800 = vcombine.low %v2775, %v2783
        %v2801 = vcombine.high %v2775, %v2783
        %v2803 = vunpack.c.l.s4 1934713408
        %v2804 = vunpack.c.0.s8 %v2803
        %v2805 = vlaneseq
        %v2806 = vshrl.u32 %v2805, 7
        %v2807 = vsub.s32 %v2804, %v2806
        %v2808 = vrot.slane %v2800, %v2807
        %v2810 = vunpack.c.l.s4 1934713408
        %v2811 = vunpack.c.0.s8 %v2810
        %v2812 = vlaneseq
        %v2813 = vshrl.u32 %v2812, 7
        %v2814 = vsub.s32 %v2811, %v2813
        %v2815 = vrot.slane %v2801, %v2814
        %v2816 = vcombine.low %v2792, %v2808
        %v2817 = vcombine.high %v2792, %v2808
        %v2818 = vcombine.low %v2799, %v2815
        %v2819 = vcombine.high %v2799, %v2815
        %v2820 = vpack.c.bf16 %v2816, %v2816
        %v2821 = vpack.c.bf16 %v2817, %v2817
        %v2822 = vpack.c.bf16 %v2818, %v2818
        %v2823 = vpack.c.bf16 %v2819, %v2819
        %2826 = vrot.lane.b32.xlu0 %v2668, 120
        %v2827 = vpop.permute.xlu0 %2826
        %2828 = vrot.lane.b32.xlu0 %v2671, 120
        %v2829 = vpop.permute.xlu0 %2828
        %2832 = vrot.lane.b32.xlu0 %v2668, 112
        %v2833 = vpop.permute.xlu0 %2832
        %2834 = vrot.lane.b32.xlu0 %v2671, 112
        %v2835 = vpop.permute.xlu0 %2834
        %2838 = vrot.lane.b32.xlu0 %v2668, 104
        %v2839 = vpop.permute.xlu0 %2838
        %2840 = vrot.lane.b32.xlu0 %v2671, 104
        %v2841 = vpop.permute.xlu0 %2840
        %v2844 = vcombine.low %v2668, %v2833
        %v2845 = vcombine.high %v2668, %v2833
        %v2847 = vunpack.c.l.s4 1983009808
        %v2848 = vunpack.c.0.s8 %v2847
        %v2849 = vlaneseq
        %v2850 = vshrl.u32 %v2849, 7
        %v2851 = vsub.s32 %v2848, %v2850
        %v2852 = vrot.slane %v2844, %v2851
        %v2854 = vunpack.c.l.s4 1983009808
        %v2855 = vunpack.c.0.s8 %v2854
        %v2856 = vlaneseq
        %v2857 = vshrl.u32 %v2856, 7
        %v2858 = vsub.s32 %v2855, %v2857
        %v2859 = vrot.slane %v2845, %v2858
        %v2860 = vcombine.low %v2827, %v2839
        %v2861 = vcombine.high %v2827, %v2839
        %v2863 = vunpack.c.l.s4 1983009808
        %v2864 = vunpack.c.0.s8 %v2863
        %v2865 = vlaneseq
        %v2866 = vshrl.u32 %v2865, 7
        %v2867 = vsub.s32 %v2864, %v2866
        %v2868 = vrot.slane %v2860, %v2867
        %v2870 = vunpack.c.l.s4 1983009808
        %v2871 = vunpack.c.0.s8 %v2870
        %v2872 = vlaneseq
        %v2873 = vshrl.u32 %v2872, 7
        %v2874 = vsub.s32 %v2871, %v2873
        %v2875 = vrot.slane %v2861, %v2874
        %v2876 = vcombine.low %v2852, %v2868
        %v2877 = vcombine.high %v2852, %v2868
        %v2879 = vunpack.c.l.s4 1934713408
        %v2880 = vunpack.c.0.s8 %v2879
        %v2881 = vlaneseq
        %v2882 = vshrl.u32 %v2881, 7
        %v2883 = vsub.s32 %v2880, %v2882
        %v2884 = vrot.slane %v2876, %v2883
        %v2886 = vunpack.c.l.s4 1934713408
        %v2887 = vunpack.c.0.s8 %v2886
        %v2888 = vlaneseq
        %v2889 = vshrl.u32 %v2888, 7
        %v2890 = vsub.s32 %v2887, %v2889
        %v2891 = vrot.slane %v2877, %v2890
        %v2892 = vcombine.low %v2859, %v2875
        %v2893 = vcombine.high %v2859, %v2875
        %v2895 = vunpack.c.l.s4 1934713408
        %v2896 = vunpack.c.0.s8 %v2895
        %v2897 = vlaneseq
        %v2898 = vshrl.u32 %v2897, 7
        %v2899 = vsub.s32 %v2896, %v2898
        %v2900 = vrot.slane %v2892, %v2899
        %v2902 = vunpack.c.l.s4 1934713408
        %v2903 = vunpack.c.0.s8 %v2902
        %v2904 = vlaneseq
        %v2905 = vshrl.u32 %v2904, 7
        %v2906 = vsub.s32 %v2903, %v2905
        %v2907 = vrot.slane %v2893, %v2906
        %v2908 = vcombine.high %v2884, 0.0
        %v2909 = vcombine.high %v2891, 0.0
        %v2910 = vcombine.high %v2900, 0.0
        %v2911 = vcombine.high %v2907, 0.0
        %v2912 = vcombine.low %v2671, %v2835
        %v2913 = vcombine.high %v2671, %v2835
        %v2915 = vunpack.c.l.s4 1983009808
        %v2916 = vunpack.c.0.s8 %v2915
        %v2917 = vlaneseq
        %v2918 = vshrl.u32 %v2917, 7
        %v2919 = vsub.s32 %v2916, %v2918
        %v2920 = vrot.slane %v2912, %v2919
        %v2922 = vunpack.c.l.s4 1983009808
        %v2923 = vunpack.c.0.s8 %v2922
        %v2924 = vlaneseq
        %v2925 = vshrl.u32 %v2924, 7
        %v2926 = vsub.s32 %v2923, %v2925
        %v2927 = vrot.slane %v2913, %v2926
        %v2928 = vcombine.low %v2829, %v2841
        %v2929 = vcombine.high %v2829, %v2841
        %v2931 = vunpack.c.l.s4 1983009808
        %v2932 = vunpack.c.0.s8 %v2931
        %v2933 = vlaneseq
        %v2934 = vshrl.u32 %v2933, 7
        %v2935 = vsub.s32 %v2932, %v2934
        %v2936 = vrot.slane %v2928, %v2935
        %v2938 = vunpack.c.l.s4 1983009808
        %v2939 = vunpack.c.0.s8 %v2938
        %v2940 = vlaneseq
        %v2941 = vshrl.u32 %v2940, 7
        %v2942 = vsub.s32 %v2939, %v2941
        %v2943 = vrot.slane %v2929, %v2942
        %v2944 = vcombine.low %v2920, %v2936
        %v2945 = vcombine.high %v2920, %v2936
        %v2947 = vunpack.c.l.s4 1934713408
        %v2948 = vunpack.c.0.s8 %v2947
        %v2949 = vlaneseq
        %v2950 = vshrl.u32 %v2949, 7
        %v2951 = vsub.s32 %v2948, %v2950
        %v2952 = vrot.slane %v2944, %v2951
        %v2954 = vunpack.c.l.s4 1934713408
        %v2955 = vunpack.c.0.s8 %v2954
        %v2956 = vlaneseq
        %v2957 = vshrl.u32 %v2956, 7
        %v2958 = vsub.s32 %v2955, %v2957
        %v2959 = vrot.slane %v2945, %v2958
        %v2960 = vcombine.low %v2927, %v2943
        %v2961 = vcombine.high %v2927, %v2943
        %v2963 = vunpack.c.l.s4 1934713408
        %v2964 = vunpack.c.0.s8 %v2963
        %v2965 = vlaneseq
        %v2966 = vshrl.u32 %v2965, 7
        %v2967 = vsub.s32 %v2964, %v2966
        %v2968 = vrot.slane %v2960, %v2967
        %v2970 = vunpack.c.l.s4 1934713408
        %v2971 = vunpack.c.0.s8 %v2970
        %v2972 = vlaneseq
        %v2973 = vshrl.u32 %v2972, 7
        %v2974 = vsub.s32 %v2971, %v2973
        %v2975 = vrot.slane %v2961, %v2974
        %v2976 = vcombine.high %v2952, 0.0
        %v2977 = vcombine.high %v2959, 0.0
        %v2978 = vcombine.high %v2968, 0.0
        %v2979 = vcombine.high %v2975, 0.0
        %v2980 = vcombine.low %v2884, %v2891
        %v2982 = vunpack.c.l.s4 1983009808
        %v2983 = vunpack.c.0.s8 %v2982
        %v2984 = vlaneseq
        %v2985 = vshrl.u32 %v2984, 7
        %v2986 = vsub.s32 %v2983, %v2985
        %v2987 = vrot.slane %v2980, %v2986
        %v2988 = vcombine.low %v2908, %v2909
        %v2990 = vunpack.c.l.s4 1983009808
        %v2991 = vunpack.c.0.s8 %v2990
        %v2992 = vlaneseq
        %v2993 = vshrl.u32 %v2992, 7
        %v2994 = vsub.s32 %v2991, %v2993
        %v2995 = vrot.slane %v2988, %v2994
        %v2996 = vcombine.low %v2900, %v2907
        %v2998 = vunpack.c.l.s4 1983009808
        %v2999 = vunpack.c.0.s8 %v2998
        %v3000 = vlaneseq
        %v3001 = vshrl.u32 %v3000, 7
        %v3002 = vsub.s32 %v2999, %v3001
        %v3003 = vrot.slane %v2996, %v3002
        %v3004 = vcombine.low %v2910, %v2911
        %v3006 = vunpack.c.l.s4 1983009808
        %v3007 = vunpack.c.0.s8 %v3006
        %v3008 = vlaneseq
        %v3009 = vshrl.u32 %v3008, 7
        %v3010 = vsub.s32 %v3007, %v3009
        %v3011 = vrot.slane %v3004, %v3010
        %v3012 = vcombine.low %v2987, %v2995
        %v3013 = vcombine.high %v2987, %v2995
        %v3015 = vunpack.c.l.s4 1934713408
        %v3016 = vunpack.c.0.s8 %v3015
        %v3017 = vlaneseq
        %v3018 = vshrl.u32 %v3017, 7
        %v3019 = vsub.s32 %v3016, %v3018
        %v3020 = vrot.slane %v3012, %v3019
        %v3022 = vunpack.c.l.s4 1934713408
        %v3023 = vunpack.c.0.s8 %v3022
        %v3024 = vlaneseq
        %v3025 = vshrl.u32 %v3024, 7
        %v3026 = vsub.s32 %v3023, %v3025
        %v3027 = vrot.slane %v3013, %v3026
        %v3028 = vcombine.low %v3003, %v3011
        %v3029 = vcombine.high %v3003, %v3011
        %v3031 = vunpack.c.l.s4 1934713408
        %v3032 = vunpack.c.0.s8 %v3031
        %v3033 = vlaneseq
        %v3034 = vshrl.u32 %v3033, 7
        %v3035 = vsub.s32 %v3032, %v3034
        %v3036 = vrot.slane %v3028, %v3035
        %v3038 = vunpack.c.l.s4 1934713408
        %v3039 = vunpack.c.0.s8 %v3038
        %v3040 = vlaneseq
        %v3041 = vshrl.u32 %v3040, 7
        %v3042 = vsub.s32 %v3039, %v3041
        %v3043 = vrot.slane %v3029, %v3042
        %v3044 = vcombine.low %v3020, %v3036
        %v3045 = vcombine.high %v3020, %v3036
        %v3046 = vcombine.low %v3027, %v3043
        %v3047 = vcombine.high %v3027, %v3043
        %v3048 = vcombine.low %v2952, %v2959
        %v3050 = vunpack.c.l.s4 1983009808
        %v3051 = vunpack.c.0.s8 %v3050
        %v3052 = vlaneseq
        %v3053 = vshrl.u32 %v3052, 7
        %v3054 = vsub.s32 %v3051, %v3053
        %v3055 = vrot.slane %v3048, %v3054
        %v3056 = vcombine.low %v2976, %v2977
        %v3058 = vunpack.c.l.s4 1983009808
        %v3059 = vunpack.c.0.s8 %v3058
        %v3060 = vlaneseq
        %v3061 = vshrl.u32 %v3060, 7
        %v3062 = vsub.s32 %v3059, %v3061
        %v3063 = vrot.slane %v3056, %v3062
        %v3064 = vcombine.low %v2968, %v2975
        %v3066 = vunpack.c.l.s4 1983009808
        %v3067 = vunpack.c.0.s8 %v3066
        %v3068 = vlaneseq
        %v3069 = vshrl.u32 %v3068, 7
        %v3070 = vsub.s32 %v3067, %v3069
        %v3071 = vrot.slane %v3064, %v3070
        %v3072 = vcombine.low %v2978, %v2979
        %v3074 = vunpack.c.l.s4 1983009808
        %v3075 = vunpack.c.0.s8 %v3074
        %v3076 = vlaneseq
        %v3077 = vshrl.u32 %v3076, 7
        %v3078 = vsub.s32 %v3075, %v3077
        %v3079 = vrot.slane %v3072, %v3078
        %v3080 = vcombine.low %v3055, %v3063
        %v3081 = vcombine.high %v3055, %v3063
        %v3083 = vunpack.c.l.s4 1934713408
        %v3084 = vunpack.c.0.s8 %v3083
        %v3085 = vlaneseq
        %v3086 = vshrl.u32 %v3085, 7
        %v3087 = vsub.s32 %v3084, %v3086
        %v3088 = vrot.slane %v3080, %v3087
        %v3090 = vunpack.c.l.s4 1934713408
        %v3091 = vunpack.c.0.s8 %v3090
        %v3092 = vlaneseq
        %v3093 = vshrl.u32 %v3092, 7
        %v3094 = vsub.s32 %v3091, %v3093
        %v3095 = vrot.slane %v3081, %v3094
        %v3096 = vcombine.low %v3071, %v3079
        %v3097 = vcombine.high %v3071, %v3079
        %v3099 = vunpack.c.l.s4 1934713408
        %v3100 = vunpack.c.0.s8 %v3099
        %v3101 = vlaneseq
        %v3102 = vshrl.u32 %v3101, 7
        %v3103 = vsub.s32 %v3100, %v3102
        %v3104 = vrot.slane %v3096, %v3103
        %v3106 = vunpack.c.l.s4 1934713408
        %v3107 = vunpack.c.0.s8 %v3106
        %v3108 = vlaneseq
        %v3109 = vshrl.u32 %v3108, 7
        %v3110 = vsub.s32 %v3107, %v3109
        %v3111 = vrot.slane %v3097, %v3110
        %v3112 = vcombine.low %v3088, %v3104
        %v3113 = vcombine.high %v3088, %v3104
        %v3114 = vcombine.low %v3095, %v3111
        %v3115 = vcombine.high %v3095, %v3111
        %v3116 = vpack.c.bf16 %v3112, %v3044
        %v3117 = vpack.c.bf16 %v3113, %v3045
        %v3118 = vpack.c.bf16 %v3114, %v3046
        %v3119 = vpack.c.bf16 %v3115, %v3047
        %3120 = vrot.lane.b32.xlu0 %v2668, 96
        %v3121 = vpop.permute.xlu0 %3120
        %3122 = vrot.lane.b32.xlu0 %v2671, 96
        %v3123 = vpop.permute.xlu0 %3122
        %3124 = vrot.lane.b32.xlu0 %v2827, 96
        %v3125 = vpop.permute.xlu0 %3124
        %3126 = vrot.lane.b32.xlu0 %v2829, 96
        %v3127 = vpop.permute.xlu0 %3126
        %3128 = vrot.lane.b32.xlu0 %v2833, 96
        %v3129 = vpop.permute.xlu0 %3128
        %3130 = vrot.lane.b32.xlu0 %v2835, 96
        %v3131 = vpop.permute.xlu0 %3130
        %3132 = vrot.lane.b32.xlu0 %v2839, 96
        %v3133 = vpop.permute.xlu0 %3132
        %3134 = vrot.lane.b32.xlu0 %v2841, 96
        %v3135 = vpop.permute.xlu0 %3134
        %v3144 = vcombine.low %v3121, %v3129
        %v3145 = vcombine.high %v3121, %v3129
        %v3147 = vunpack.c.l.s4 1983009808
        %v3148 = vunpack.c.0.s8 %v3147
        %v3149 = vlaneseq
        %v3150 = vshrl.u32 %v3149, 7
        %v3151 = vsub.s32 %v3148, %v3150
        %v3152 = vrot.slane %v3144, %v3151
        %v3154 = vunpack.c.l.s4 1983009808
        %v3155 = vunpack.c.0.s8 %v3154
        %v3156 = vlaneseq
        %v3157 = vshrl.u32 %v3156, 7
        %v3158 = vsub.s32 %v3155, %v3157
        %v3159 = vrot.slane %v3145, %v3158
        %v3160 = vcombine.low %v3125, %v3133
        %v3161 = vcombine.high %v3125, %v3133
        %v3163 = vunpack.c.l.s4 1983009808
        %v3164 = vunpack.c.0.s8 %v3163
        %v3165 = vlaneseq
        %v3166 = vshrl.u32 %v3165, 7
        %v3167 = vsub.s32 %v3164, %v3166
        %v3168 = vrot.slane %v3160, %v3167
        %v3170 = vunpack.c.l.s4 1983009808
        %v3171 = vunpack.c.0.s8 %v3170
        %v3172 = vlaneseq
        %v3173 = vshrl.u32 %v3172, 7
        %v3174 = vsub.s32 %v3171, %v3173
        %v3175 = vrot.slane %v3161, %v3174
        %v3176 = vcombine.low %v3152, %v3168
        %v3177 = vcombine.high %v3152, %v3168
        %v3179 = vunpack.c.l.s4 1934713408
        %v3180 = vunpack.c.0.s8 %v3179
        %v3181 = vlaneseq
        %v3182 = vshrl.u32 %v3181, 7
        %v3183 = vsub.s32 %v3180, %v3182
        %v3184 = vrot.slane %v3176, %v3183
        %v3186 = vunpack.c.l.s4 1934713408
        %v3187 = vunpack.c.0.s8 %v3186
        %v3188 = vlaneseq
        %v3189 = vshrl.u32 %v3188, 7
        %v3190 = vsub.s32 %v3187, %v3189
        %v3191 = vrot.slane %v3177, %v3190
        %v3192 = vcombine.low %v3159, %v3175
        %v3193 = vcombine.high %v3159, %v3175
        %v3195 = vunpack.c.l.s4 1934713408
        %v3196 = vunpack.c.0.s8 %v3195
        %v3197 = vlaneseq
        %v3198 = vshrl.u32 %v3197, 7
        %v3199 = vsub.s32 %v3196, %v3198
        %v3200 = vrot.slane %v3192, %v3199
        %v3202 = vunpack.c.l.s4 1934713408
        %v3203 = vunpack.c.0.s8 %v3202
        %v3204 = vlaneseq
        %v3205 = vshrl.u32 %v3204, 7
        %v3206 = vsub.s32 %v3203, %v3205
        %v3207 = vrot.slane %v3193, %v3206
        %v3208 = vcombine.high %v3184, 0.0
        %v3209 = vcombine.high %v3191, 0.0
        %v3210 = vcombine.high %v3200, 0.0
        %v3211 = vcombine.high %v3207, 0.0
        %v3212 = vcombine.low %v3123, %v3131
        %v3213 = vcombine.high %v3123, %v3131
        %v3215 = vunpack.c.l.s4 1983009808
        %v3216 = vunpack.c.0.s8 %v3215
        %v3217 = vlaneseq
        %v3218 = vshrl.u32 %v3217, 7
        %v3219 = vsub.s32 %v3216, %v3218
        %v3220 = vrot.slane %v3212, %v3219
        %v3222 = vunpack.c.l.s4 1983009808
        %v3223 = vunpack.c.0.s8 %v3222
        %v3224 = vlaneseq
        %v3225 = vshrl.u32 %v3224, 7
        %v3226 = vsub.s32 %v3223, %v3225
        %v3227 = vrot.slane %v3213, %v3226
        %v3228 = vcombine.low %v3127, %v3135
        %v3229 = vcombine.high %v3127, %v3135
        %v3231 = vunpack.c.l.s4 1983009808
        %v3232 = vunpack.c.0.s8 %v3231
        %v3233 = vlaneseq
        %v3234 = vshrl.u32 %v3233, 7
        %v3235 = vsub.s32 %v3232, %v3234
        %v3236 = vrot.slane %v3228, %v3235
        %v3238 = vunpack.c.l.s4 1983009808
        %v3239 = vunpack.c.0.s8 %v3238
        %v3240 = vlaneseq
        %v3241 = vshrl.u32 %v3240, 7
        %v3242 = vsub.s32 %v3239, %v3241
        %v3243 = vrot.slane %v3229, %v3242
        %v3244 = vcombine.low %v3220, %v3236
        %v3245 = vcombine.high %v3220, %v3236
        %v3247 = vunpack.c.l.s4 1934713408
        %v3248 = vunpack.c.0.s8 %v3247
        %v3249 = vlaneseq
        %v3250 = vshrl.u32 %v3249, 7
        %v3251 = vsub.s32 %v3248, %v3250
        %v3252 = vrot.slane %v3244, %v3251
        %v3254 = vunpack.c.l.s4 1934713408
        %v3255 = vunpack.c.0.s8 %v3254
        %v3256 = vlaneseq
        %v3257 = vshrl.u32 %v3256, 7
        %v3258 = vsub.s32 %v3255, %v3257
        %v3259 = vrot.slane %v3245, %v3258
        %v3260 = vcombine.low %v3227, %v3243
        %v3261 = vcombine.high %v3227, %v3243
        %v3263 = vunpack.c.l.s4 1934713408
        %v3264 = vunpack.c.0.s8 %v3263
        %v3265 = vlaneseq
        %v3266 = vshrl.u32 %v3265, 7
        %v3267 = vsub.s32 %v3264, %v3266
        %v3268 = vrot.slane %v3260, %v3267
        %v3270 = vunpack.c.l.s4 1934713408
        %v3271 = vunpack.c.0.s8 %v3270
        %v3272 = vlaneseq
        %v3273 = vshrl.u32 %v3272, 7
        %v3274 = vsub.s32 %v3271, %v3273
        %v3275 = vrot.slane %v3261, %v3274
        %v3276 = vcombine.high %v3252, 0.0
        %v3277 = vcombine.high %v3259, 0.0
        %v3278 = vcombine.high %v3268, 0.0
        %v3279 = vcombine.high %v3275, 0.0
        %v3280 = vcombine.low %v3184, %v3191
        %v3282 = vunpack.c.l.s4 1983009808
        %v3283 = vunpack.c.0.s8 %v3282
        %v3284 = vlaneseq
        %v3285 = vshrl.u32 %v3284, 7
        %v3286 = vsub.s32 %v3283, %v3285
        %v3287 = vrot.slane %v3280, %v3286
        %v3288 = vcombine.low %v3208, %v3209
        %v3290 = vunpack.c.l.s4 1983009808
        %v3291 = vunpack.c.0.s8 %v3290
        %v3292 = vlaneseq
        %v3293 = vshrl.u32 %v3292, 7
        %v3294 = vsub.s32 %v3291, %v3293
        %v3295 = vrot.slane %v3288, %v3294
        %v3296 = vcombine.low %v3200, %v3207
        %v3298 = vunpack.c.l.s4 1983009808
        %v3299 = vunpack.c.0.s8 %v3298
        %v3300 = vlaneseq
        %v3301 = vshrl.u32 %v3300, 7
        %v3302 = vsub.s32 %v3299, %v3301
        %v3303 = vrot.slane %v3296, %v3302
        %v3304 = vcombine.low %v3210, %v3211
        %v3306 = vunpack.c.l.s4 1983009808
        %v3307 = vunpack.c.0.s8 %v3306
        %v3308 = vlaneseq
        %v3309 = vshrl.u32 %v3308, 7
        %v3310 = vsub.s32 %v3307, %v3309
        %v3311 = vrot.slane %v3304, %v3310
        %v3312 = vcombine.low %v3287, %v3295
        %v3313 = vcombine.high %v3287, %v3295
        %v3315 = vunpack.c.l.s4 1934713408
        %v3316 = vunpack.c.0.s8 %v3315
        %v3317 = vlaneseq
        %v3318 = vshrl.u32 %v3317, 7
        %v3319 = vsub.s32 %v3316, %v3318
        %v3320 = vrot.slane %v3312, %v3319
        %v3322 = vunpack.c.l.s4 1934713408
        %v3323 = vunpack.c.0.s8 %v3322
        %v3324 = vlaneseq
        %v3325 = vshrl.u32 %v3324, 7
        %v3326 = vsub.s32 %v3323, %v3325
        %v3327 = vrot.slane %v3313, %v3326
        %v3328 = vcombine.low %v3303, %v3311
        %v3329 = vcombine.high %v3303, %v3311
        %v3331 = vunpack.c.l.s4 1934713408
        %v3332 = vunpack.c.0.s8 %v3331
        %v3333 = vlaneseq
        %v3334 = vshrl.u32 %v3333, 7
        %v3335 = vsub.s32 %v3332, %v3334
        %v3336 = vrot.slane %v3328, %v3335
        %v3338 = vunpack.c.l.s4 1934713408
        %v3339 = vunpack.c.0.s8 %v3338
        %v3340 = vlaneseq
        %v3341 = vshrl.u32 %v3340, 7
        %v3342 = vsub.s32 %v3339, %v3341
        %v3343 = vrot.slane %v3329, %v3342
        %v3344 = vcombine.low %v3320, %v3336
        %v3345 = vcombine.high %v3320, %v3336
        %v3346 = vcombine.low %v3327, %v3343
        %v3347 = vcombine.high %v3327, %v3343
        %v3348 = vcombine.low %v3252, %v3259
        %v3350 = vunpack.c.l.s4 1983009808
        %v3351 = vunpack.c.0.s8 %v3350
        %v3352 = vlaneseq
        %v3353 = vshrl.u32 %v3352, 7
        %v3354 = vsub.s32 %v3351, %v3353
        %v3355 = vrot.slane %v3348, %v3354
        %v3356 = vcombine.low %v3276, %v3277
        %v3358 = vunpack.c.l.s4 1983009808
        %v3359 = vunpack.c.0.s8 %v3358
        %v3360 = vlaneseq
        %v3361 = vshrl.u32 %v3360, 7
        %v3362 = vsub.s32 %v3359, %v3361
        %v3363 = vrot.slane %v3356, %v3362
        %v3364 = vcombine.low %v3268, %v3275
        %v3366 = vunpack.c.l.s4 1983009808
        %v3367 = vunpack.c.0.s8 %v3366
        %v3368 = vlaneseq
        %v3369 = vshrl.u32 %v3368, 7
        %v3370 = vsub.s32 %v3367, %v3369
        %v3371 = vrot.slane %v3364, %v3370
        %v3372 = vcombine.low %v3278, %v3279
        %v3374 = vunpack.c.l.s4 1983009808
        %v3375 = vunpack.c.0.s8 %v3374
        %v3376 = vlaneseq
        %v3377 = vshrl.u32 %v3376, 7
        %v3378 = vsub.s32 %v3375, %v3377
        %v3379 = vrot.slane %v3372, %v3378
        %v3380 = vcombine.low %v3355, %v3363
        %v3381 = vcombine.high %v3355, %v3363
        %v3383 = vunpack.c.l.s4 1934713408
        %v3384 = vunpack.c.0.s8 %v3383
        %v3385 = vlaneseq
        %v3386 = vshrl.u32 %v3385, 7
        %v3387 = vsub.s32 %v3384, %v3386
        %v3388 = vrot.slane %v3380, %v3387
        %v3390 = vunpack.c.l.s4 1934713408
        %v3391 = vunpack.c.0.s8 %v3390
        %v3392 = vlaneseq
        %v3393 = vshrl.u32 %v3392, 7
        %v3394 = vsub.s32 %v3391, %v3393
        %v3395 = vrot.slane %v3381, %v3394
        %v3396 = vcombine.low %v3371, %v3379
        %v3397 = vcombine.high %v3371, %v3379
        %v3399 = vunpack.c.l.s4 1934713408
        %v3400 = vunpack.c.0.s8 %v3399
        %v3401 = vlaneseq
        %v3402 = vshrl.u32 %v3401, 7
        %v3403 = vsub.s32 %v3400, %v3402
        %v3404 = vrot.slane %v3396, %v3403
        %v3406 = vunpack.c.l.s4 1934713408
        %v3407 = vunpack.c.0.s8 %v3406
        %v3408 = vlaneseq
        %v3409 = vshrl.u32 %v3408, 7
        %v3410 = vsub.s32 %v3407, %v3409
        %v3411 = vrot.slane %v3397, %v3410
        %v3412 = vcombine.low %v3388, %v3404
        %v3413 = vcombine.high %v3388, %v3404
        %v3414 = vcombine.low %v3395, %v3411
        %v3415 = vcombine.high %v3395, %v3411
        %v3416 = vpack.c.bf16 %v3412, %v3344
        %v3417 = vpack.c.bf16 %v3413, %v3345
        %v3418 = vpack.c.bf16 %v3414, %v3346
        %v3419 = vpack.c.bf16 %v3415, %v3347
        %v3421 = vsel %vm1862, %v2820, 0
        %v3424 = vsel %vm1862, %v3116, 0
        %3426 = vmatprep.subr.bf16.mxu0 0
        %3427 = vmatpush1.bf16.xpose.msra.mxu0 %v3424
        %3428 = vmatprep.subr.bf16.mxu0 0
        %3429 = vmatpush1.bf16.xpose.msra.mxu0 0
        %3430 = vmatprep.subr.bf16.mxu0 0
        %3431 = vmatpush1.bf16.xpose.msra.mxu0 0
        %3432 = vmatprep.subr.bf16.mxu0 0
        %3433 = vmatpush1.bf16.xpose.msra.mxu0 0
        %3434 = vmatprep.subr.bf16.mxu0 0
        %3435 = vmatpush1.bf16.xpose.msra.mxu0 0
        %3436 = vmatprep.subr.bf16.mxu0 0
        %3437 = vmatpush1.bf16.xpose.msra.mxu0 0
        %3438 = vmatprep.subr.bf16.mxu0 0
        %3439 = vmatpush1.bf16.xpose.msra.mxu0 0
        %3440 = vmatprep.subr.bf16.mxu0 0
        %3441 = vmatpush1.bf16.xpose.msra.mxu0 0
        %3442 = vmatprep.subr.bf16.mxu0 0
        %3443 = vmatpush1.bf16.xpose.msra.mxu0 0
        %3444 = vmatprep.subr.bf16.mxu0 0
        %3445 = vmatpush1.bf16.xpose.msra.mxu0 0
        %3446 = vmatprep.subr.bf16.mxu0 0
        %3447 = vmatpush1.bf16.xpose.msra.mxu0 0
        %3448 = vmatprep.subr.bf16.mxu0 0
        %3449 = vmatpush1.bf16.xpose.msra.mxu0 0
        %3450 = vmatprep.subr.bf16.mxu0 0
        %3451 = vmatpush1.bf16.xpose.msra.mxu0 0
        %3452 = vmatprep.subr.bf16.mxu0 0
        %3453 = vmatpush1.bf16.xpose.msra.mxu0 0
        %3454 = vmatprep.subr.bf16.mxu0 0
        %3455 = vmatpush1.bf16.xpose.msra.mxu0 0
        %3456 = vmatprep.subr.bf16.mxu0 0
        %3457 = vmatpush1.bf16.xpose.msra.mxu0 0
        %3458 = vmatprep.mubr.bf16.mxu0 0
        %3459 = vmatmul.mubr.bf16.gmra.mrb[0].mxu0 %v3421
        %v3460 = vpop.f32.mrb[0].mxu0
        %v3461 = vadd.f32 0.0, %v3460
        %v3462 = vpop.f32.mrb[0].mxu0
        %v3463 = vpop.f32.mrb[0].mxu0
        %v3464 = vpop.f32.mrb[0].mxu0
        %3465 = vdwg.mxu0
        %v3467 = vsel %vm1862, %v2821, 0
        %v3470 = vsel %vm1862, %v3117, 0
        %3472 = vmatprep.subr.bf16.mxu0 0
        %3473 = vmatpush1.bf16.xpose.msra.mxu0 %v3470
        %3474 = vmatprep.subr.bf16.mxu0 0
        %3475 = vmatpush1.bf16.xpose.msra.mxu0 0
        %3476 = vmatprep.subr.bf16.mxu0 0
        %3477 = vmatpush1.bf16.xpose.msra.mxu0 0
        %3478 = vmatprep.subr.bf16.mxu0 0
        %3479 = vmatpush1.bf16.xpose.msra.mxu0 0
        %3480 = vmatprep.subr.bf16.mxu0 0
        %3481 = vmatpush1.bf16.xpose.msra.mxu0 0
        %3482 = vmatprep.subr.bf16.mxu0 0
        %3483 = vmatpush1.bf16.xpose.msra.mxu0 0
        %3484 = vmatprep.subr.bf16.mxu0 0
        %3485 = vmatpush1.bf16.xpose.msra.mxu0 0
        %3486 = vmatprep.subr.bf16.mxu0 0
        %3487 = vmatpush1.bf16.xpose.msra.mxu0 0
        %3488 = vmatprep.subr.bf16.mxu0 0
        %3489 = vmatpush1.bf16.xpose.msra.mxu0 0
        %3490 = vmatprep.subr.bf16.mxu0 0
        %3491 = vmatpush1.bf16.xpose.msra.mxu0 0
        %3492 = vmatprep.subr.bf16.mxu0 0
        %3493 = vmatpush1.bf16.xpose.msra.mxu0 0
        %3494 = vmatprep.subr.bf16.mxu0 0
        %3495 = vmatpush1.bf16.xpose.msra.mxu0 0
        %3496 = vmatprep.subr.bf16.mxu0 0
        %3497 = vmatpush1.bf16.xpose.msra.mxu0 0
        %3498 = vmatprep.subr.bf16.mxu0 0
        %3499 = vmatpush1.bf16.xpose.msra.mxu0 0
        %3500 = vmatprep.subr.bf16.mxu0 0
        %3501 = vmatpush1.bf16.xpose.msra.mxu0 0
        %3502 = vmatprep.subr.bf16.mxu0 0
        %3503 = vmatpush1.bf16.xpose.msra.mxu0 0
        %3504 = vmatprep.mubr.bf16.mxu0 0
        %3505 = vmatmul.mubr.bf16.gmra.mrb[0].mxu0 %v3467
        %v3506 = vpop.f32.mrb[0].mxu0
        %v3507 = vadd.f32 0.0, %v3506
        %v3508 = vpop.f32.mrb[0].mxu0
        %v3509 = vpop.f32.mrb[0].mxu0
        %v3510 = vpop.f32.mrb[0].mxu0
        %3511 = vdwg.mxu0
        %v3513 = vsel %vm1862, %v2822, 0
        %v3516 = vsel %vm1862, %v3118, 0
        %3518 = vmatprep.subr.bf16.mxu0 0
        %3519 = vmatpush1.bf16.xpose.msra.mxu0 %v3516
        %3520 = vmatprep.subr.bf16.mxu0 0
        %3521 = vmatpush1.bf16.xpose.msra.mxu0 0
        %3522 = vmatprep.subr.bf16.mxu0 0
        %3523 = vmatpush1.bf16.xpose.msra.mxu0 0
        %3524 = vmatprep.subr.bf16.mxu0 0
        %3525 = vmatpush1.bf16.xpose.msra.mxu0 0
        %3526 = vmatprep.subr.bf16.mxu0 0
        %3527 = vmatpush1.bf16.xpose.msra.mxu0 0
        %3528 = vmatprep.subr.bf16.mxu0 0
        %3529 = vmatpush1.bf16.xpose.msra.mxu0 0
        %3530 = vmatprep.subr.bf16.mxu0 0
        %3531 = vmatpush1.bf16.xpose.msra.mxu0 0
        %3532 = vmatprep.subr.bf16.mxu0 0
        %3533 = vmatpush1.bf16.xpose.msra.mxu0 0
        %3534 = vmatprep.subr.bf16.mxu0 0
        %3535 = vmatpush1.bf16.xpose.msra.mxu0 0
        %3536 = vmatprep.subr.bf16.mxu0 0
        %3537 = vmatpush1.bf16.xpose.msra.mxu0 0
        %3538 = vmatprep.subr.bf16.mxu0 0
        %3539 = vmatpush1.bf16.xpose.msra.mxu0 0
        %3540 = vmatprep.subr.bf16.mxu0 0
        %3541 = vmatpush1.bf16.xpose.msra.mxu0 0
        %3542 = vmatprep.subr.bf16.mxu0 0
        %3543 = vmatpush1.bf16.xpose.msra.mxu0 0
        %3544 = vmatprep.subr.bf16.mxu0 0
        %3545 = vmatpush1.bf16.xpose.msra.mxu0 0
        %3546 = vmatprep.subr.bf16.mxu0 0
        %3547 = vmatpush1.bf16.xpose.msra.mxu0 0
        %3548 = vmatprep.subr.bf16.mxu0 0
        %3549 = vmatpush1.bf16.xpose.msra.mxu0 0
        %3550 = vmatprep.mubr.bf16.mxu0 0
        %3551 = vmatmul.mubr.bf16.gmra.mrb[0].mxu0 %v3513
        %v3552 = vpop.f32.mrb[0].mxu0
        %v3553 = vadd.f32 0.0, %v3552
        %v3554 = vpop.f32.mrb[0].mxu0
        %v3555 = vpop.f32.mrb[0].mxu0
        %v3556 = vpop.f32.mrb[0].mxu0
        %3557 = vdwg.mxu0
        %v3559 = vsel %vm1862, %v2823, 0
        %v3562 = vsel %vm1862, %v3119, 0
        %3564 = vmatprep.subr.bf16.mxu0 0
        %3565 = vmatpush1.bf16.xpose.msra.mxu0 %v3562
        %3566 = vmatprep.subr.bf16.mxu0 0
        %3567 = vmatpush1.bf16.xpose.msra.mxu0 0
        %3568 = vmatprep.subr.bf16.mxu0 0
        %3569 = vmatpush1.bf16.xpose.msra.mxu0 0
        %3570 = vmatprep.subr.bf16.mxu0 0
        %3571 = vmatpush1.bf16.xpose.msra.mxu0 0
        %3572 = vmatprep.subr.bf16.mxu0 0
        %3573 = vmatpush1.bf16.xpose.msra.mxu0 0
        %3574 = vmatprep.subr.bf16.mxu0 0
        %3575 = vmatpush1.bf16.xpose.msra.mxu0 0
        %3576 = vmatprep.subr.bf16.mxu0 0
        %3577 = vmatpush1.bf16.xpose.msra.mxu0 0
        %3578 = vmatprep.subr.bf16.mxu0 0
        %3579 = vmatpush1.bf16.xpose.msra.mxu0 0
        %3580 = vmatprep.subr.bf16.mxu0 0
        %3581 = vmatpush1.bf16.xpose.msra.mxu0 0
        %3582 = vmatprep.subr.bf16.mxu0 0
        %3583 = vmatpush1.bf16.xpose.msra.mxu0 0
        %3584 = vmatprep.subr.bf16.mxu0 0
        %3585 = vmatpush1.bf16.xpose.msra.mxu0 0
        %3586 = vmatprep.subr.bf16.mxu0 0
        %3587 = vmatpush1.bf16.xpose.msra.mxu0 0
        %3588 = vmatprep.subr.bf16.mxu0 0
        %3589 = vmatpush1.bf16.xpose.msra.mxu0 0
        %3590 = vmatprep.subr.bf16.mxu0 0
        %3591 = vmatpush1.bf16.xpose.msra.mxu0 0
        %3592 = vmatprep.subr.bf16.mxu0 0
        %3593 = vmatpush1.bf16.xpose.msra.mxu0 0
        %3594 = vmatprep.subr.bf16.mxu0 0
        %3595 = vmatpush1.bf16.xpose.msra.mxu0 0
        %3596 = vmatprep.mubr.bf16.mxu0 0
        %3597 = vmatmul.mubr.bf16.gmra.mrb[0].mxu0 %v3559
        %v3598 = vpop.f32.mrb[0].mxu0
        %v3599 = vadd.f32 0.0, %v3598
        %v3600 = vpop.f32.mrb[0].mxu0
        %v3601 = vpop.f32.mrb[0].mxu0
        %v3602 = vpop.f32.mrb[0].mxu0
        %3603 = vdwg.mxu0
        %v3604 = vmul.f32 %v3461, 0.35355338
        %v3605 = vmul.f32 %v3507, 0.35355338
        %v3606 = vmul.f32 %v3553, 0.35355338
        %v3607 = vmul.f32 %v3599, 0.35355338
        %v3609 = vlaneseq
        %v3610 = vshrl.u32 %v3609, 7
        %v3611 = vsub.s32 0, %v3610
        %v3612 = vrot.slane %v1293, %v3611
        %v3614 = vadd.f32 %v3604, %v3612
        %v3615 = vadd.f32 %v3605, %v3612
        %v3616 = vadd.f32 %v3606, %v3612
        %v3617 = vadd.f32 %v3607, %v3612
        %v3618 = vsel %vm2437, %v3614, -inf
        %3619 = vmax.xlane.f32.xlu0 %v3618
        %v3620 = vpop.xlane.xlu0 %3619
        %v3621 = vsel %vm2437, %v3615, -inf
        %3622 = vmax.xlane.f32.xlu0 %v3621
        %v3623 = vpop.xlane.xlu0 %3622
        %v3624 = vsel %vm2437, %v3616, -inf
        %3625 = vmax.xlane.f32.xlu0 %v3624
        %v3626 = vpop.xlane.xlu0 %3625
        %v3627 = vsel %vm2437, %v3617, -inf
        %3628 = vmax.xlane.f32.xlu0 %v3627
        %v3629 = vpop.xlane.xlu0 %3628
        %v3630 = vsub.f32 %v3614, %v3620
        %v3631 = vsub.f32 %v3615, %v3623
        %v3632 = vsub.f32 %v3616, %v3626
        %v3633 = vsub.f32 %v3617, %v3629
        %v3634 = vmul.f32 %v3630, 1.442695
        %v3635 = vpow.pop %v3634
        %v3636 = vmul.f32 %v3631, 1.442695
        %v3637 = vpow.pop %v3636
        %v3638 = vmul.f32 %v3632, 1.442695
        %v3639 = vpow.pop %v3638
        %v3640 = vmul.f32 %v3633, 1.442695
        %v3641 = vpow.pop %v3640
        %v3642 = vsel %vm2437, %v3635, 0.0
        %3643 = vadd.xlane.f32.xlu0 %v3642
        %v3644 = vpop.xlane.xlu0 %3643
        %v3645 = vsel %vm2437, %v3637, 0.0
        %3646 = vadd.xlane.f32.xlu0 %v3645
        %v3647 = vpop.xlane.xlu0 %3646
        %v3648 = vsel %vm2437, %v3639, 0.0
        %3649 = vadd.xlane.f32.xlu0 %v3648
        %v3650 = vpop.xlane.xlu0 %3649
        %v3651 = vsel %vm2437, %v3641, 0.0
        %3652 = vadd.xlane.f32.xlu0 %v3651
        %v3653 = vpop.xlane.xlu0 %3652
        %v3654 = vrcp.pop %v3644
        %v3655 = vmul.f32 %v3635, %v3654
        %v3656 = vrcp.pop %v3647
        %v3657 = vmul.f32 %v3637, %v3656
        %v3658 = vrcp.pop %v3650
        %v3659 = vmul.f32 %v3639, %v3658
        %v3660 = vrcp.pop %v3653
        %v3661 = vmul.f32 %v3641, %v3660
        %v3662 = vpack.c.bf16 %v3655, %v3655
        %v3663 = vpack.c.bf16 %v3657, %v3657
        %v3664 = vpack.c.bf16 %v3659, %v3659
        %v3665 = vpack.c.bf16 %v3661, %v3661
        %v3667 = vsel %vm2437, %v3662, 0
        %3669 = vmatprep.subr.bf16.mxu0 0
        %3670 = vmatpush1.bf16.msra.mxu0 %v3416
        %3671 = vmatprep.subr.bf16.mxu0 0
        %3672 = vmatpush1.bf16.msra.mxu0 0
        %3673 = vmatprep.subr.bf16.mxu0 0
        %3674 = vmatpush1.bf16.msra.mxu0 0
        %3675 = vmatprep.subr.bf16.mxu0 0
        %3676 = vmatpush1.bf16.msra.mxu0 0
        %3677 = vmatprep.subr.bf16.mxu0 0
        %3678 = vmatpush1.bf16.msra.mxu0 0
        %3679 = vmatprep.subr.bf16.mxu0 0
        %3680 = vmatpush1.bf16.msra.mxu0 0
        %3681 = vmatprep.subr.bf16.mxu0 0
        %3682 = vmatpush1.bf16.msra.mxu0 0
        %3683 = vmatprep.subr.bf16.mxu0 0
        %3684 = vmatpush1.bf16.msra.mxu0 0
        %3685 = vmatprep.subr.bf16.mxu0 0
        %3686 = vmatpush1.bf16.msra.mxu0 0
        %3687 = vmatprep.subr.bf16.mxu0 0
        %3688 = vmatpush1.bf16.msra.mxu0 0
        %3689 = vmatprep.subr.bf16.mxu0 0
        %3690 = vmatpush1.bf16.msra.mxu0 0
        %3691 = vmatprep.subr.bf16.mxu0 0
        %3692 = vmatpush1.bf16.msra.mxu0 0
        %3693 = vmatprep.subr.bf16.mxu0 0
        %3694 = vmatpush1.bf16.msra.mxu0 0
        %3695 = vmatprep.subr.bf16.mxu0 0
        %3696 = vmatpush1.bf16.msra.mxu0 0
        %3697 = vmatprep.subr.bf16.mxu0 0
        %3698 = vmatpush1.bf16.msra.mxu0 0
        %3699 = vmatprep.subr.bf16.mxu0 0
        %3700 = vmatpush1.bf16.msra.mxu0 0
        %3701 = vmatprep.mubr.bf16.mxu0 0
        %3702 = vmatmul.mubr.bf16.gmra.mrb[0].mxu0 %v3667
        %v3703 = vpop.f32.mrb[0].mxu0
        %v3704 = vadd.f32 0.0, %v3703
        %v3705 = vpop.f32.mrb[0].mxu0
        %v3706 = vpop.f32.mrb[0].mxu0
        %v3707 = vpop.f32.mrb[0].mxu0
        %3708 = vdwg.mxu0
        %v3710 = vsel %vm2437, %v3663, 0
        %3712 = vmatprep.subr.bf16.mxu0 0
        %3713 = vmatpush1.bf16.msra.mxu0 %v3417
        %3714 = vmatprep.subr.bf16.mxu0 0
        %3715 = vmatpush1.bf16.msra.mxu0 0
        %3716 = vmatprep.subr.bf16.mxu0 0
        %3717 = vmatpush1.bf16.msra.mxu0 0
        %3718 = vmatprep.subr.bf16.mxu0 0
        %3719 = vmatpush1.bf16.msra.mxu0 0
        %3720 = vmatprep.subr.bf16.mxu0 0
        %3721 = vmatpush1.bf16.msra.mxu0 0
        %3722 = vmatprep.subr.bf16.mxu0 0
        %3723 = vmatpush1.bf16.msra.mxu0 0
        %3724 = vmatprep.subr.bf16.mxu0 0
        %3725 = vmatpush1.bf16.msra.mxu0 0
        %3726 = vmatprep.subr.bf16.mxu0 0
        %3727 = vmatpush1.bf16.msra.mxu0 0
        %3728 = vmatprep.subr.bf16.mxu0 0
        %3729 = vmatpush1.bf16.msra.mxu0 0
        %3730 = vmatprep.subr.bf16.mxu0 0
        %3731 = vmatpush1.bf16.msra.mxu0 0
        %3732 = vmatprep.subr.bf16.mxu0 0
        %3733 = vmatpush1.bf16.msra.mxu0 0
        %3734 = vmatprep.subr.bf16.mxu0 0
        %3735 = vmatpush1.bf16.msra.mxu0 0
        %3736 = vmatprep.subr.bf16.mxu0 0
        %3737 = vmatpush1.bf16.msra.mxu0 0
        %3738 = vmatprep.subr.bf16.mxu0 0
        %3739 = vmatpush1.bf16.msra.mxu0 0
        %3740 = vmatprep.subr.bf16.mxu0 0
        %3741 = vmatpush1.bf16.msra.mxu0 0
        %3742 = vmatprep.subr.bf16.mxu0 0
        %3743 = vmatpush1.bf16.msra.mxu0 0
        %3744 = vmatprep.mubr.bf16.mxu0 0
        %3745 = vmatmul.mubr.bf16.gmra.mrb[0].mxu0 %v3710
        %v3746 = vpop.f32.mrb[0].mxu0
        %v3747 = vadd.f32 0.0, %v3746
        %v3748 = vpop.f32.mrb[0].mxu0
        %v3749 = vpop.f32.mrb[0].mxu0
        %v3750 = vpop.f32.mrb[0].mxu0
        %3751 = vdwg.mxu0
        %v3753 = vsel %vm2437, %v3664, 0
        %3755 = vmatprep.subr.bf16.mxu0 0
        %3756 = vmatpush1.bf16.msra.mxu0 %v3418
        %3757 = vmatprep.subr.bf16.mxu0 0
        %3758 = vmatpush1.bf16.msra.mxu0 0
        %3759 = vmatprep.subr.bf16.mxu0 0
        %3760 = vmatpush1.bf16.msra.mxu0 0
        %3761 = vmatprep.subr.bf16.mxu0 0
        %3762 = vmatpush1.bf16.msra.mxu0 0
        %3763 = vmatprep.subr.bf16.mxu0 0
        %3764 = vmatpush1.bf16.msra.mxu0 0
        %3765 = vmatprep.subr.bf16.mxu0 0
        %3766 = vmatpush1.bf16.msra.mxu0 0
        %3767 = vmatprep.subr.bf16.mxu0 0
        %3768 = vmatpush1.bf16.msra.mxu0 0
        %3769 = vmatprep.subr.bf16.mxu0 0
        %3770 = vmatpush1.bf16.msra.mxu0 0
        %3771 = vmatprep.subr.bf16.mxu0 0
        %3772 = vmatpush1.bf16.msra.mxu0 0
        %3773 = vmatprep.subr.bf16.mxu0 0
        %3774 = vmatpush1.bf16.msra.mxu0 0
        %3775 = vmatprep.subr.bf16.mxu0 0
        %3776 = vmatpush1.bf16.msra.mxu0 0
        %3777 = vmatprep.subr.bf16.mxu0 0
        %3778 = vmatpush1.bf16.msra.mxu0 0
        %3779 = vmatprep.subr.bf16.mxu0 0
        %3780 = vmatpush1.bf16.msra.mxu0 0
        %3781 = vmatprep.subr.bf16.mxu0 0
        %3782 = vmatpush1.bf16.msra.mxu0 0
        %3783 = vmatprep.subr.bf16.mxu0 0
        %3784 = vmatpush1.bf16.msra.mxu0 0
        %3785 = vmatprep.subr.bf16.mxu0 0
        %3786 = vmatpush1.bf16.msra.mxu0 0
        %3787 = vmatprep.mubr.bf16.mxu0 0
        %3788 = vmatmul.mubr.bf16.gmra.mrb[0].mxu0 %v3753
        %v3789 = vpop.f32.mrb[0].mxu0
        %v3790 = vadd.f32 0.0, %v3789
        %v3791 = vpop.f32.mrb[0].mxu0
        %v3792 = vpop.f32.mrb[0].mxu0
        %v3793 = vpop.f32.mrb[0].mxu0
        %3794 = vdwg.mxu0
        %v3796 = vsel %vm2437, %v3665, 0
        %3798 = vmatprep.subr.bf16.mxu0 0
        %3799 = vmatpush1.bf16.msra.mxu0 %v3419
        %3800 = vmatprep.subr.bf16.mxu0 0
        %3801 = vmatpush1.bf16.msra.mxu0 0
        %3802 = vmatprep.subr.bf16.mxu0 0
        %3803 = vmatpush1.bf16.msra.mxu0 0
        %3804 = vmatprep.subr.bf16.mxu0 0
        %3805 = vmatpush1.bf16.msra.mxu0 0
        %3806 = vmatprep.subr.bf16.mxu0 0
        %3807 = vmatpush1.bf16.msra.mxu0 0
        %3808 = vmatprep.subr.bf16.mxu0 0
        %3809 = vmatpush1.bf16.msra.mxu0 0
        %3810 = vmatprep.subr.bf16.mxu0 0
        %3811 = vmatpush1.bf16.msra.mxu0 0
        %3812 = vmatprep.subr.bf16.mxu0 0
        %3813 = vmatpush1.bf16.msra.mxu0 0
        %3814 = vmatprep.subr.bf16.mxu0 0
        %3815 = vmatpush1.bf16.msra.mxu0 0
        %3816 = vmatprep.subr.bf16.mxu0 0
        %3817 = vmatpush1.bf16.msra.mxu0 0
        %3818 = vmatprep.subr.bf16.mxu0 0
        %3819 = vmatpush1.bf16.msra.mxu0 0
        %3820 = vmatprep.subr.bf16.mxu0 0
        %3821 = vmatpush1.bf16.msra.mxu0 0
        %3822 = vmatprep.subr.bf16.mxu0 0
        %3823 = vmatpush1.bf16.msra.mxu0 0
        %3824 = vmatprep.subr.bf16.mxu0 0
        %3825 = vmatpush1.bf16.msra.mxu0 0
        %3826 = vmatprep.subr.bf16.mxu0 0
        %3827 = vmatpush1.bf16.msra.mxu0 0
        %3828 = vmatprep.subr.bf16.mxu0 0
        %3829 = vmatpush1.bf16.msra.mxu0 0
        %3830 = vmatprep.mubr.bf16.mxu0 0
        %3831 = vmatmul.mubr.bf16.gmra.mrb[0].mxu0 %v3796
        %v3832 = vpop.f32.mrb[0].mxu0
        %v3833 = vadd.f32 0.0, %v3832
        %v3834 = vpop.f32.mrb[0].mxu0
        %v3835 = vpop.f32.mrb[0].mxu0
        %v3836 = vpop.f32.mrb[0].mxu0
        %3837 = vdwg.mxu0
        %v3838 = vcombine.low %v3704, %v3790
        %v3839 = vcombine.high %v3704, %v3790
        %v3841 = vunpack.c.l.s4 1983009808
        %v3842 = vunpack.c.0.s8 %v3841
        %v3843 = vlaneseq
        %v3844 = vshrl.u32 %v3843, 7
        %v3845 = vsub.s32 %v3842, %v3844
        %v3846 = vrot.slane %v3838, %v3845
        %v3848 = vunpack.c.l.s4 1983009808
        %v3849 = vunpack.c.0.s8 %v3848
        %v3850 = vlaneseq
        %v3851 = vshrl.u32 %v3850, 7
        %v3852 = vsub.s32 %v3849, %v3851
        %v3853 = vrot.slane %v3839, %v3852
        %v3854 = vcombine.low %v3747, %v3833
        %v3855 = vcombine.high %v3747, %v3833
        %v3857 = vunpack.c.l.s4 1983009808
        %v3858 = vunpack.c.0.s8 %v3857
        %v3859 = vlaneseq
        %v3860 = vshrl.u32 %v3859, 7
        %v3861 = vsub.s32 %v3858, %v3860
        %v3862 = vrot.slane %v3854, %v3861
        %v3864 = vunpack.c.l.s4 1983009808
        %v3865 = vunpack.c.0.s8 %v3864
        %v3866 = vlaneseq
        %v3867 = vshrl.u32 %v3866, 7
        %v3868 = vsub.s32 %v3865, %v3867
        %v3869 = vrot.slane %v3855, %v3868
        %v3870 = vcombine.low %v3846, %v3862
        %v3871 = vcombine.high %v3846, %v3862
        %v3873 = vunpack.c.l.s4 1934713408
        %v3874 = vunpack.c.0.s8 %v3873
        %v3875 = vlaneseq
        %v3876 = vshrl.u32 %v3875, 7
        %v3877 = vsub.s32 %v3874, %v3876
        %v3878 = vrot.slane %v3870, %v3877
        %v3880 = vunpack.c.l.s4 1934713408
        %v3881 = vunpack.c.0.s8 %v3880
        %v3882 = vlaneseq
        %v3883 = vshrl.u32 %v3882, 7
        %v3884 = vsub.s32 %v3881, %v3883
        %v3885 = vrot.slane %v3871, %v3884
        %v3886 = vcombine.low %v3853, %v3869
        %v3887 = vcombine.high %v3853, %v3869
        %v3889 = vunpack.c.l.s4 1934713408
        %v3890 = vunpack.c.0.s8 %v3889
        %v3891 = vlaneseq
        %v3892 = vshrl.u32 %v3891, 7
        %v3893 = vsub.s32 %v3890, %v3892
        %v3894 = vrot.slane %v3886, %v3893
        %v3896 = vunpack.c.l.s4 1934713408
        %v3897 = vunpack.c.0.s8 %v3896
        %v3898 = vlaneseq
        %v3899 = vshrl.u32 %v3898, 7
        %v3900 = vsub.s32 %v3897, %v3899
        %v3901 = vrot.slane %v3887, %v3900
        %v3902 = vcombine.high %v3878, 0.0
        %v3903 = vcombine.high %v3885, 0.0
        %v3904 = vcombine.high %v3894, 0.0
        %v3905 = vcombine.high %v3901, 0.0
        %v3906 = vcombine.low %v3878, %v3885
        %v3908 = vunpack.c.l.s4 1983009808
        %v3909 = vunpack.c.0.s8 %v3908
        %v3910 = vlaneseq
        %v3911 = vshrl.u32 %v3910, 7
        %v3912 = vsub.s32 %v3909, %v3911
        %v3913 = vrot.slane %v3906, %v3912
        %v3914 = vcombine.low %v3902, %v3903
        %v3916 = vunpack.c.l.s4 1983009808
        %v3917 = vunpack.c.0.s8 %v3916
        %v3918 = vlaneseq
        %v3919 = vshrl.u32 %v3918, 7
        %v3920 = vsub.s32 %v3917, %v3919
        %v3921 = vrot.slane %v3914, %v3920
        %v3922 = vcombine.low %v3894, %v3901
        %v3924 = vunpack.c.l.s4 1983009808
        %v3925 = vunpack.c.0.s8 %v3924
        %v3926 = vlaneseq
        %v3927 = vshrl.u32 %v3926, 7
        %v3928 = vsub.s32 %v3925, %v3927
        %v3929 = vrot.slane %v3922, %v3928
        %v3930 = vcombine.low %v3904, %v3905
        %v3932 = vunpack.c.l.s4 1983009808
        %v3933 = vunpack.c.0.s8 %v3932
        %v3934 = vlaneseq
        %v3935 = vshrl.u32 %v3934, 7
        %v3936 = vsub.s32 %v3933, %v3935
        %v3937 = vrot.slane %v3930, %v3936
        %v3938 = vcombine.low %v3913, %v3921
        %v3939 = vcombine.high %v3913, %v3921
        %v3941 = vunpack.c.l.s4 1934713408
        %v3942 = vunpack.c.0.s8 %v3941
        %v3943 = vlaneseq
        %v3944 = vshrl.u32 %v3943, 7
        %v3945 = vsub.s32 %v3942, %v3944
        %v3946 = vrot.slane %v3938, %v3945
        %v3948 = vunpack.c.l.s4 1934713408
        %v3949 = vunpack.c.0.s8 %v3948
        %v3950 = vlaneseq
        %v3951 = vshrl.u32 %v3950, 7
        %v3952 = vsub.s32 %v3949, %v3951
        %v3953 = vrot.slane %v3939, %v3952
        %v3954 = vcombine.low %v3929, %v3937
        %v3955 = vcombine.high %v3929, %v3937
        %v3957 = vunpack.c.l.s4 1934713408
        %v3958 = vunpack.c.0.s8 %v3957
        %v3959 = vlaneseq
        %v3960 = vshrl.u32 %v3959, 7
        %v3961 = vsub.s32 %v3958, %v3960
        %v3962 = vrot.slane %v3954, %v3961
        %v3964 = vunpack.c.l.s4 1934713408
        %v3965 = vunpack.c.0.s8 %v3964
        %v3966 = vlaneseq
        %v3967 = vshrl.u32 %v3966, 7
        %v3968 = vsub.s32 %v3965, %v3967
        %v3969 = vrot.slane %v3955, %v3968
        %v3970 = vcombine.low %v3946, %v3962
        %v3971 = vcombine.high %v3946, %v3962
        %v3972 = vcombine.low %v3953, %v3969
        %v3973 = vcombine.high %v3953, %v3969
        %3975 = vrot.lane.b32.xlu0 %v3971, 8
        %v3976 = vpop.permute.xlu0 %3975
        %3979 = vrot.lane.b32.xlu0 %v3972, 16
        %v3980 = vpop.permute.xlu0 %3979
        %3983 = vrot.lane.b32.xlu0 %v3973, 24
        %v3984 = vpop.permute.xlu0 %3983
        %v3986 = vsel %vm1862, %v3970, %v3976
        %v3987 = vsel %vm2437, %v3986, %v3980
        %v3988 = vsel %vm2439, %v3987, %v3984
        %v3989 = vpack.c.bf16 %v3988, %v3988
        %v3990 = vld [vmem:[%s1098] sm:$0xf]
        %v3991 = vld [vmem:[%s1098 + $0x4] sm:$0xf]
        %v3992 = vld [vmem:[%s1098 + $0x8] sm:$0xf]
        %v3993 = vld [vmem:[%s1098 + $0xc] sm:$0xf]
        %v3994 = vld [vmem:[%s1106] sm:$0x1]
        %v3996 = vlaneseq
        %v3997 = vshrl.u32 %v3996, 7
        %v3998 = vsub.s32 0, %v3997
        %v3999 = vrot.slane %v3994, %v3998
        %v4005 = vunpack.c.l.b16 %v3990
        %v4006 = vunpack.c.l.b16 %v3991
        %v4007 = vunpack.c.l.b16 %v3992
        %v4008 = vunpack.c.l.b16 %v3993
        %v4009 = vpack.c.b16 %v4006, %v4005
        %v4010 = vpack.c.b16 %v4008, %v4007
        %v4014 = vsel %vm1314, %v3989, 0
        %4016 = vmatprep.subr.bf16.mxu0 0
        %4017 = vmatpush1.bf16.msra.mxu0 %v4009
        %4018 = vmatprep.subr.bf16.mxu0 0
        %4019 = vmatpush1.bf16.msra.mxu0 %v4010
        %4020 = vmatprep.subr.bf16.mxu0 0
        %4021 = vmatpush1.bf16.msra.mxu0 0
        %4022 = vmatprep.subr.bf16.mxu0 0
        %4023 = vmatpush1.bf16.msra.mxu0 0
        %4024 = vmatprep.subr.bf16.mxu0 0
        %4025 = vmatpush1.bf16.msra.mxu0 0
        %4026 = vmatprep.subr.bf16.mxu0 0
        %4027 = vmatpush1.bf16.msra.mxu0 0
        %4028 = vmatprep.subr.bf16.mxu0 0
        %4029 = vmatpush1.bf16.msra.mxu0 0
        %4030 = vmatprep.subr.bf16.mxu0 0
        %4031 = vmatpush1.bf16.msra.mxu0 0
        %4032 = vmatprep.subr.bf16.mxu0 0
        %4033 = vmatpush1.bf16.msra.mxu0 0
        %4034 = vmatprep.subr.bf16.mxu0 0
        %4035 = vmatpush1.bf16.msra.mxu0 0
        %4036 = vmatprep.subr.bf16.mxu0 0
        %4037 = vmatpush1.bf16.msra.mxu0 0
        %4038 = vmatprep.subr.bf16.mxu0 0
        %4039 = vmatpush1.bf16.msra.mxu0 0
        %4040 = vmatprep.subr.bf16.mxu0 0
        %4041 = vmatpush1.bf16.msra.mxu0 0
        %4042 = vmatprep.subr.bf16.mxu0 0
        %4043 = vmatpush1.bf16.msra.mxu0 0
        %4044 = vmatprep.subr.bf16.mxu0 0
        %4045 = vmatpush1.bf16.msra.mxu0 0
        %4046 = vmatprep.subr.bf16.mxu0 0
        %4047 = vmatpush1.bf16.msra.mxu0 0
        %4048 = vmatprep.mubr.bf16.mxu0 0
        %4049 = vmatmul.mubr.bf16.gmra.mrb[0].mxu0 %v4014
        %v4050 = vpop.f32.mrb[0].mxu0
        %v4051 = vadd.f32 %v3999, %v4050
        %v4052 = vpop.f32.mrb[0].mxu0
        %v4053 = vpop.f32.mrb[0].mxu0
        %v4054 = vpop.f32.mrb[0].mxu0
        %4055 = vdwg.mxu0
        %v4056 = vadd.f32 %v2508, %v4051
        %s4057 = sadd.s32 %s1310, 4
        %s4058 = sld [smem:[#allocation32 + %s4057]]
        %s4059 = sadd.s32 %s1310, 5
        %s4060 = sld [smem:[#allocation32 + %s4059]]
        %v4061 = vsel %vm1314, %v4056, 0.0
        %4062 = vadd.xlane.f32.xlu0 %v4061
        %v4063 = vpop.xlane.xlu0 %4062
        %v4064 = vmul.f32 %v4063, %v1318
        %v4065 = vsub.f32 %v4056, %v4064
        %v4066 = vmul.f32 %v4065, %v4065
        %v4067 = vsel %vm1314, %v4066, 0.0
        %4068 = vadd.xlane.f32.xlu0 %v4067
        %v4069 = vpop.xlane.xlu0 %4068
        %v4070 = vmul.f32 %v4069, %v1325
        %v4071 = vstv %s4058
        %v4072 = vmul.f32 %v4071, %v4065
        %v4073 = vrsqrt.pop %v4070
        %v4074 = vmul.f32 %v4070, %v4073
        %vm4075 = vcmp.eq.f32.partialorder %v4070, inf
        %v4076 = vsel %vm4075, %v4070, %v4074
        %vm4077 = vcmp.eq.f32.partialorder %v4070, 0.0
        %v4078 = vand.u32 %v4070, 2147483648
        %v4079 = vsel %vm4077, %v4078, %v4076
        %v4080 = vadd.f32 %v4079, 1e-06
        %v4081 = vrcp.pop %v4080
        %v4082 = vmul.f32 %v4072, %v4081
        %v4083 = vstv %s4060
        %v4084 = vadd.f32 %v4082, %v4083
        %v4085 = vpack.c.bf16 %v4084, %v4084
        %v4086 = vld [vmem:[%s1115] sm:$0xf]
        %v4087 = vld [vmem:[%s1115 + $0x4] sm:$0xf]
        %v4088 = vld [vmem:[%s1115 + $0x8] sm:$0xf]
        %v4089 = vld [vmem:[%s1115 + $0xc] sm:$0xf]
        %v4090 = vld [vmem:[%s1123] sm:$0x1]
        %v4092 = vlaneseq
        %v4093 = vshrl.u32 %v4092, 7
        %v4094 = vsub.s32 0, %v4093
        %v4095 = vrot.slane %v4090, %v4094
        %v4101 = vunpack.c.l.b16 %v4086
        %v4102 = vunpack.c.l.b16 %v4087
        %v4103 = vunpack.c.l.b16 %v4088
        %v4104 = vunpack.c.l.b16 %v4089
        %v4105 = vpack.c.b16 %v4102, %v4101
        %v4106 = vpack.c.b16 %v4104, %v4103
        %v4110 = vsel %vm1314, %v4085, 0
        %4112 = vmatprep.subr.bf16.mxu0 0
        %4113 = vmatpush1.bf16.msra.mxu0 %v4105
        %4114 = vmatprep.subr.bf16.mxu0 0
        %4115 = vmatpush1.bf16.msra.mxu0 %v4106
        %4116 = vmatprep.subr.bf16.mxu0 0
        %4117 = vmatpush1.bf16.msra.mxu0 0
        %4118 = vmatprep.subr.bf16.mxu0 0
        %4119 = vmatpush1.bf16.msra.mxu0 0
        %4120 = vmatprep.subr.bf16.mxu0 0
        %4121 = vmatpush1.bf16.msra.mxu0 0
        %4122 = vmatprep.subr.bf16.mxu0 0
        %4123 = vmatpush1.bf16.msra.mxu0 0
        %4124 = vmatprep.subr.bf16.mxu0 0
        %4125 = vmatpush1.bf16.msra.mxu0 0
        %4126 = vmatprep.subr.bf16.mxu0 0
        %4127 = vmatpush1.bf16.msra.mxu0 0
        %4128 = vmatprep.subr.bf16.mxu0 0
        %4129 = vmatpush1.bf16.msra.mxu0 0
        %4130 = vmatprep.subr.bf16.mxu0 0
        %4131 = vmatpush1.bf16.msra.mxu0 0
        %4132 = vmatprep.subr.bf16.mxu0 0
        %4133 = vmatpush1.bf16.msra.mxu0 0
        %4134 = vmatprep.subr.bf16.mxu0 0
        %4135 = vmatpush1.bf16.msra.mxu0 0
        %4136 = vmatprep.subr.bf16.mxu0 0
        %4137 = vmatpush1.bf16.msra.mxu0 0
        %4138 = vmatprep.subr.bf16.mxu0 0
        %4139 = vmatpush1.bf16.msra.mxu0 0
        %4140 = vmatprep.subr.bf16.mxu0 0
        %4141 = vmatpush1.bf16.msra.mxu0 0
        %4142 = vmatprep.subr.bf16.mxu0 0
        %4143 = vmatpush1.bf16.msra.mxu0 0
        %4144 = vmatprep.mubr.bf16.mxu0 0
        %4145 = vmatmul.mubr.bf16.gmra.mrb[0].mxu0 %v4110
        %v4146 = vpop.f32.mrb[0].mxu0
        %v4147 = vadd.f32 %v4095, %v4146
        %v4148 = vpop.f32.mrb[0].mxu0
        %v4149 = vpop.f32.mrb[0].mxu0
        %v4150 = vpop.f32.mrb[0].mxu0
        %4151 = vdwg.mxu0
        %v4152 = vmax.f32 %v4147, 0.0
        %v4153 = vpack.c.bf16 %v4152, %v4152
        %v4154 = vld [vmem:[%s1132] sm:$0xf]
        %v4155 = vld [vmem:[%s1132 + $0x4] sm:$0xf]
        %v4156 = vld [vmem:[%s1132 + $0x8] sm:$0xf]
        %v4157 = vld [vmem:[%s1132 + $0xc] sm:$0xf]
        %v4158 = vld [vmem:[%s1132 + $0x10] sm:$0xf]
        %v4159 = vld [vmem:[%s1132 + $0x14] sm:$0xf]
        %v4160 = vld [vmem:[%s1132 + $0x18] sm:$0xf]
        %v4161 = vld [vmem:[%s1132 + $0x1c] sm:$0xf]
        %v4162 = vld [vmem:[%s1140] sm:$0x1]
        %v4164 = vlaneseq
        %v4165 = vshrl.u32 %v4164, 7
        %v4166 = vsub.s32 0, %v4165
        %v4167 = vrot.slane %v4162, %v4166
        %v4177 = vunpack.c.l.b16 %v4154
        %v4178 = vunpack.c.l.b16 %v4155
        %v4179 = vunpack.c.l.b16 %v4156
        %v4180 = vunpack.c.l.b16 %v4157
        %v4181 = vunpack.c.l.b16 %v4158
        %v4182 = vunpack.c.l.b16 %v4159
        %v4183 = vunpack.c.l.b16 %v4160
        %v4184 = vunpack.c.l.b16 %v4161
        %v4185 = vpack.c.b16 %v4178, %v4177
        %v4186 = vpack.c.b16 %v4180, %v4179
        %v4187 = vpack.c.b16 %v4182, %v4181
        %v4188 = vpack.c.b16 %v4184, %v4183
        %vm4193 = vcmask 523264
        %v4195 = vsel %vm4193, %v4153, 0
        %4197 = vmatprep.subr.bf16.mxu0 0
        %4198 = vmatpush1.bf16.msra.mxu0 %v4185
        %4199 = vmatprep.subr.bf16.mxu0 0
        %4200 = vmatpush1.bf16.msra.mxu0 %v4186
        %4201 = vmatprep.subr.bf16.mxu0 0
        %4202 = vmatpush1.bf16.msra.mxu0 %v4187
        %4203 = vmatprep.subr.bf16.mxu0 0
        %4204 = vmatpush1.bf16.msra.mxu0 %v4188
        %4205 = vmatprep.subr.bf16.mxu0 0
        %4206 = vmatpush1.bf16.msra.mxu0 0
        %4207 = vmatprep.subr.bf16.mxu0 0
        %4208 = vmatpush1.bf16.msra.mxu0 0
        %4209 = vmatprep.subr.bf16.mxu0 0
        %4210 = vmatpush1.bf16.msra.mxu0 0
        %4211 = vmatprep.subr.bf16.mxu0 0
        %4212 = vmatpush1.bf16.msra.mxu0 0
        %4213 = vmatprep.subr.bf16.mxu0 0
        %4214 = vmatpush1.bf16.msra.mxu0 0
        %4215 = vmatprep.subr.bf16.mxu0 0
        %4216 = vmatpush1.bf16.msra.mxu0 0
        %4217 = vmatprep.subr.bf16.mxu0 0
        %4218 = vmatpush1.bf16.msra.mxu0 0
        %4219 = vmatprep.subr.bf16.mxu0 0
        %4220 = vmatpush1.bf16.msra.mxu0 0
        %4221 = vmatprep.subr.bf16.mxu0 0
        %4222 = vmatpush1.bf16.msra.mxu0 0
        %4223 = vmatprep.subr.bf16.mxu0 0
        %4224 = vmatpush1.bf16.msra.mxu0 0
        %4225 = vmatprep.subr.bf16.mxu0 0
        %4226 = vmatpush1.bf16.msra.mxu0 0
        %4227 = vmatprep.subr.bf16.mxu0 0
        %4228 = vmatpush1.bf16.msra.mxu0 0
        %4229 = vmatprep.mubr.bf16.mxu0 0
        %4230 = vmatmul.mubr.bf16.gmra.mrb[0].mxu0 %v4195
        %v4231 = vpop.f32.mrb[0].mxu0
        %v4232 = vadd.f32 %v4167, %v4231
        %v4233 = vpop.f32.mrb[0].mxu0
        %v4234 = vpop.f32.mrb[0].mxu0
        %v4235 = vpop.f32.mrb[0].mxu0
        %4236 = vdwg.mxu0
        %v4237 = vadd.f32 %v4056, %v4232
        %p4238 = scmp.lt.s32.totalorder %s71, 1
        // Predicated region
        $region185: #{tpu_custom_call.1} parent=99 // pred_check
          %p4239 = pneg %p4238
        $region186: #{tpu_custom_call.1} parent=99 // pred_check_branch
          %4241 = sbr.rel (%p4239) target = $region188
        $region187: #{tpu_custom_call.1} parent=99 // pred_region
          %4242 = vst.msk [vmem:[%s1281] sm:$0xff] %vm1314, %v4237
        $region188: #{tpu_custom_call.1} parent=99 // pred_fallthru
          _
        %p4243 = scmp.eq.s32.totalorder %s71, 1
        // Predicated region
        $region189: #{tpu_custom_call.1} parent=99 // pred_check
          %p4244 = pneg %p4243
        $region190: #{tpu_custom_call.1} parent=99 // pred_check_branch
          %4246 = sbr.rel (%p4244) target = $region192
        $region191: #{tpu_custom_call.1} parent=99 // pred_region
          %s4247 = sld [smem:[#allocation33]]
          %s4248 = sld [smem:[#allocation33 + $0x1]]
          %v4249 = vsel %vm1314, %v4237, 0.0
          %4250 = vadd.xlane.f32.xlu0 %v4249
          %v4251 = vpop.xlane.xlu0 %4250
          %v4252 = vmul.f32 %v4251, %v1318
          %v4253 = vsub.f32 %v4237, %v4252
          %v4254 = vmul.f32 %v4253, %v4253
          %v4255 = vsel %vm1314, %v4254, 0.0
          %4256 = vadd.xlane.f32.xlu0 %v4255
          %v4257 = vpop.xlane.xlu0 %4256
          %v4258 = vmul.f32 %v4257, %v1325
          %v4259 = vstv %s4247
          %v4260 = vmul.f32 %v4259, %v4253
          %v4261 = vrsqrt.pop %v4258
          %v4262 = vmul.f32 %v4258, %v4261
          %vm4263 = vcmp.eq.f32.partialorder %v4258, inf
          %v4264 = vsel %vm4263, %v4258, %v4262
          %vm4265 = vcmp.eq.f32.partialorder %v4258, 0.0
          %v4266 = vand.u32 %v4258, 2147483648
          %v4267 = vsel %vm4265, %v4266, %v4264
          %v4268 = vadd.f32 %v4267, 1e-06
          %v4269 = vrcp.pop %v4268
          %v4270 = vmul.f32 %v4260, %v4269
          %v4271 = vstv %s4248
          %v4272 = vadd.f32 %v4270, %v4271
          %4273 = vst.msk [vmem:[%s1281] sm:$0xff] %vm1314, %v4272
        $region192: #{tpu_custom_call.1} parent=99 // pred_fallthru
          _
        %s4274 = sand.u32 %s596, 1
        %s4275 = scalar_lea.sflag [#allocation4], %s4274
        %s4276 = sand.u32 %s596, 1
        %s4277 = smul.addr %s4276, 8
        %s4278 = scalar_lea.vmem [#allocation35], %s4277
        // Predicated region
        $region193: #{tpu_custom_call.1} parent=99 // pred_check
          %p4279 = pneg %p606
        $region194: #{tpu_custom_call.1} parent=99 // pred_check_branch
          %4281 = sbr.rel (%p4279) target = $region196
        $region195: #{tpu_custom_call.1} parent=99 // pred_region
          %s4283 = ssub.s32 128, 128
          %4284 = vsyncadd %s4275, %s4283
          %s4285 = smul.addr %s70, 128
          %s4286 = scalar_lea.hbm %s20, %s4285
          %s4288 = sshll.u32 %s4278, 4
          %s4289 = int_to_ptr.vmem [resolvable:$true] %s4288
          %4291 = dma.vmem_to_hbm [thread:$0]  %s4289, 128, %s4286, %s4275
        $region196: #{tpu_custom_call.1} parent=99 // pred_fallthru
          _
      $region100: #{tpu_custom_call.1} parent=5 // pred_fallthru
        _
      %p4292 = scmp.le.s32.totalorder 2, %s61
      // Predicated region
      $region197: #{tpu_custom_call.1} parent=5 // pred_check
        %p4293 = pneg %p4292
      $region198: #{tpu_custom_call.1} parent=5 // pred_check_branch
        %4295 = sbr.rel (%p4293) target = $region200
      $region199: #{tpu_custom_call.1} parent=5 // pred_region
        %s4296 = ssub.s32 %s61, 2
        // Predicated region
        $region201: #{tpu_custom_call.1} parent=199 // pred_check
          %p4297 = pneg %p612
        $region202: #{tpu_custom_call.1} parent=199 // pred_check_branch
          %4299 = sbr.rel (%p4297) target = $region204
        $region203: #{tpu_custom_call.1} parent=199 // pred_region
          %s4300 = sand.u32 %s597, 1
          %s4301 = scalar_lea.sflag [#allocation4], %s4300
          %s4302 = sand.u32 %s597, 1
          %s4303 = smul.addr %s4302, 8
          %s4304 = scalar_lea.vmem [#allocation35], %s4303
          %4305 = dma.done %s4301, 128
        $region204: #{tpu_custom_call.1} parent=199 // pred_fallthru
          _
      $region200: #{tpu_custom_call.1} parent=5 // pred_fallthru
        _
    $region6: #{tpu_custom_call.1} parent=1 // loop_footer
      %s65 = sadd.s32 1, %s61
    $region7: #{tpu_custom_call.1} parent=1 // loop_footer_branch
      %60 = sbr.rel target = $region3
    $region8: #{tpu_custom_call.1} parent=1 // loop_exit
      _
    %4306 = vsyncpa [#allocation3], 1
    %s4307 = scalar_lea.sflag [#allocation3], 1
    %4308 = vsyncpa %s4307, 1
    %4309 = vsyncpa [#allocation7], 1
    %s4310 = scalar_lea.sflag [#allocation7], 1
    %4311 = vsyncpa %s4310, 1
    %4312 = vsyncpa [#allocation10], 1
    %s4313 = scalar_lea.sflag [#allocation10], 1
    %4314 = vsyncpa %s4313, 1
    %4315 = vsyncpa [#allocation13], 1
    %s4316 = scalar_lea.sflag [#allocation13], 1
    %4317 = vsyncpa %s4316, 1
    %4318 = vsyncpa [#allocation16], 1
    %s4319 = scalar_lea.sflag [#allocation16], 1
    %4320 = vsyncpa %s4319, 1
    %4321 = vsyncpa [#allocation19], 1
    %s4322 = scalar_lea.sflag [#allocation19], 1
    %4323 = vsyncpa %s4322, 1
    %4324 = vsyncpa [#allocation22], 1
    %s4325 = scalar_lea.sflag [#allocation22], 1
    %4326 = vsyncpa %s4325, 1
    %4327 = vsyncpa [#allocation25], 1
    %s4328 = scalar_lea.sflag [#allocation25], 1
    %4329 = vsyncpa %s4328, 1
    %4330 = vsyncpa [#allocation28], 1
    %s4331 = scalar_lea.sflag [#allocation28], 1
    %4332 = vsyncpa %s4331, 1
    %4333 = vsyncpa [#allocation31], 1
    %s4334 = scalar_lea.sflag [#allocation31], 1
    %4335 = vsyncpa %s4334, 1
    %4336 = vsyncpa [#allocation4], 1
    %s4337 = scalar_lea.sflag [#allocation4], 1
    %4338 = vsyncpa %s4337, 1
    %4339 = vsyncpa [#allocation5], 1
    %s4340 = scalar_lea.sflag [#allocation5], 1
    %4341 = vsyncpa %s4340, 1
    %4342 = vsyncpa [#allocation34], 1

</llo_original>
